<compile_context>
chip_gen: v6e
topology: v6e:2x2x1
jax: 0.10.0
libtpu: 0.0.40
codegen_flags: <defaults>
</compile_context>

<pallas_src>
import functools

import numpy as np
import jax
import jax.numpy as jnp
from jax import lax
from jax.experimental import pallas as pl
from jax.experimental.pallas import tpu as pltpu

LANE = 128


# ----------------------------- Pallas kernel ------------------------------ #
def bottleneck_kernel(x_ref, w1_ref, b1_ref, w2_ref, b2_ref, w3_ref, b3_ref,
                      o_ref, *, mxu_dtype):
    """One block of Nb images per grid step; all three convs on the MXU.

    x_ref  : (Nb, H, W, Cp)       io dtype (f32 or bf16)
    w1_ref : (Cp, widthP)         mxu dtype (BN1 scale folded in)
    w2_ref : (9, widthP, widthP)  mxu dtype (BN2 scale folded in; tap-major)
    w3_ref : (widthP, Cp)         mxu dtype (BN3 scale folded in)
    b*_ref : (1, widthP/Cp)       f32
    """
    Nb, H, W, C = x_ref.shape
    widthP = w1_ref.shape[1]
    M = Nb * H * W

    xm = x_ref[...].reshape(M, C)                        # io dtype

    # ---- conv1 (1x1) + bias + ReLU; result cast straight to mxu dtype ------
    h1 = jnp.dot(xm.astype(mxu_dtype), w1_ref[...],
                 preferred_element_type=jnp.float32)
    h1 = jnp.maximum(h1 + b1_ref[...], 0.0).astype(mxu_dtype)   # (M, widthP)

    # ---- conv2 (3x3, stride=1, pad=1): zero-pad spatially in mxu dtype, then
    #      accumulate 9 shifted-tap matmuls into one f32 accumulator (no
    #      (M, 9*width) im2col materialization). ------------------------------
    h1 = h1.reshape(Nb, H, W, widthP)
    zr = jnp.zeros((Nb, 1, W, widthP), mxu_dtype)
    hp = jnp.concatenate([zr, h1, zr], axis=1)           # (Nb, H+2, W, widthP)
    zc = jnp.zeros((Nb, H + 2, 1, widthP), mxu_dtype)
    hp = jnp.concatenate([zc, hp, zc], axis=2)           # (Nb, H+2, W+2, widthP)

    acc = jnp.zeros((M, widthP), jnp.float32)
    for t in range(9):                                   # static unroll
        ky, kx = t // 3, t % 3
        tap = hp[:, ky:ky + H, kx:kx + W, :].reshape(M, widthP)
        acc = acc + jnp.dot(tap, w2_ref[t], preferred_element_type=jnp.float32)
    h2 = jnp.maximum(acc + b2_ref[...], 0.0).astype(mxu_dtype)   # (M, widthP)

    # ---- conv3 (1x1) + bias -------------------------------------------------
    h3 = jnp.dot(h2, w3_ref[...], preferred_element_type=jnp.float32)
    h3 = h3 + b3_ref[...]                                # (M, C) f32

    # ---- identity residual (downsample is None) + ReLU ----------------------
    out = jnp.maximum(h3 + xm.astype(jnp.float32), 0.0)
    o_ref[...] = out.reshape(Nb, H, W, C).astype(o_ref.dtype)


# ------------------------------- wrapper ----------------------------------- #
def _fold_bn(gamma, beta, mean, var, eps=1e-5):
    scale = (gamma / jnp.sqrt(var + eps)).astype(jnp.float32)
    bias = (beta - mean * scale).astype(jnp.float32)
    return scale, bias


def _round_up(x, m):
    return (x + m - 1) // m * m


def _vmem_budget():
    """Generation-aware VMEM sizing -> (vmem_limit_bytes, per-step budget)."""
    try:
        cap = pltpu.get_tpu_info().vmem_capacity_bytes
    except Exception:
        cap = None
    if cap is None:
        cap = 64 * 1024 * 1024                      # conservative: v7x sizing
    if cap >= 100 * 1024 * 1024:                    # v5e / v6e: 128 MiB VMEM
        return 100 * 1024 * 1024, 84 * 1024 * 1024
    return 48 * 1024 * 1024, 38 * 1024 * 1024       # v7x: 64 MiB VMEM


def _step_vmem_bytes(nb, H, W, Cp, widthP, io_bytes, mxu_bytes):
    """Per-grid-step VMEM estimate: double-buffered IO and weight blocks, the
    padded conv2 temp, and the dominant in-kernel temporaries."""
    m = nb * H * W
    io_blocks = 2 * 2 * m * Cp * io_bytes                          # x + out
    weights = 2 * ((Cp * widthP + 9 * widthP * widthP + widthP * Cp) * mxu_bytes
                   + (2 * widthP + Cp) * 4)                        # + biases
    hp = nb * (H + 2) * (W + 2) * widthP * mxu_bytes
    temps = m * (widthP * (8 + 2 * mxu_bytes) + Cp * (8 + mxu_bytes))
    return int(1.15 * (io_blocks + weights + hp + temps))


def bottleneck_forward_nhwc(x_nhwc, params, *, mxu_dtype=jnp.bfloat16,
                            io_dtype=None, eps=1e-5):
    """Channels-last hot-path entry.  x_nhwc: (N, H, W, Cin).  Returns NHWC."""
    N, H, W, Cin = x_nhwc.shape
    io_dtype = x_nhwc.dtype if io_dtype is None else io_dtype

    # PyTorch OIHW -> matmul layouts; BN (eval) scale folded into the weights.
    w1 = jnp.transpose(params["conv1_w"][:, :, 0, 0], (1, 0)).astype(jnp.float32)
    w2 = jnp.transpose(params["conv2_w"], (2, 3, 1, 0)).astype(jnp.float32)
    w3 = jnp.transpose(params["conv3_w"][:, :, 0, 0], (1, 0)).astype(jnp.float32)
    width = w1.shape[1]
    Cout = w3.shape[1]
    assert Cout == Cin, "downsample is None: identity residual needs Cin == planes*4"

    s1, b1 = _fold_bn(*params["bn1"], eps=eps)
    s2, b2 = _fold_bn(*params["bn2"], eps=eps)
    s3, b3 = _fold_bn(*params["bn3"], eps=eps)
    w1 = w1 * s1[None, :]
    w2 = w2 * s2[None, None, None, :]
    w3 = w3 * s3[None, :]

    # Lane-dense layouts: pad both channel dims to multiples of 128.
    Cp = _round_up(Cin, LANE)
    widthP = _round_up(width, LANE)
    x_p = x_nhwc.astype(io_dtype)
    if Cp != Cin:
        x_p = jnp.pad(x_p, ((0, 0), (0, 0), (0, 0), (0, Cp - Cin)))
    w1 = jnp.pad(w1, ((0, Cp - Cin), (0, widthP - width)))
    w2 = jnp.pad(w2, ((0, 0), (0, 0), (0, widthP - width), (0, widthP - width)))
    w2 = w2.reshape(9, widthP, widthP)
    w3 = jnp.pad(w3, ((0, widthP - width), (0, Cp - Cout)))
    b1 = jnp.pad(b1, ((0, widthP - width),)).reshape(1, widthP)
    b2 = jnp.pad(b2, ((0, widthP - width),)).reshape(1, widthP)
    b3 = jnp.pad(b3, ((0, Cp - Cout),)).reshape(1, Cp)

    # Only the MXU operands drop to mxu_dtype; elementwise math stays f32.
    w1 = w1.astype(mxu_dtype)
    w2 = w2.astype(mxu_dtype)
    w3 = w3.astype(mxu_dtype)

    # Batch blocking: maximize per-step M (= nb*H*W) under the generation-aware
    # VMEM budget while keeping grid >= 2 so v7x's two TensorCores both get
    # work (dimension_semantics=("parallel",)).
    vmem_limit, budget = _vmem_budget()
    io_b = jnp.dtype(io_dtype).itemsize
    mxu_b = jnp.dtype(mxu_dtype).itemsize
    max_nb = N // 2 if N >= 2 else 1
    feasible = [d for d in range(1, max_nb + 1)
                if N % d == 0
                and _step_vmem_bytes(d, H, W, Cp, widthP, io_b, mxu_b) <= budget]
    nb = max(feasible) if feasible else 1
    grid = (N // nb,)

    kernel = functools.partial(bottleneck_kernel, mxu_dtype=mxu_dtype)

    out_p = pl.pallas_call(
        kernel,
        out_shape=jax.ShapeDtypeStruct((N, H, W, Cp), io_dtype),
        grid_spec=pltpu.PrefetchScalarGridSpec(
            num_scalar_prefetch=0,
            grid=grid,
            in_specs=[
                pl.BlockSpec((nb, H, W, Cp), lambda n: (n, 0, 0, 0)),     # x
                pl.BlockSpec((Cp, widthP), lambda n: (0, 0)),             # w1
                pl.BlockSpec((1, widthP), lambda n: (0, 0)),              # b1
                pl.BlockSpec((9, widthP, widthP), lambda n: (0, 0, 0)),   # w2
                pl.BlockSpec((1, widthP), lambda n: (0, 0)),              # b2
                pl.BlockSpec((widthP, Cp), lambda n: (0, 0)),             # w3
                pl.BlockSpec((1, Cp), lambda n: (0, 0)),                  # b3
            ],
            out_specs=pl.BlockSpec((nb, H, W, Cp), lambda n: (n, 0, 0, 0)),
        ),
        compiler_params=pltpu.CompilerParams(
            dimension_semantics=("parallel",),
            vmem_limit_bytes=vmem_limit,
        ),
    )(x_p, w1, b1, w2, b2, w3, b3)

    return out_p[..., :Cout] if Cp != Cout else out_p


def bottleneck_forward(x_nchw, params, *, mxu_dtype=jnp.bfloat16,
                       io_dtype=None, eps=1e-5):
    """Compatibility shim for the PyTorch NCHW layout.  Layout conversion only
    happens at the torch boundary; in a full network keep activations NHWC and
    call bottleneck_forward_nhwc directly to avoid these transpose passes."""
    x_nhwc = jnp.transpose(x_nchw, (0, 2, 3, 1))
    out = bottleneck_forward_nhwc(x_nhwc, params, mxu_dtype=mxu_dtype,
                                  io_dtype=io_dtype, eps=eps)
    return jnp.transpose(out, (0, 3, 1, 2))


# ------------------------ pure-JAX reference (check) ----------------------- #
def bottleneck_reference(x, params, eps=1e-5):
    def bn(y, p):
        g, b, m, v = p
        s = (g / jnp.sqrt(v + eps))
        return (y - m[None, :, None, None]) * s[None, :, None, None] \
            + b[None, :, None, None]

    dn = ("NCHW", "OIHW", "NCHW")
    hi = lax.Precision.HIGHEST
    out = lax.conv_general_dilated(x, params["conv1_w"], (1, 1), "VALID",
                                   dimension_numbers=dn, precision=hi)
    out = jax.nn.relu(bn(out, params["bn1"]))
    out = lax.conv_general_dilated(out, params["conv2_w"], (1, 1),
                                   [(1, 1), (1, 1)], dimension_numbers=dn,
                                   precision=hi)
    out = jax.nn.relu(bn(out, params["bn2"]))
    out = lax.conv_general_dilated(out, params["conv3_w"], (1, 1), "VALID",
                                   dimension_numbers=dn, precision=hi)
    out = bn(out, params["bn3"])
    return jax.nn.relu(out + x)


# --------------------------------- main ------------------------------------ #
if __name__ == "__main__":
    def bn_params(k, c):
        k1, k2, k3, k4 = jax.random.split(k, 4)
        gamma = 1.0 + 0.1 * jax.random.normal(k1, (c,), jnp.float32)
        beta = 0.1 * jax.random.normal(k2, (c,), jnp.float32)
        mean = 0.1 * jax.random.normal(k3, (c,), jnp.float32)
        var = jax.random.uniform(k4, (c,), jnp.float32, 0.5, 1.5)
        return (gamma, beta, mean, var)

    def make_case(key, N, inplanes, planes, H, W):
        # Bottleneck(inplanes, planes): width = planes (base_width=64, groups=1),
        # out_channels = planes*4, stride=1, downsample=None.
        width = planes
        Cout = planes * 4
        assert Cout == inplanes
        ks = jax.random.split(key, 8)
        params = {
            "conv1_w": 0.1 * jax.random.normal(ks[0], (width, inplanes, 1, 1), jnp.float32),
            "conv2_w": 0.1 * jax.random.normal(ks[1], (width, width, 3, 3), jnp.float32),
            "conv3_w": 0.1 * jax.random.normal(ks[2], (Cout, width, 1, 1), jnp.float32),
            "bn1": bn_params(ks[3], width),
            "bn2": bn_params(ks[4], width),
            "bn3": bn_params(ks[5], Cout),
        }
        x = jax.random.normal(ks[6], (N, inplanes, H, W), jnp.float32)
        return x, params

    key = jax.random.PRNGKey(0)
    ka, kb = jax.random.split(key)

    # Case A: small channel count (exercises the lane/width padding path),
    # exact f32 MXU operands and f32 IO -> tight tolerance.
    x, params = make_case(ka, N=2, inplanes=32, planes=8, H=16, W=16)
    out = jax.block_until_ready(
        bottleneck_forward(x, params, mxu_dtype=jnp.float32, io_dtype=jnp.float32))
    ref = jax.block_until_ready(bottleneck_reference(x, params))
    np.testing.assert_allclose(np.asarray(out.astype(jnp.float32)),
                               np.asarray(ref), rtol=1e-3, atol=1e-3)

    # Case B: ResNet-like lane-aligned channels, bf16 MXU operands and bf16
    # activations at the HBM boundary (fast path) -> looser tolerance.
    x, params = make_case(kb, N=4, inplanes=128, planes=32, H=8, W=8)
    out = jax.block_until_ready(
        bottleneck_forward(x, params, mxu_dtype=jnp.bfloat16, io_dtype=jnp.bfloat16))
    ref = jax.block_until_ready(bottleneck_reference(x, params))
    np.testing.assert_allclose(np.asarray(out.astype(jnp.float32)),
                               np.asarray(ref), rtol=5e-2, atol=5e-2)

    print("KERNEL_OK")
</pallas_src>

<mosaic_0001>
module attributes {stable_mosaic.version = 11 : i64} {
  func.func @bottleneck_kernel(%arg0: i32, %arg1: memref<1x16x16x128xf32, #tpu.memory_space<vmem>>, %arg2: memref<128x128xf32, #tpu.memory_space<vmem>>, %arg3: memref<1x128xf32, #tpu.memory_space<vmem>>, %arg4: memref<9x128x128xf32, #tpu.memory_space<vmem>>, %arg5: memref<1x128xf32, #tpu.memory_space<vmem>>, %arg6: memref<128x128xf32, #tpu.memory_space<vmem>>, %arg7: memref<1x128xf32, #tpu.memory_space<vmem>>, %arg8: memref<1x16x16x128xf32, #tpu.memory_space<vmem>>) attributes {dimension_semantics = [#tpu.dimension_semantics<parallel>], iteration_bounds = array<i64: 2>, scalar_prefetch = 0 : i64, scratch_operands = 0 : i64, tpu.core_type = #tpu.core_type<tc>, window_params = [{transform_indices = @transform_0, window_bounds = array<i64: 1, 16, 16, 128>}, {pipeline_mode = #tpu.pipeline_mode<synchronous>, transform_indices = @transform_1, window_bounds = array<i64: 128, 128>}, {pipeline_mode = #tpu.pipeline_mode<synchronous>, transform_indices = @transform_2, window_bounds = array<i64: 1, 128>}, {pipeline_mode = #tpu.pipeline_mode<synchronous>, transform_indices = @transform_3, window_bounds = array<i64: 9, 128, 128>}, {pipeline_mode = #tpu.pipeline_mode<synchronous>, transform_indices = @transform_4, window_bounds = array<i64: 1, 128>}, {pipeline_mode = #tpu.pipeline_mode<synchronous>, transform_indices = @transform_5, window_bounds = array<i64: 128, 128>}, {pipeline_mode = #tpu.pipeline_mode<synchronous>, transform_indices = @transform_6, window_bounds = array<i64: 1, 128>}, {transform_indices = @transform_7, window_bounds = array<i64: 1, 16, 16, 128>}]} {
    %c0 = arith.constant 0 : index
    %c0_0 = arith.constant 0 : index
    %c0_1 = arith.constant 0 : index
    %c0_2 = arith.constant 0 : index
    %0 = vector.load %arg1[%c0, %c0_0, %c0_1, %c0_2] : memref<1x16x16x128xf32, #tpu.memory_space<vmem>>, vector<1x16x16x128xf32>
    %1 = vector.shape_cast %0 : vector<1x16x16x128xf32> to vector<256x128xf32>
    %c0_3 = arith.constant 0 : index
    %c0_4 = arith.constant 0 : index
    %2 = vector.load %arg2[%c0_3, %c0_4] : memref<128x128xf32, #tpu.memory_space<vmem>>, vector<128x128xf32>
    %cst = arith.constant dense<0.000000e+00> : vector<256x128xf32>
    %3 = tpu.matmul %1, %2, %cst {dimension_numbers = #tpu.dot_dimension_numbers<[1], [0], [0], [1], [0, 0, 1, 1], [], []>} : vector<256x128xf32>, vector<128x128xf32>, vector<256x128xf32> -> vector<256x128xf32>
    %c0_5 = arith.constant 0 : index
    %c0_6 = arith.constant 0 : index
    %4 = vector.load %arg3[%c0_5, %c0_6] : memref<1x128xf32, #tpu.memory_space<vmem>>, vector<1x128xf32>
    %5 = vector.broadcast %4 : vector<1x128xf32> to vector<256x128xf32>
    %6 = arith.addf %3, %5 : vector<256x128xf32>
    %cst_7 = arith.constant 0.000000e+00 : f32
    %7 = vector.broadcast %cst_7 : f32 to vector<256x128xf32>
    %8 = arith.maximumf %6, %7 : vector<256x128xf32>
    %9 = vector.shape_cast %8 : vector<256x128xf32> to vector<1x16x16x128xf32>
    %cst_8 = arith.constant 0.000000e+00 : f32
    %10 = vector.broadcast %cst_8 : f32 to vector<1x1x16x128xf32>
    %11 = tpu.concatenate %10, %9, %10 in 1 : vector<1x1x16x128xf32>, vector<1x16x16x128xf32>, vector<1x1x16x128xf32> -> vector<1x18x16x128xf32>
    %cst_9 = arith.constant 0.000000e+00 : f32
    %12 = vector.broadcast %cst_9 : f32 to vector<1x18x1x128xf32>
    %13 = tpu.concatenate %12, %11, %12 in 2 : vector<1x18x1x128xf32>, vector<1x18x16x128xf32>, vector<1x18x1x128xf32> -> vector<1x18x18x128xf32>
    %cst_10 = arith.constant 0.000000e+00 : f32
    %14 = vector.broadcast %cst_10 : f32 to vector<256x128xf32>
    %15 = vector.extract_strided_slice %13 {offsets = [0, 0, 0, 0], sizes = [1, 16, 16, 128], strides = [1, 1, 1, 1]} : vector<1x18x18x128xf32> to vector<1x16x16x128xf32>
    %16 = vector.shape_cast %15 : vector<1x16x16x128xf32> to vector<256x128xf32>
    %c0_11 = arith.constant 0 : index
    %c0_12 = arith.constant 0 : index
    %c0_13 = arith.constant 0 : index
    %17 = vector.load %arg4[%c0_11, %c0_12, %c0_13] : memref<9x128x128xf32, #tpu.memory_space<vmem>>, vector<1x128x128xf32>
    %18 = vector.shape_cast %17 : vector<1x128x128xf32> to vector<128x128xf32>
    %cst_14 = arith.constant dense<0.000000e+00> : vector<256x128xf32>
    %19 = tpu.matmul %16, %18, %cst_14 {dimension_numbers = #tpu.dot_dimension_numbers<[1], [0], [0], [1], [0, 0, 1, 1], [], []>} : vector<256x128xf32>, vector<128x128xf32>, vector<256x128xf32> -> vector<256x128xf32>
    %20 = arith.addf %14, %19 : vector<256x128xf32>
    %21 = vector.extract_strided_slice %13 {offsets = [0, 0, 1, 0], sizes = [1, 16, 16, 128], strides = [1, 1, 1, 1]} : vector<1x18x18x128xf32> to vector<1x16x16x128xf32>
    %22 = vector.shape_cast %21 : vector<1x16x16x128xf32> to vector<256x128xf32>
    %c1 = arith.constant 1 : index
    %c0_15 = arith.constant 0 : index
    %c0_16 = arith.constant 0 : index
    %23 = vector.load %arg4[%c1, %c0_15, %c0_16] : memref<9x128x128xf32, #tpu.memory_space<vmem>>, vector<1x128x128xf32>
    %24 = vector.shape_cast %23 : vector<1x128x128xf32> to vector<128x128xf32>
    %cst_17 = arith.constant dense<0.000000e+00> : vector<256x128xf32>
    %25 = tpu.matmul %22, %24, %cst_17 {dimension_numbers = #tpu.dot_dimension_numbers<[1], [0], [0], [1], [0, 0, 1, 1], [], []>} : vector<256x128xf32>, vector<128x128xf32>, vector<256x128xf32> -> vector<256x128xf32>
    %26 = arith.addf %20, %25 : vector<256x128xf32>
    %27 = vector.extract_strided_slice %13 {offsets = [0, 0, 2, 0], sizes = [1, 16, 16, 128], strides = [1, 1, 1, 1]} : vector<1x18x18x128xf32> to vector<1x16x16x128xf32>
    %28 = vector.shape_cast %27 : vector<1x16x16x128xf32> to vector<256x128xf32>
    %c2 = arith.constant 2 : index
    %c0_18 = arith.constant 0 : index
    %c0_19 = arith.constant 0 : index
    %29 = vector.load %arg4[%c2, %c0_18, %c0_19] : memref<9x128x128xf32, #tpu.memory_space<vmem>>, vector<1x128x128xf32>
    %30 = vector.shape_cast %29 : vector<1x128x128xf32> to vector<128x128xf32>
    %cst_20 = arith.constant dense<0.000000e+00> : vector<256x128xf32>
    %31 = tpu.matmul %28, %30, %cst_20 {dimension_numbers = #tpu.dot_dimension_numbers<[1], [0], [0], [1], [0, 0, 1, 1], [], []>} : vector<256x128xf32>, vector<128x128xf32>, vector<256x128xf32> -> vector<256x128xf32>
    %32 = arith.addf %26, %31 : vector<256x128xf32>
    %33 = vector.extract_strided_slice %13 {offsets = [0, 1, 0, 0], sizes = [1, 16, 16, 128], strides = [1, 1, 1, 1]} : vector<1x18x18x128xf32> to vector<1x16x16x128xf32>
    %34 = vector.shape_cast %33 : vector<1x16x16x128xf32> to vector<256x128xf32>
    %c3 = arith.constant 3 : index
    %c0_21 = arith.constant 0 : index
    %c0_22 = arith.constant 0 : index
    %35 = vector.load %arg4[%c3, %c0_21, %c0_22] : memref<9x128x128xf32, #tpu.memory_space<vmem>>, vector<1x128x128xf32>
    %36 = vector.shape_cast %35 : vector<1x128x128xf32> to vector<128x128xf32>
    %cst_23 = arith.constant dense<0.000000e+00> : vector<256x128xf32>
    %37 = tpu.matmul %34, %36, %cst_23 {dimension_numbers = #tpu.dot_dimension_numbers<[1], [0], [0], [1], [0, 0, 1, 1], [], []>} : vector<256x128xf32>, vector<128x128xf32>, vector<256x128xf32> -> vector<256x128xf32>
    %38 = arith.addf %32, %37 : vector<256x128xf32>
    %39 = vector.extract_strided_slice %13 {offsets = [0, 1, 1, 0], sizes = [1, 16, 16, 128], strides = [1, 1, 1, 1]} : vector<1x18x18x128xf32> to vector<1x16x16x128xf32>
    %40 = vector.shape_cast %39 : vector<1x16x16x128xf32> to vector<256x128xf32>
    %c4 = arith.constant 4 : index
    %c0_24 = arith.constant 0 : index
    %c0_25 = arith.constant 0 : index
    %41 = vector.load %arg4[%c4, %c0_24, %c0_25] : memref<9x128x128xf32, #tpu.memory_space<vmem>>, vector<1x128x128xf32>
    %42 = vector.shape_cast %41 : vector<1x128x128xf32> to vector<128x128xf32>
    %cst_26 = arith.constant dense<0.000000e+00> : vector<256x128xf32>
    %43 = tpu.matmul %40, %42, %cst_26 {dimension_numbers = #tpu.dot_dimension_numbers<[1], [0], [0], [1], [0, 0, 1, 1], [], []>} : vector<256x128xf32>, vector<128x128xf32>, vector<256x128xf32> -> vector<256x128xf32>
    %44 = arith.addf %38, %43 : vector<256x128xf32>
    %45 = vector.extract_strided_slice %13 {offsets = [0, 1, 2, 0], sizes = [1, 16, 16, 128], strides = [1, 1, 1, 1]} : vector<1x18x18x128xf32> to vector<1x16x16x128xf32>
    %46 = vector.shape_cast %45 : vector<1x16x16x128xf32> to vector<256x128xf32>
    %c5 = arith.constant 5 : index
    %c0_27 = arith.constant 0 : index
    %c0_28 = arith.constant 0 : index
    %47 = vector.load %arg4[%c5, %c0_27, %c0_28] : memref<9x128x128xf32, #tpu.memory_space<vmem>>, vector<1x128x128xf32>
    %48 = vector.shape_cast %47 : vector<1x128x128xf32> to vector<128x128xf32>
    %cst_29 = arith.constant dense<0.000000e+00> : vector<256x128xf32>
    %49 = tpu.matmul %46, %48, %cst_29 {dimension_numbers = #tpu.dot_dimension_numbers<[1], [0], [0], [1], [0, 0, 1, 1], [], []>} : vector<256x128xf32>, vector<128x128xf32>, vector<256x128xf32> -> vector<256x128xf32>
    %50 = arith.addf %44, %49 : vector<256x128xf32>
    %51 = vector.extract_strided_slice %13 {offsets = [0, 2, 0, 0], sizes = [1, 16, 16, 128], strides = [1, 1, 1, 1]} : vector<1x18x18x128xf32> to vector<1x16x16x128xf32>
    %52 = vector.shape_cast %51 : vector<1x16x16x128xf32> to vector<256x128xf32>
    %c6 = arith.constant 6 : index
    %c0_30 = arith.constant 0 : index
    %c0_31 = arith.constant 0 : index
    %53 = vector.load %arg4[%c6, %c0_30, %c0_31] : memref<9x128x128xf32, #tpu.memory_space<vmem>>, vector<1x128x128xf32>
    %54 = vector.shape_cast %53 : vector<1x128x128xf32> to vector<128x128xf32>
    %cst_32 = arith.constant dense<0.000000e+00> : vector<256x128xf32>
    %55 = tpu.matmul %52, %54, %cst_32 {dimension_numbers = #tpu.dot_dimension_numbers<[1], [0], [0], [1], [0, 0, 1, 1], [], []>} : vector<256x128xf32>, vector<128x128xf32>, vector<256x128xf32> -> vector<256x128xf32>
    %56 = arith.addf %50, %55 : vector<256x128xf32>
    %57 = vector.extract_strided_slice %13 {offsets = [0, 2, 1, 0], sizes = [1, 16, 16, 128], strides = [1, 1, 1, 1]} : vector<1x18x18x128xf32> to vector<1x16x16x128xf32>
    %58 = vector.shape_cast %57 : vector<1x16x16x128xf32> to vector<256x128xf32>
    %c7 = arith.constant 7 : index
    %c0_33 = arith.constant 0 : index
    %c0_34 = arith.constant 0 : index
    %59 = vector.load %arg4[%c7, %c0_33, %c0_34] : memref<9x128x128xf32, #tpu.memory_space<vmem>>, vector<1x128x128xf32>
    %60 = vector.shape_cast %59 : vector<1x128x128xf32> to vector<128x128xf32>
    %cst_35 = arith.constant dense<0.000000e+00> : vector<256x128xf32>
    %61 = tpu.matmul %58, %60, %cst_35 {dimension_numbers = #tpu.dot_dimension_numbers<[1], [0], [0], [1], [0, 0, 1, 1], [], []>} : vector<256x128xf32>, vector<128x128xf32>, vector<256x128xf32> -> vector<256x128xf32>
    %62 = arith.addf %56, %61 : vector<256x128xf32>
    %63 = vector.extract_strided_slice %13 {offsets = [0, 2, 2, 0], sizes = [1, 16, 16, 128], strides = [1, 1, 1, 1]} : vector<1x18x18x128xf32> to vector<1x16x16x128xf32>
    %64 = vector.shape_cast %63 : vector<1x16x16x128xf32> to vector<256x128xf32>
    %c8 = arith.constant 8 : index
    %c0_36 = arith.constant 0 : index
    %c0_37 = arith.constant 0 : index
    %65 = vector.load %arg4[%c8, %c0_36, %c0_37] : memref<9x128x128xf32, #tpu.memory_space<vmem>>, vector<1x128x128xf32>
    %66 = vector.shape_cast %65 : vector<1x128x128xf32> to vector<128x128xf32>
    %cst_38 = arith.constant dense<0.000000e+00> : vector<256x128xf32>
    %67 = tpu.matmul %64, %66, %cst_38 {dimension_numbers = #tpu.dot_dimension_numbers<[1], [0], [0], [1], [0, 0, 1, 1], [], []>} : vector<256x128xf32>, vector<128x128xf32>, vector<256x128xf32> -> vector<256x128xf32>
    %68 = arith.addf %62, %67 : vector<256x128xf32>
    %c0_39 = arith.constant 0 : index
    %c0_40 = arith.constant 0 : index
    %69 = vector.load %arg5[%c0_39, %c0_40] : memref<1x128xf32, #tpu.memory_space<vmem>>, vector<1x128xf32>
    %70 = vector.broadcast %69 : vector<1x128xf32> to vector<256x128xf32>
    %71 = arith.addf %68, %70 : vector<256x128xf32>
    %cst_41 = arith.constant 0.000000e+00 : f32
    %72 = vector.broadcast %cst_41 : f32 to vector<256x128xf32>
    %73 = arith.maximumf %71, %72 : vector<256x128xf32>
    %c0_42 = arith.constant 0 : index
    %c0_43 = arith.constant 0 : index
    %74 = vector.load %arg6[%c0_42, %c0_43] : memref<128x128xf32, #tpu.memory_space<vmem>>, vector<128x128xf32>
    %cst_44 = arith.constant dense<0.000000e+00> : vector<256x128xf32>
    %75 = tpu.matmul %73, %74, %cst_44 {dimension_numbers = #tpu.dot_dimension_numbers<[1], [0], [0], [1], [0, 0, 1, 1], [], []>} : vector<256x128xf32>, vector<128x128xf32>, vector<256x128xf32> -> vector<256x128xf32>
    %c0_45 = arith.constant 0 : index
    %c0_46 = arith.constant 0 : index
    %76 = vector.load %arg7[%c0_45, %c0_46] : memref<1x128xf32, #tpu.memory_space<vmem>>, vector<1x128xf32>
    %77 = vector.broadcast %76 : vector<1x128xf32> to vector<256x128xf32>
    %78 = arith.addf %75, %77 : vector<256x128xf32>
    %79 = arith.addf %78, %1 : vector<256x128xf32>
    %cst_47 = arith.constant 0.000000e+00 : f32
    %80 = vector.broadcast %cst_47 : f32 to vector<256x128xf32>
    %81 = arith.maximumf %79, %80 : vector<256x128xf32>
    %82 = vector.shape_cast %81 : vector<256x128xf32> to vector<1x16x16x128xf32>
    %c0_48 = arith.constant 0 : index
    %c0_49 = arith.constant 0 : index
    %c0_50 = arith.constant 0 : index
    %c0_51 = arith.constant 0 : index
    %83 = vector.load %arg8[%c0_48, %c0_49, %c0_50, %c0_51] : memref<1x16x16x128xf32, #tpu.memory_space<vmem>>, vector<1x16x16x128xf32>
    tpu.vector_store %arg8[%c0_48, %c0_49, %c0_50, %c0_51], %82 {strides = array<i32>} : memref<1x16x16x128xf32, #tpu.memory_space<vmem>>, vector<1x16x16x128xf32>,
    return
  }
  func.func @transform_0(%arg0: i32) -> (i32, i32, i32, i32) {
    %c0_i32 = arith.constant 0 : i32
    %c0_i32_0 = arith.constant 0 : i32
    %c0_i32_1 = arith.constant 0 : i32
    %c0_i32_2 = arith.constant 0 : i32
    return %arg0, %c0_i32, %c0_i32_0, %c0_i32_1 : i32, i32, i32, i32
  }
  func.func @transform_1(%arg0: i32) -> (i32, i32) {
    %c0_i32 = arith.constant 0 : i32
    %c0_i32_0 = arith.constant 0 : i32
    %c0_i32_1 = arith.constant 0 : i32
    return %c0_i32, %c0_i32_0 : i32, i32
  }
  func.func @transform_2(%arg0: i32) -> (i32, i32) {
    %c0_i32 = arith.constant 0 : i32
    %c0_i32_0 = arith.constant 0 : i32
    %c0_i32_1 = arith.constant 0 : i32
    return %c0_i32, %c0_i32_0 : i32, i32
  }
  func.func @transform_3(%arg0: i32) -> (i32, i32, i32) {
    %c0_i32 = arith.constant 0 : i32
    %c0_i32_0 = arith.constant 0 : i32
    %c0_i32_1 = arith.constant 0 : i32
    %c0_i32_2 = arith.constant 0 : i32
    return %c0_i32, %c0_i32_0, %c0_i32_1 : i32, i32, i32
  }
  func.func @transform_4(%arg0: i32) -> (i32, i32) {
    %c0_i32 = arith.constant 0 : i32
    %c0_i32_0 = arith.constant 0 : i32
    %c0_i32_1 = arith.constant 0 : i32
    return %c0_i32, %c0_i32_0 : i32, i32
  }
  func.func @transform_5(%arg0: i32) -> (i32, i32) {
    %c0_i32 = arith.constant 0 : i32
    %c0_i32_0 = arith.constant 0 : i32
    %c0_i32_1 = arith.constant 0 : i32
    return %c0_i32, %c0_i32_0 : i32, i32
  }
  func.func @transform_6(%arg0: i32) -> (i32, i32) {
    %c0_i32 = arith.constant 0 : i32
    %c0_i32_0 = arith.constant 0 : i32
    %c0_i32_1 = arith.constant 0 : i32
    return %c0_i32, %c0_i32_0 : i32, i32
  }
  func.func @transform_7(%arg0: i32) -> (i32, i32, i32, i32) {
    %c0_i32 = arith.constant 0 : i32
    %c0_i32_0 = arith.constant 0 : i32
    %c0_i32_1 = arith.constant 0 : i32
    %c0_i32_2 = arith.constant 0 : i32
    return %arg0, %c0_i32, %c0_i32_0, %c0_i32_1 : i32, i32, i32, i32
  }
}

</mosaic_0001>

<llo_original>
// kernel: tpu_custom_call.1
$region0: #{tpu_custom_call.1}
  #allocation0 [shape = 'u32[]', space=smem, size = 0x4, offset = 0x4, fixed_abs, tag = 'smem constant byte address 0x4 - core index']
  #allocation1 [shape = 'u32[144,128]{1,0:T(1,128)}', space=vmem, size = 0x12000, scoped, tag = 'internal scratch']
  %s0 = inlined_call_operand.hbm [shape: f32[2,16,16,128], index: 0, kind: input, shape index: {}]
  %s1 = inlined_call_operand.hbm [shape: f32[128,128], index: 1, kind: input, shape index: {}]
  %s2 = inlined_call_operand.vmem [shape: f32[1,128], index: 2, kind: input, shape index: {}]
  %s3 = inlined_call_operand.hbm [shape: f32[9,128,128], index: 3, kind: input, shape index: {}]
  %s4 = inlined_call_operand.vmem [shape: f32[1,128], index: 4, kind: input, shape index: {}]
  %s5 = inlined_call_operand.hbm [shape: f32[128,128], index: 5, kind: input, shape index: {}]
  %s6 = inlined_call_operand.vmem [shape: f32[1,128], index: 6, kind: input, shape index: {}]
  %s7 = inlined_call_operand.hbm [shape: f32[2,16,16,128], index: 7, kind: output, shape index: {}]
  %s8 = sld [smem:[#allocation0]]
  $region77: #{tpu_custom_call.1} parent=0
    _
  %s10 = ssub.s32 1, %s8
  %s11 = scalar_select 0, %s10, %s8
  $region1: #{tpu_custom_call.1} parent=0
    #allocation2 [shape = 'u8[262144]{0}', space=vmem, size = 0x40000, scoped, tag = 'input window, operand 0']
    #allocation3 [shape = 's32[2]{0}', space=sflag, size = 0x8, scoped, tag = 'scoped memory for tpu_custom_call.1']
    #allocation4 [shape = 's32[2]{0}', space=sflag, size = 0x8, scoped, tag = 'scoped memory for tpu_custom_call.1']
    #allocation5 [shape = 'u8[65536]{0}', space=vmem, size = 0x10000, scoped, tag = 'input window, operand 1, single buffered']
    #allocation6 [shape = 's32[1]{0}', space=sflag, size = 0x4, scoped, tag = 'scoped memory for tpu_custom_call.1']
    #allocation7 [shape = 'u8[589824]{0}', space=vmem, size = 0x90000, scoped, tag = 'input window, operand 3, single buffered']
    #allocation8 [shape = 'u8[65536]{0}', space=vmem, size = 0x10000, scoped, tag = 'input window, operand 5, single buffered']
    #allocation9 [shape = 's32[1]{0}', space=sflag, size = 0x4, scoped, tag = 'scoped memory for tpu_custom_call.1']
    #allocation10 [shape = 'u8[262144]{0}', space=vmem, size = 0x40000, scoped, tag = 'output window, operand 0']
    %12 = vsyncpa [#allocation3], 0
    %s13 = scalar_lea.sflag [#allocation3], 1
    %14 = vsyncpa %s13, 0
    %15 = vsyncpa [#allocation6], 0
    %16 = vsyncpa [#allocation9], 0
    %17 = vsyncpa [#allocation4], 0
    %s18 = scalar_lea.sflag [#allocation4], 1
    %19 = vsyncpa %s18, 0
    loop: start=0, step=1, limit=4
    $region2: #{tpu_custom_call.1} parent=1 // loop_pre_header
      _
    $region3: #{tpu_custom_call.1} parent=1 // loop_header
      %s21 = sphi 0, %s25
      %p22 = scmp.ge.s32.totalorder %s21, 4
      %s31 = sphi 0, %s33
      %s34 = sphi 0, %s31
      %s35 = sphi 0, %s34
      %s51 = sphi 0, %s35
      %s55 = sphi 0, %s55
      %s57 = sphi 0, %s55
      %s58 = sphi 0, %s57
      %s72 = sphi 0, %s58
      %s76 = sphi 0, %s76
      %s78 = sphi 0, %s76
      %s79 = sphi 0, %s78
      %s93 = sphi 0, %s79
      %s97 = sphi 0, %s97
      %s99 = sphi 0, %s97
      %s100 = sphi 0, %s99
      %s114 = sphi 0, %s100
      %s118 = sphi 0, %s118
      %s120 = sphi 0, %s118
      %s121 = sphi 0, %s120
      %s135 = sphi 0, %s121
      %s139 = sphi 0, %s139
      %s141 = sphi 0, %s139
      %s142 = sphi 0, %s141
      %s156 = sphi 0, %s142
      %s160 = sphi 0, %s160
      %s162 = sphi 0, %s160
      %s163 = sphi 0, %s162
      %s177 = sphi 0, %s163
      %s183 = sphi 0, %s185
      %s186 = sphi 0, %s183
      %s187 = sphi 0, %s186
      %s203 = sphi 0, %s187
    $region4: #{tpu_custom_call.1} parent=1 // loop_header_branch
      %24 = sbr.rel (%p22) target = $region8
    $region5: #{tpu_custom_call.1} parent=1 // loop_body
      %s26 = ssub.s32 %s21, 1
      %s27 = ssub.s32 %s21, 2
      %s28 = sadd.s32 %s21, 1
      %s29 = ssub.s32 %s21, %s28
      %p30 = scmp.eq.s32.totalorder %s29, 0
      %s32 = sadd.s32 %s31, 1
      %s33 = scalar_select %p30, %s31, %s32
      %p36 = pneg %p30
      %p37 = scmp.eq.s32.totalorder %s21, 1
      %p38 = por %p36, %p37
      %p39 = scmp.ne.s32.totalorder %s31, %s34
      %p40 = scmp.eq.s32.totalorder %s21, 0
      %p41 = por %p39, %p40
      %p42 = scmp.ne.s32.totalorder %s31, %s34
      %p43 = scmp.eq.s32.totalorder %s26, 1
      %p44 = por %p42, %p43
      %p45 = scmp.ne.s32.totalorder %s34, %s35
      %p46 = scmp.eq.s32.totalorder %s26, 0
      %p47 = por %p45, %p46
      %p48 = scmp.ne.s32.totalorder %s34, %s35
      %p49 = scmp.eq.s32.totalorder %s27, 1
      %p50 = por %p48, %p49
      %p52 = scmp.ne.s32.totalorder %s35, %s51
      %p53 = scmp.eq.s32.totalorder %s27, 0
      %p54 = por %p52, %p53
      %s56 = sadd.s32 %s55, 1
      %p59 = scmp.eq.s32.totalorder %s21, 1
      %p60 = scmp.ne.s32.totalorder %s55, %s57
      %p61 = scmp.eq.s32.totalorder %s21, 0
      %p62 = por %p60, %p61
      %p63 = scmp.ne.s32.totalorder %s55, %s57
      %p64 = scmp.eq.s32.totalorder %s26, 1
      %p65 = por %p63, %p64
      %p66 = scmp.ne.s32.totalorder %s57, %s58
      %p67 = scmp.eq.s32.totalorder %s26, 0
      %p68 = por %p66, %p67
      %p69 = scmp.ne.s32.totalorder %s57, %s58
      %p70 = scmp.eq.s32.totalorder %s27, 1
      %p71 = por %p69, %p70
      %p73 = scmp.ne.s32.totalorder %s58, %s72
      %p74 = scmp.eq.s32.totalorder %s27, 0
      %p75 = por %p73, %p74
      %s77 = sadd.s32 %s76, 1
      %p80 = scmp.eq.s32.totalorder %s21, 1
      %p81 = scmp.ne.s32.totalorder %s76, %s78
      %p82 = scmp.eq.s32.totalorder %s21, 0
      %p83 = por %p81, %p82
      %p84 = scmp.ne.s32.totalorder %s76, %s78
      %p85 = scmp.eq.s32.totalorder %s26, 1
      %p86 = por %p84, %p85
      %p87 = scmp.ne.s32.totalorder %s78, %s79
      %p88 = scmp.eq.s32.totalorder %s26, 0
      %p89 = por %p87, %p88
      %p90 = scmp.ne.s32.totalorder %s78, %s79
      %p91 = scmp.eq.s32.totalorder %s27, 1
      %p92 = por %p90, %p91
      %p94 = scmp.ne.s32.totalorder %s79, %s93
      %p95 = scmp.eq.s32.totalorder %s27, 0
      %p96 = por %p94, %p95
      %s98 = sadd.s32 %s97, 1
      %p101 = scmp.eq.s32.totalorder %s21, 1
      %p102 = scmp.ne.s32.totalorder %s97, %s99
      %p103 = scmp.eq.s32.totalorder %s21, 0
      %p104 = por %p102, %p103
      %p105 = scmp.ne.s32.totalorder %s97, %s99
      %p106 = scmp.eq.s32.totalorder %s26, 1
      %p107 = por %p105, %p106
      %p108 = scmp.ne.s32.totalorder %s99, %s100
      %p109 = scmp.eq.s32.totalorder %s26, 0
      %p110 = por %p108, %p109
      %p111 = scmp.ne.s32.totalorder %s99, %s100
      %p112 = scmp.eq.s32.totalorder %s27, 1
      %p113 = por %p111, %p112
      %p115 = scmp.ne.s32.totalorder %s100, %s114
      %p116 = scmp.eq.s32.totalorder %s27, 0
      %p117 = por %p115, %p116
      %s119 = sadd.s32 %s118, 1
      %p122 = scmp.eq.s32.totalorder %s21, 1
      %p123 = scmp.ne.s32.totalorder %s118, %s120
      %p124 = scmp.eq.s32.totalorder %s21, 0
      %p125 = por %p123, %p124
      %p126 = scmp.ne.s32.totalorder %s118, %s120
      %p127 = scmp.eq.s32.totalorder %s26, 1
      %p128 = por %p126, %p127
      %p129 = scmp.ne.s32.totalorder %s120, %s121
      %p130 = scmp.eq.s32.totalorder %s26, 0
      %p131 = por %p129, %p130
      %p132 = scmp.ne.s32.totalorder %s120, %s121
      %p133 = scmp.eq.s32.totalorder %s27, 1
      %p134 = por %p132, %p133
      %p136 = scmp.ne.s32.totalorder %s121, %s135
      %p137 = scmp.eq.s32.totalorder %s27, 0
      %p138 = por %p136, %p137
      %s140 = sadd.s32 %s139, 1
      %p143 = scmp.eq.s32.totalorder %s21, 1
      %p144 = scmp.ne.s32.totalorder %s139, %s141
      %p145 = scmp.eq.s32.totalorder %s21, 0
      %p146 = por %p144, %p145
      %p147 = scmp.ne.s32.totalorder %s139, %s141
      %p148 = scmp.eq.s32.totalorder %s26, 1
      %p149 = por %p147, %p148
      %p150 = scmp.ne.s32.totalorder %s141, %s142
      %p151 = scmp.eq.s32.totalorder %s26, 0
      %p152 = por %p150, %p151
      %p153 = scmp.ne.s32.totalorder %s141, %s142
      %p154 = scmp.eq.s32.totalorder %s27, 1
      %p155 = por %p153, %p154
      %p157 = scmp.ne.s32.totalorder %s142, %s156
      %p158 = scmp.eq.s32.totalorder %s27, 0
      %p159 = por %p157, %p158
      %s161 = sadd.s32 %s160, 1
      %p164 = scmp.eq.s32.totalorder %s21, 1
      %p165 = scmp.ne.s32.totalorder %s160, %s162
      %p166 = scmp.eq.s32.totalorder %s21, 0
      %p167 = por %p165, %p166
      %p168 = scmp.ne.s32.totalorder %s160, %s162
      %p169 = scmp.eq.s32.totalorder %s26, 1
      %p170 = por %p168, %p169
      %p171 = scmp.ne.s32.totalorder %s162, %s163
      %p172 = scmp.eq.s32.totalorder %s26, 0
      %p173 = por %p171, %p172
      %p174 = scmp.ne.s32.totalorder %s162, %s163
      %p175 = scmp.eq.s32.totalorder %s27, 1
      %p176 = por %p174, %p175
      %p178 = scmp.ne.s32.totalorder %s163, %s177
      %p179 = scmp.eq.s32.totalorder %s27, 0
      %p180 = por %p178, %p179
      %s181 = ssub.s32 %s21, %s28
      %p182 = scmp.eq.s32.totalorder %s181, 0
      %s184 = sadd.s32 %s183, 1
      %s185 = scalar_select %p182, %s183, %s184
      %p188 = pneg %p182
      %p189 = scmp.eq.s32.totalorder %s21, 1
      %p190 = por %p188, %p189
      %p191 = scmp.ne.s32.totalorder %s183, %s186
      %p192 = scmp.eq.s32.totalorder %s21, 0
      %p193 = por %p191, %p192
      %p194 = scmp.ne.s32.totalorder %s183, %s186
      %p195 = scmp.eq.s32.totalorder %s26, 1
      %p196 = por %p194, %p195
      %p197 = scmp.ne.s32.totalorder %s186, %s187
      %p198 = scmp.eq.s32.totalorder %s26, 0
      %p199 = por %p197, %p198
      %p200 = scmp.ne.s32.totalorder %s186, %s187
      %p201 = scmp.eq.s32.totalorder %s27, 1
      %p202 = por %p200, %p201
      %p204 = scmp.ne.s32.totalorder %s187, %s203
      %p205 = scmp.eq.s32.totalorder %s27, 0
      %p206 = por %p204, %p205
      %p207 = scmp.le.s32.totalorder 1, %s21
      %p208 = scmp.lt.s32.totalorder %s21, 3
      %p209 = pnand %p207, %p208
      %p210 = pneg %p209
      // Predicated region
      $region9: #{tpu_custom_call.1} parent=5 // pred_check
        _
      $region10: #{tpu_custom_call.1} parent=5 // pred_check_branch
        %212 = sbr.rel (%p209) target = $region12
      $region11: #{tpu_custom_call.1} parent=5 // pred_region
        %s213 = ssub.s32 %s21, 1
        // Predicated region
        $region13: #{tpu_custom_call.1} parent=11 // pred_check
          %p214 = pneg %p68
        $region14: #{tpu_custom_call.1} parent=11 // pred_check_branch
          %216 = sbr.rel (%p214) target = $region16
        $region15: #{tpu_custom_call.1} parent=11 // pred_region
          %s218 = ssub.s32 2048, 2048
          %219 = vsyncadd [#allocation6], %s218
          %s220 = sshll.u32 [#allocation5], 4
          %s221 = int_to_ptr.vmem [resolvable:$true] %s220
          %226 = dma.hbm_to_vmem [thread:$0]  %s1, 2048, %s221, [#allocation6], 128, 128, 8
        $region16: #{tpu_custom_call.1} parent=11 // pred_fallthru
          _
        // Predicated region
        $region17: #{tpu_custom_call.1} parent=11 // pred_check
          %p227 = pneg %p89
        $region18: #{tpu_custom_call.1} parent=11 // pred_check_branch
          %229 = sbr.rel (%p227) target = $region20
        $region19: #{tpu_custom_call.1} parent=11 // pred_region
          _
        $region20: #{tpu_custom_call.1} parent=11 // pred_fallthru
          _
        // Predicated region
        $region21: #{tpu_custom_call.1} parent=11 // pred_check
          %p230 = pneg %p110
        $region22: #{tpu_custom_call.1} parent=11 // pred_check_branch
          %232 = sbr.rel (%p230) target = $region24
        $region23: #{tpu_custom_call.1} parent=11 // pred_region
          %s234 = ssub.s32 18432, 18432
          %235 = vsyncadd [#allocation6], %s234
          %s236 = sshll.u32 [#allocation7], 4
          %s237 = int_to_ptr.vmem [resolvable:$true] %s236
          %242 = dma.hbm_to_vmem [thread:$0]  %s3, 18432, %s237, [#allocation6], 128, 128, 8
        $region24: #{tpu_custom_call.1} parent=11 // pred_fallthru
          _
        // Predicated region
        $region25: #{tpu_custom_call.1} parent=11 // pred_check
          %p243 = pneg %p131
        $region26: #{tpu_custom_call.1} parent=11 // pred_check_branch
          %245 = sbr.rel (%p243) target = $region28
        $region27: #{tpu_custom_call.1} parent=11 // pred_region
          _
        $region28: #{tpu_custom_call.1} parent=11 // pred_fallthru
          _
        // Predicated region
        $region29: #{tpu_custom_call.1} parent=11 // pred_check
          %p246 = pneg %p152
        $region30: #{tpu_custom_call.1} parent=11 // pred_check_branch
          %248 = sbr.rel (%p246) target = $region32
        $region31: #{tpu_custom_call.1} parent=11 // pred_region
          %s250 = ssub.s32 2048, 2048
          %251 = vsyncadd [#allocation9], %s250
          %s252 = sshll.u32 [#allocation8], 4
          %s253 = int_to_ptr.vmem [resolvable:$true] %s252
          %258 = dma.hbm_to_vmem [thread:$0]  %s5, 2048, %s253, [#allocation9], 128, 128, 8
        $region32: #{tpu_custom_call.1} parent=11 // pred_fallthru
          _
        // Predicated region
        $region33: #{tpu_custom_call.1} parent=11 // pred_check
          %p259 = pneg %p173
        $region34: #{tpu_custom_call.1} parent=11 // pred_check_branch
          %261 = sbr.rel (%p259) target = $region36
        $region35: #{tpu_custom_call.1} parent=11 // pred_region
          _
        $region36: #{tpu_custom_call.1} parent=11 // pred_fallthru
          _
      $region12: #{tpu_custom_call.1} parent=5 // pred_fallthru
        _
      %p262 = scmp.lt.s32.totalorder %s21, 2
      // Predicated region
      $region37: #{tpu_custom_call.1} parent=5 // pred_check
        %p263 = pneg %p262
      $region38: #{tpu_custom_call.1} parent=5 // pred_check_branch
        %265 = sbr.rel (%p263) target = $region40
      $region39: #{tpu_custom_call.1} parent=5 // pred_region
        // Predicated region
        $region41: #{tpu_custom_call.1} parent=39 // pred_check
          %p266 = pneg %p41
        $region42: #{tpu_custom_call.1} parent=39 // pred_check_branch
          %268 = sbr.rel (%p266) target = $region44
        $region43: #{tpu_custom_call.1} parent=39 // pred_region
          %s269 = sand.u32 %s31, 1
          %s270 = scalar_lea.sflag [#allocation3], %s269
          %s271 = sand.u32 %s31, 1
          %s272 = smul.addr %s271, 256
          %s273 = scalar_lea.vmem [#allocation2], %s272
          %s275 = ssub.s32 4096, 4096
          %276 = vsyncadd %s270, %s275
          %s277 = smul.addr %s21, 32
          %s278 = smul.addr %s277, 128
          %s279 = scalar_lea.hbm %s0, %s278
          %s280 = sshll.u32 %s273, 4
          %s281 = int_to_ptr.vmem [resolvable:$true] %s280
          %286 = dma.hbm_to_vmem [thread:$0]  %s279, 4096, %s281, %s270, 128, 128, 8
        $region44: #{tpu_custom_call.1} parent=39 // pred_fallthru
          _
      $region40: #{tpu_custom_call.1} parent=5 // pred_fallthru
        _
      %p287 = scmp.le.s32.totalorder 1, %s21
      %p288 = scmp.lt.s32.totalorder %s21, 3
      %p289 = pnand %p287, %p288
      %p290 = pneg %p289
      // Predicated region
      $region45: #{tpu_custom_call.1} parent=5 // pred_check
        _
      $region46: #{tpu_custom_call.1} parent=5 // pred_check_branch
        %292 = sbr.rel (%p289) target = $region48
      $region47: #{tpu_custom_call.1} parent=5 // pred_region
        %s293 = ssub.s32 %s21, 1
        %s294 = sand.u32 %s34, 1
        %s295 = scalar_lea.sflag [#allocation3], %s294
        %s296 = sand.u32 %s34, 1
        %s297 = smul.addr %s296, 256
        %s298 = scalar_lea.vmem [#allocation2], %s297
        // Predicated region
        $region49: #{tpu_custom_call.1} parent=47 // pred_check
          %p299 = pneg %p47
        $region50: #{tpu_custom_call.1} parent=47 // pred_check_branch
          %301 = sbr.rel (%p299) target = $region52
        $region51: #{tpu_custom_call.1} parent=47 // pred_region
          %302 = dma.done %s295, 4096
        $region52: #{tpu_custom_call.1} parent=47 // pred_fallthru
          _
        // Predicated region
        $region53: #{tpu_custom_call.1} parent=47 // pred_check
          %p303 = pneg %p68
        $region54: #{tpu_custom_call.1} parent=47 // pred_check_branch
          %305 = sbr.rel (%p303) target = $region56
        $region55: #{tpu_custom_call.1} parent=47 // pred_region
          %306 = dma.done [#allocation6], 2048
        $region56: #{tpu_custom_call.1} parent=47 // pred_fallthru
          _
        // Predicated region
        $region57: #{tpu_custom_call.1} parent=47 // pred_check
          %p307 = pneg %p110
        $region58: #{tpu_custom_call.1} parent=47 // pred_check_branch
          %309 = sbr.rel (%p307) target = $region60
        $region59: #{tpu_custom_call.1} parent=47 // pred_region
          %310 = dma.done [#allocation6], 18432
        $region60: #{tpu_custom_call.1} parent=47 // pred_fallthru
          _
        // Predicated region
        $region61: #{tpu_custom_call.1} parent=47 // pred_check
          %p311 = pneg %p152
        $region62: #{tpu_custom_call.1} parent=47 // pred_check_branch
          %313 = sbr.rel (%p311) target = $region64
        $region63: #{tpu_custom_call.1} parent=47 // pred_region
          %314 = dma.done [#allocation9], 2048
        $region64: #{tpu_custom_call.1} parent=47 // pred_fallthru
          _
        %s315 = sand.u32 %s34, 1
        %s316 = scalar_lea.sflag [#allocation3], %s315
        %s317 = sand.u32 %s34, 1
        %s318 = smul.addr %s317, 256
        %s319 = scalar_lea.vmem [#allocation2], %s318
        %p320 = pneg %p47
        %p321 = pneg %p44
        %p322 = pneg %p68
        %p323 = pneg %p65
        %p324 = pneg %p89
        %p325 = pneg %p86
        %p326 = pneg %p110
        %p327 = pneg %p107
        %p328 = pneg %p131
        %p329 = pneg %p128
        %p330 = pneg %p152
        %p331 = pneg %p149
        %p332 = pneg %p173
        %p333 = pneg %p170
        %p334 = pneg %p199
        %p335 = pneg %p196
        %s336 = sand.u32 %s186, 1
        %s337 = scalar_lea.sflag [#allocation4], %s336
        %s338 = sand.u32 %s186, 1
        %s339 = smul.addr %s338, 256
        %s340 = scalar_lea.vmem [#allocation10], %s339
        %v341 = vld [vmem:[%s298] sm:$0xff]
        %v342 = vld [vmem:[%s298 + $0x8] sm:$0xff]
        %v343 = vld [vmem:[%s298 + $0x10] sm:$0xff]
        %v344 = vld [vmem:[%s298 + $0x18] sm:$0xff]
        %v345 = vld [vmem:[%s298 + $0x20] sm:$0xff]
        %v346 = vld [vmem:[%s298 + $0x28] sm:$0xff]
        %v347 = vld [vmem:[%s298 + $0x30] sm:$0xff]
        %v348 = vld [vmem:[%s298 + $0x38] sm:$0xff]
        %v349 = vld [vmem:[%s298 + $0x40] sm:$0xff]
        %v350 = vld [vmem:[%s298 + $0x48] sm:$0xff]
        %v351 = vld [vmem:[%s298 + $0x50] sm:$0xff]
        %v352 = vld [vmem:[%s298 + $0x58] sm:$0xff]
        %v353 = vld [vmem:[%s298 + $0x60] sm:$0xff]
        %v354 = vld [vmem:[%s298 + $0x68] sm:$0xff]
        %v355 = vld [vmem:[%s298 + $0x70] sm:$0xff]
        %v356 = vld [vmem:[%s298 + $0x78] sm:$0xff]
        %v357 = vld [vmem:[%s298 + $0x80] sm:$0xff]
        %v358 = vld [vmem:[%s298 + $0x88] sm:$0xff]
        %v359 = vld [vmem:[%s298 + $0x90] sm:$0xff]
        %v360 = vld [vmem:[%s298 + $0x98] sm:$0xff]
        %v361 = vld [vmem:[%s298 + $0xa0] sm:$0xff]
        %v362 = vld [vmem:[%s298 + $0xa8] sm:$0xff]
        %v363 = vld [vmem:[%s298 + $0xb0] sm:$0xff]
        %v364 = vld [vmem:[%s298 + $0xb8] sm:$0xff]
        %v365 = vld [vmem:[%s298 + $0xc0] sm:$0xff]
        %v366 = vld [vmem:[%s298 + $0xc8] sm:$0xff]
        %v367 = vld [vmem:[%s298 + $0xd0] sm:$0xff]
        %v368 = vld [vmem:[%s298 + $0xd8] sm:$0xff]
        %v369 = vld [vmem:[%s298 + $0xe0] sm:$0xff]
        %v370 = vld [vmem:[%s298 + $0xe8] sm:$0xff]
        %v371 = vld [vmem:[%s298 + $0xf0] sm:$0xff]
        %v372 = vld [vmem:[%s298 + $0xf8] sm:$0xff]
        %v373 = vld [vmem:[#allocation5] sm:$0xff]
        %v374 = vld [vmem:[#allocation5 + $0x8] sm:$0xff]
        %v375 = vld [vmem:[#allocation5 + $0x10] sm:$0xff]
        %v376 = vld [vmem:[#allocation5 + $0x18] sm:$0xff]
        %v377 = vld [vmem:[#allocation5 + $0x20] sm:$0xff]
        %v378 = vld [vmem:[#allocation5 + $0x28] sm:$0xff]
        %v379 = vld [vmem:[#allocation5 + $0x30] sm:$0xff]
        %v380 = vld [vmem:[#allocation5 + $0x38] sm:$0xff]
        %v381 = vld [vmem:[#allocation5 + $0x40] sm:$0xff]
        %v382 = vld [vmem:[#allocation5 + $0x48] sm:$0xff]
        %v383 = vld [vmem:[#allocation5 + $0x50] sm:$0xff]
        %v384 = vld [vmem:[#allocation5 + $0x58] sm:$0xff]
        %v385 = vld [vmem:[#allocation5 + $0x60] sm:$0xff]
        %v386 = vld [vmem:[#allocation5 + $0x68] sm:$0xff]
        %v387 = vld [vmem:[#allocation5 + $0x70] sm:$0xff]
        %v388 = vld [vmem:[#allocation5 + $0x78] sm:$0xff]
        %v389 = vld [vmem:[%s2] sm:$0x1]
        %v391 = vlaneseq
        %v392 = vshrl.u32 %v391, 7
        %v393 = vsub.s32 0, %v392
        %v394 = vrot.slane %v389, %v393
        %396 = vmatprep.subr.mxu0 0.0
        %397 = vmatpush1.msra.mxu0 %v388
        %398 = vmatprep.subr.mxu0 0.0
        %399 = vmatpush1.msra.mxu0 %v387
        %400 = vmatprep.subr.mxu0 0.0
        %401 = vmatpush1.msra.mxu0 %v386
        %402 = vmatprep.subr.mxu0 0.0
        %403 = vmatpush1.msra.mxu0 %v385
        %404 = vmatprep.subr.mxu0 0.0
        %405 = vmatpush1.msra.mxu0 %v384
        %406 = vmatprep.subr.mxu0 0.0
        %407 = vmatpush1.msra.mxu0 %v383
        %408 = vmatprep.subr.mxu0 0.0
        %409 = vmatpush1.msra.mxu0 %v382
        %410 = vmatprep.subr.mxu0 0.0
        %411 = vmatpush1.msra.mxu0 %v381
        %412 = vmatprep.subr.mxu0 0.0
        %413 = vmatpush1.msra.mxu0 %v380
        %414 = vmatprep.subr.mxu0 0.0
        %415 = vmatpush1.msra.mxu0 %v379
        %416 = vmatprep.subr.mxu0 0.0
        %417 = vmatpush1.msra.mxu0 %v378
        %418 = vmatprep.subr.mxu0 0.0
        %419 = vmatpush1.msra.mxu0 %v377
        %420 = vmatprep.subr.mxu0 0.0
        %421 = vmatpush1.msra.mxu0 %v376
        %422 = vmatprep.subr.mxu0 0.0
        %423 = vmatpush1.msra.mxu0 %v375
        %424 = vmatprep.subr.mxu0 0.0
        %425 = vmatpush1.msra.mxu0 %v374
        %426 = vmatprep.subr.mxu0 0.0
        %427 = vmatpush1.msra.mxu0 %v373
        %428 = vmatprep.subr.mxu0 0.0
        %429 = vmatpush2.msra.mxu0 0.0
        %430 = vmatprep.subr.mxu0 0.0
        %431 = vmatpush2.msra.mxu0 0.0
        %432 = vmatprep.subr.mxu0 0.0
        %433 = vmatpush2.msra.mxu0 0.0
        %434 = vmatprep.subr.mxu0 0.0
        %435 = vmatpush2.msra.mxu0 0.0
        %436 = vmatprep.subr.mxu0 0.0
        %437 = vmatpush2.msra.mxu0 0.0
        %438 = vmatprep.subr.mxu0 0.0
        %439 = vmatpush2.msra.mxu0 0.0
        %440 = vmatprep.subr.mxu0 0.0
        %441 = vmatpush2.msra.mxu0 0.0
        %442 = vmatprep.subr.mxu0 0.0
        %443 = vmatpush2.msra.mxu0 0.0
        %444 = vmatprep.subr.mxu0 0.0
        %445 = vmatpush2.msra.mxu0 0.0
        %446 = vmatprep.subr.mxu0 0.0
        %447 = vmatpush2.msra.mxu0 0.0
        %448 = vmatprep.subr.mxu0 0.0
        %449 = vmatpush2.msra.mxu0 0.0
        %450 = vmatprep.subr.mxu0 0.0
        %451 = vmatpush2.msra.mxu0 0.0
        %452 = vmatprep.subr.mxu0 0.0
        %453 = vmatpush2.msra.mxu0 0.0
        %454 = vmatprep.subr.mxu0 0.0
        %455 = vmatpush2.msra.mxu0 0.0
        %456 = vmatprep.subr.mxu0 0.0
        %457 = vmatpush2.msra.mxu0 0.0
        %458 = vmatprep.subr.mxu0 0.0
        %459 = vmatpush2.msra.mxu0 0.0
        %460 = vmatprep.mubr.f32.mxu0 0.0
        %461 = vmatmul.mubr.f32.gmra.mxu0 %v341
        %v462 = vpop.f32.mrf.mxu0
        %v463 = vadd.f32 %v394, %v462
        %v464 = vpop.f32.mrf.mxu0
        %465 = vmatprep.mubr.f32.mxu0 0.0
        %466 = vmatmul.mubr.f32.gmra.mxu0 %v342
        %v467 = vpop.f32.mrf.mxu0
        %v468 = vadd.f32 %v394, %v467
        %v469 = vpop.f32.mrf.mxu0
        %470 = vmatprep.mubr.f32.mxu0 0.0
        %471 = vmatmul.mubr.f32.gmra.mxu0 %v343
        %v472 = vpop.f32.mrf.mxu0
        %v473 = vadd.f32 %v394, %v472
        %v474 = vpop.f32.mrf.mxu0
        %475 = vmatprep.mubr.f32.mxu0 0.0
        %476 = vmatmul.mubr.f32.gmra.mxu0 %v344
        %v477 = vpop.f32.mrf.mxu0
        %v478 = vadd.f32 %v394, %v477
        %v479 = vpop.f32.mrf.mxu0
        %480 = vmatprep.mubr.f32.mxu0 0.0
        %481 = vmatmul.mubr.f32.gmra.mxu0 %v345
        %v482 = vpop.f32.mrf.mxu0
        %v483 = vadd.f32 %v394, %v482
        %v484 = vpop.f32.mrf.mxu0
        %485 = vmatprep.mubr.f32.mxu0 0.0
        %486 = vmatmul.mubr.f32.gmra.mxu0 %v346
        %v487 = vpop.f32.mrf.mxu0
        %v488 = vadd.f32 %v394, %v487
        %v489 = vpop.f32.mrf.mxu0
        %490 = vmatprep.mubr.f32.mxu0 0.0
        %491 = vmatmul.mubr.f32.gmra.mxu0 %v347
        %v492 = vpop.f32.mrf.mxu0
        %v493 = vadd.f32 %v394, %v492
        %v494 = vpop.f32.mrf.mxu0
        %495 = vmatprep.mubr.f32.mxu0 0.0
        %496 = vmatmul.mubr.f32.gmra.mxu0 %v348
        %v497 = vpop.f32.mrf.mxu0
        %v498 = vadd.f32 %v394, %v497
        %v499 = vpop.f32.mrf.mxu0
        %500 = vmatprep.mubr.f32.mxu0 0.0
        %501 = vmatmul.mubr.f32.gmra.mxu0 %v349
        %v502 = vpop.f32.mrf.mxu0
        %v503 = vadd.f32 %v394, %v502
        %v504 = vpop.f32.mrf.mxu0
        %505 = vmatprep.mubr.f32.mxu0 0.0
        %506 = vmatmul.mubr.f32.gmra.mxu0 %v350
        %v507 = vpop.f32.mrf.mxu0
        %v508 = vadd.f32 %v394, %v507
        %v509 = vpop.f32.mrf.mxu0
        %510 = vmatprep.mubr.f32.mxu0 0.0
        %511 = vmatmul.mubr.f32.gmra.mxu0 %v351
        %v512 = vpop.f32.mrf.mxu0
        %v513 = vadd.f32 %v394, %v512
        %v514 = vpop.f32.mrf.mxu0
        %515 = vmatprep.mubr.f32.mxu0 0.0
        %516 = vmatmul.mubr.f32.gmra.mxu0 %v352
        %v517 = vpop.f32.mrf.mxu0
        %v518 = vadd.f32 %v394, %v517
        %v519 = vpop.f32.mrf.mxu0
        %520 = vmatprep.mubr.f32.mxu0 0.0
        %521 = vmatmul.mubr.f32.gmra.mxu0 %v353
        %v522 = vpop.f32.mrf.mxu0
        %v523 = vadd.f32 %v394, %v522
        %v524 = vpop.f32.mrf.mxu0
        %525 = vmatprep.mubr.f32.mxu0 0.0
        %526 = vmatmul.mubr.f32.gmra.mxu0 %v354
        %v527 = vpop.f32.mrf.mxu0
        %v528 = vadd.f32 %v394, %v527
        %v529 = vpop.f32.mrf.mxu0
        %530 = vmatprep.mubr.f32.mxu0 0.0
        %531 = vmatmul.mubr.f32.gmra.mxu0 %v355
        %v532 = vpop.f32.mrf.mxu0
        %v533 = vadd.f32 %v394, %v532
        %v534 = vpop.f32.mrf.mxu0
        %535 = vmatprep.mubr.f32.mxu0 0.0
        %536 = vmatmul.mubr.f32.gmra.mxu0 %v356
        %v537 = vpop.f32.mrf.mxu0
        %v538 = vadd.f32 %v394, %v537
        %v539 = vpop.f32.mrf.mxu0
        %540 = vmatprep.mubr.f32.mxu0 0.0
        %541 = vmatmul.mubr.f32.gmra.mxu0 %v357
        %v542 = vpop.f32.mrf.mxu0
        %v543 = vadd.f32 %v394, %v542
        %v544 = vpop.f32.mrf.mxu0
        %545 = vmatprep.mubr.f32.mxu0 0.0
        %546 = vmatmul.mubr.f32.gmra.mxu0 %v358
        %v547 = vpop.f32.mrf.mxu0
        %v548 = vadd.f32 %v394, %v547
        %v549 = vpop.f32.mrf.mxu0
        %550 = vmatprep.mubr.f32.mxu0 0.0
        %551 = vmatmul.mubr.f32.gmra.mxu0 %v359
        %v552 = vpop.f32.mrf.mxu0
        %v553 = vadd.f32 %v394, %v552
        %v554 = vpop.f32.mrf.mxu0
        %555 = vmatprep.mubr.f32.mxu0 0.0
        %556 = vmatmul.mubr.f32.gmra.mxu0 %v360
        %v557 = vpop.f32.mrf.mxu0
        %v558 = vadd.f32 %v394, %v557
        %v559 = vpop.f32.mrf.mxu0
        %560 = vmatprep.mubr.f32.mxu0 0.0
        %561 = vmatmul.mubr.f32.gmra.mxu0 %v361
        %v562 = vpop.f32.mrf.mxu0
        %v563 = vadd.f32 %v394, %v562
        %v564 = vpop.f32.mrf.mxu0
        %565 = vmatprep.mubr.f32.mxu0 0.0
        %566 = vmatmul.mubr.f32.gmra.mxu0 %v362
        %v567 = vpop.f32.mrf.mxu0
        %v568 = vadd.f32 %v394, %v567
        %v569 = vpop.f32.mrf.mxu0
        %570 = vmatprep.mubr.f32.mxu0 0.0
        %571 = vmatmul.mubr.f32.gmra.mxu0 %v363
        %v572 = vpop.f32.mrf.mxu0
        %v573 = vadd.f32 %v394, %v572
        %v574 = vpop.f32.mrf.mxu0
        %575 = vmatprep.mubr.f32.mxu0 0.0
        %576 = vmatmul.mubr.f32.gmra.mxu0 %v364
        %v577 = vpop.f32.mrf.mxu0
        %v578 = vadd.f32 %v394, %v577
        %v579 = vpop.f32.mrf.mxu0
        %580 = vmatprep.mubr.f32.mxu0 0.0
        %581 = vmatmul.mubr.f32.gmra.mxu0 %v365
        %v582 = vpop.f32.mrf.mxu0
        %v583 = vadd.f32 %v394, %v582
        %v584 = vpop.f32.mrf.mxu0
        %585 = vmatprep.mubr.f32.mxu0 0.0
        %586 = vmatmul.mubr.f32.gmra.mxu0 %v366
        %v587 = vpop.f32.mrf.mxu0
        %v588 = vadd.f32 %v394, %v587
        %v589 = vpop.f32.mrf.mxu0
        %590 = vmatprep.mubr.f32.mxu0 0.0
        %591 = vmatmul.mubr.f32.gmra.mxu0 %v367
        %v592 = vpop.f32.mrf.mxu0
        %v593 = vadd.f32 %v394, %v592
        %v594 = vpop.f32.mrf.mxu0
        %595 = vmatprep.mubr.f32.mxu0 0.0
        %596 = vmatmul.mubr.f32.gmra.mxu0 %v368
        %v597 = vpop.f32.mrf.mxu0
        %v598 = vadd.f32 %v394, %v597
        %v599 = vpop.f32.mrf.mxu0
        %600 = vmatprep.mubr.f32.mxu0 0.0
        %601 = vmatmul.mubr.f32.gmra.mxu0 %v369
        %v602 = vpop.f32.mrf.mxu0
        %v603 = vadd.f32 %v394, %v602
        %v604 = vpop.f32.mrf.mxu0
        %605 = vmatprep.mubr.f32.mxu0 0.0
        %606 = vmatmul.mubr.f32.gmra.mxu0 %v370
        %v607 = vpop.f32.mrf.mxu0
        %v608 = vadd.f32 %v394, %v607
        %v609 = vpop.f32.mrf.mxu0
        %610 = vmatprep.mubr.f32.mxu0 0.0
        %611 = vmatmul.mubr.f32.gmra.mxu0 %v371
        %v612 = vpop.f32.mrf.mxu0
        %v613 = vadd.f32 %v394, %v612
        %v614 = vpop.f32.mrf.mxu0
        %615 = vmatprep.mubr.f32.mxu0 0.0
        %616 = vmatmul.mubr.f32.gmra.mxu0 %v372
        %v617 = vpop.f32.mrf.mxu0
        %v618 = vadd.f32 %v394, %v617
        %v619 = vpop.f32.mrf.mxu0
        %620 = vdwg.mxu0
        %v621 = vmax.f32 %v463, 0.0
        %v622 = vmax.f32 %v468, 0.0
        %v623 = vmax.f32 %v473, 0.0
        %v624 = vmax.f32 %v478, 0.0
        %v625 = vmax.f32 %v483, 0.0
        %v626 = vmax.f32 %v488, 0.0
        %v627 = vmax.f32 %v493, 0.0
        %v628 = vmax.f32 %v498, 0.0
        %v629 = vmax.f32 %v503, 0.0
        %v630 = vmax.f32 %v508, 0.0
        %v631 = vmax.f32 %v513, 0.0
        %v632 = vmax.f32 %v518, 0.0
        %v633 = vmax.f32 %v523, 0.0
        %v634 = vmax.f32 %v528, 0.0
        %v635 = vmax.f32 %v533, 0.0
        %v636 = vmax.f32 %v538, 0.0
        %v637 = vmax.f32 %v543, 0.0
        %v638 = vmax.f32 %v548, 0.0
        %v639 = vmax.f32 %v553, 0.0
        %v640 = vmax.f32 %v558, 0.0
        %v641 = vmax.f32 %v563, 0.0
        %v642 = vmax.f32 %v568, 0.0
        %v643 = vmax.f32 %v573, 0.0
        %v644 = vmax.f32 %v578, 0.0
        %v645 = vmax.f32 %v583, 0.0
        %v646 = vmax.f32 %v588, 0.0
        %v647 = vmax.f32 %v593, 0.0
        %v648 = vmax.f32 %v598, 0.0
        %v649 = vmax.f32 %v603, 0.0
        %v650 = vmax.f32 %v608, 0.0
        %v651 = vmax.f32 %v613, 0.0
        %v652 = vmax.f32 %v618, 0.0
        %vm686 = vcmask 1040384
        %v687 = vrot.slane 0.0, 7
        %v688 = vsel %vm686, %v687, %v687
        %v689 = vrot.slane %v621, 7
        %v690 = vrot.slane %v622, 7
        %v691 = vsel %vm686, %v689, %v690
        %v692 = vrot.slane %v623, 7
        %v693 = vrot.slane %v624, 7
        %v694 = vsel %vm686, %v692, %v693
        %v695 = vrot.slane %v625, 7
        %v696 = vrot.slane %v626, 7
        %v697 = vsel %vm686, %v695, %v696
        %v698 = vrot.slane %v627, 7
        %v699 = vrot.slane %v628, 7
        %v700 = vsel %vm686, %v698, %v699
        %v701 = vrot.slane %v629, 7
        %v702 = vrot.slane %v630, 7
        %v703 = vsel %vm686, %v701, %v702
        %v704 = vrot.slane %v631, 7
        %v705 = vrot.slane %v632, 7
        %v706 = vsel %vm686, %v704, %v705
        %v707 = vrot.slane %v633, 7
        %v708 = vrot.slane %v634, 7
        %v709 = vsel %vm686, %v707, %v708
        %v710 = vrot.slane %v635, 7
        %v711 = vrot.slane %v636, 7
        %v712 = vsel %vm686, %v710, %v711
        %v713 = vrot.slane %v637, 7
        %v714 = vrot.slane %v638, 7
        %v715 = vsel %vm686, %v713, %v714
        %v716 = vrot.slane %v639, 7
        %v717 = vrot.slane %v640, 7
        %v718 = vsel %vm686, %v716, %v717
        %v719 = vrot.slane %v641, 7
        %v720 = vrot.slane %v642, 7
        %v721 = vsel %vm686, %v719, %v720
        %v722 = vrot.slane %v643, 7
        %v723 = vrot.slane %v644, 7
        %v724 = vsel %vm686, %v722, %v723
        %v725 = vrot.slane %v645, 7
        %v726 = vrot.slane %v646, 7
        %v727 = vsel %vm686, %v725, %v726
        %v728 = vrot.slane %v647, 7
        %v729 = vrot.slane %v648, 7
        %v730 = vsel %vm686, %v728, %v729
        %v731 = vrot.slane %v649, 7
        %v732 = vrot.slane %v650, 7
        %v733 = vsel %vm686, %v731, %v732
        %v734 = vrot.slane %v651, 7
        %v735 = vrot.slane %v652, 7
        %v736 = vsel %vm686, %v734, %v735
        %v787 = vsel %vm686, 0.0, %v687
        %v788 = vsel %vm686, 0.0, %v689
        %v789 = vsel %vm686, 0.0, %v692
        %v790 = vsel %vm686, 0.0, %v695
        %v791 = vsel %vm686, 0.0, %v698
        %v792 = vsel %vm686, 0.0, %v701
        %v793 = vsel %vm686, 0.0, %v704
        %v794 = vsel %vm686, 0.0, %v707
        %v795 = vsel %vm686, 0.0, %v710
        %v796 = vsel %vm686, 0.0, %v713
        %v797 = vsel %vm686, 0.0, %v716
        %v798 = vsel %vm686, 0.0, %v719
        %v799 = vsel %vm686, 0.0, %v722
        %v800 = vsel %vm686, 0.0, %v725
        %v801 = vsel %vm686, 0.0, %v728
        %v802 = vsel %vm686, 0.0, %v731
        %v803 = vsel %vm686, 0.0, %v734
        %v804 = vsel %vm686, %v687, 0.0
        %v805 = vsel %vm686, %v690, 0.0
        %v806 = vsel %vm686, %v693, 0.0
        %v807 = vsel %vm686, %v696, 0.0
        %v808 = vsel %vm686, %v699, 0.0
        %v809 = vsel %vm686, %v702, 0.0
        %v810 = vsel %vm686, %v705, 0.0
        %v811 = vsel %vm686, %v708, 0.0
        %v812 = vsel %vm686, %v711, 0.0
        %v813 = vsel %vm686, %v714, 0.0
        %v814 = vsel %vm686, %v717, 0.0
        %v815 = vsel %vm686, %v720, 0.0
        %v816 = vsel %vm686, %v723, 0.0
        %v817 = vsel %vm686, %v726, 0.0
        %v818 = vsel %vm686, %v729, 0.0
        %v819 = vsel %vm686, %v732, 0.0
        %v820 = vsel %vm686, %v735, 0.0
        %v821 = vld [vmem:[#allocation7] sm:$0xff]
        %v822 = vld [vmem:[#allocation7 + $0x8] sm:$0xff]
        %v823 = vld [vmem:[#allocation7 + $0x10] sm:$0xff]
        %v824 = vld [vmem:[#allocation7 + $0x18] sm:$0xff]
        %v825 = vld [vmem:[#allocation7 + $0x20] sm:$0xff]
        %v826 = vld [vmem:[#allocation7 + $0x28] sm:$0xff]
        %v827 = vld [vmem:[#allocation7 + $0x30] sm:$0xff]
        %v828 = vld [vmem:[#allocation7 + $0x38] sm:$0xff]
        %v829 = vld [vmem:[#allocation7 + $0x40] sm:$0xff]
        %v830 = vld [vmem:[#allocation7 + $0x48] sm:$0xff]
        %v831 = vld [vmem:[#allocation7 + $0x50] sm:$0xff]
        %v832 = vld [vmem:[#allocation7 + $0x58] sm:$0xff]
        %v833 = vld [vmem:[#allocation7 + $0x60] sm:$0xff]
        %v834 = vld [vmem:[#allocation7 + $0x68] sm:$0xff]
        %v835 = vld [vmem:[#allocation7 + $0x70] sm:$0xff]
        %v836 = vld [vmem:[#allocation7 + $0x78] sm:$0xff]
        %vm869 = vcmask 1046528
        %v870 = vrot.slane %v787, 1
        %v871 = vrot.slane %v688, 1
        %v872 = vsel %vm869, %v870, %v871
        %v873 = vrot.slane %v804, 1
        %v874 = vsel %vm869, %v871, %v873
        %v875 = vrot.slane %v788, 1
        %v876 = vrot.slane %v691, 1
        %v877 = vsel %vm869, %v875, %v876
        %v878 = vrot.slane %v805, 1
        %v879 = vsel %vm869, %v876, %v878
        %v880 = vrot.slane %v789, 1
        %v881 = vrot.slane %v694, 1
        %v882 = vsel %vm869, %v880, %v881
        %v883 = vrot.slane %v806, 1
        %v884 = vsel %vm869, %v881, %v883
        %v885 = vrot.slane %v790, 1
        %v886 = vrot.slane %v697, 1
        %v887 = vsel %vm869, %v885, %v886
        %v888 = vrot.slane %v807, 1
        %v889 = vsel %vm869, %v886, %v888
        %v890 = vrot.slane %v791, 1
        %v891 = vrot.slane %v700, 1
        %v892 = vsel %vm869, %v890, %v891
        %v893 = vrot.slane %v808, 1
        %v894 = vsel %vm869, %v891, %v893
        %v895 = vrot.slane %v792, 1
        %v896 = vrot.slane %v703, 1
        %v897 = vsel %vm869, %v895, %v896
        %v898 = vrot.slane %v809, 1
        %v899 = vsel %vm869, %v896, %v898
        %v900 = vrot.slane %v793, 1
        %v901 = vrot.slane %v706, 1
        %v902 = vsel %vm869, %v900, %v901
        %v903 = vrot.slane %v810, 1
        %v904 = vsel %vm869, %v901, %v903
        %v905 = vrot.slane %v794, 1
        %v906 = vrot.slane %v709, 1
        %v907 = vsel %vm869, %v905, %v906
        %v908 = vrot.slane %v811, 1
        %v909 = vsel %vm869, %v906, %v908
        %v910 = vrot.slane %v795, 1
        %v911 = vrot.slane %v712, 1
        %v912 = vsel %vm869, %v910, %v911
        %v913 = vrot.slane %v812, 1
        %v914 = vsel %vm869, %v911, %v913
        %v915 = vrot.slane %v796, 1
        %v916 = vrot.slane %v715, 1
        %v917 = vsel %vm869, %v915, %v916
        %v918 = vrot.slane %v813, 1
        %v919 = vsel %vm869, %v916, %v918
        %v920 = vrot.slane %v797, 1
        %v921 = vrot.slane %v718, 1
        %v922 = vsel %vm869, %v920, %v921
        %v923 = vrot.slane %v814, 1
        %v924 = vsel %vm869, %v921, %v923
        %v925 = vrot.slane %v798, 1
        %v926 = vrot.slane %v721, 1
        %v927 = vsel %vm869, %v925, %v926
        %v928 = vrot.slane %v815, 1
        %v929 = vsel %vm869, %v926, %v928
        %v930 = vrot.slane %v799, 1
        %v931 = vrot.slane %v724, 1
        %v932 = vsel %vm869, %v930, %v931
        %v933 = vrot.slane %v816, 1
        %v934 = vsel %vm869, %v931, %v933
        %v935 = vrot.slane %v800, 1
        %v936 = vrot.slane %v727, 1
        %v937 = vsel %vm869, %v935, %v936
        %v938 = vrot.slane %v817, 1
        %v939 = vsel %vm869, %v936, %v938
        %v940 = vrot.slane %v801, 1
        %v941 = vrot.slane %v730, 1
        %v942 = vsel %vm869, %v940, %v941
        %v943 = vrot.slane %v818, 1
        %v944 = vsel %vm869, %v941, %v943
        %v945 = vrot.slane %v802, 1
        %v946 = vrot.slane %v733, 1
        %v947 = vsel %vm869, %v945, %v946
        %v948 = vrot.slane %v819, 1
        %v949 = vsel %vm869, %v946, %v948
        %s982 = scalar_lea.vmem [#allocation7], 128
        %v983 = vld [vmem:[%s982] sm:$0xff]
        %v984 = vld [vmem:[%s982 + $0x8] sm:$0xff]
        %v985 = vld [vmem:[%s982 + $0x10] sm:$0xff]
        %v986 = vld [vmem:[%s982 + $0x18] sm:$0xff]
        %v987 = vld [vmem:[%s982 + $0x20] sm:$0xff]
        %v988 = vld [vmem:[%s982 + $0x28] sm:$0xff]
        %v989 = vld [vmem:[%s982 + $0x30] sm:$0xff]
        %v990 = vld [vmem:[%s982 + $0x38] sm:$0xff]
        %v991 = vld [vmem:[%s982 + $0x40] sm:$0xff]
        %v992 = vld [vmem:[%s982 + $0x48] sm:$0xff]
        %v993 = vld [vmem:[%s982 + $0x50] sm:$0xff]
        %v994 = vld [vmem:[%s982 + $0x58] sm:$0xff]
        %v995 = vld [vmem:[%s982 + $0x60] sm:$0xff]
        %v996 = vld [vmem:[%s982 + $0x68] sm:$0xff]
        %v997 = vld [vmem:[%s982 + $0x70] sm:$0xff]
        %v998 = vld [vmem:[%s982 + $0x78] sm:$0xff]
        %999 = vmatprep.subr.mxu0 0.0
        %1000 = vmatpush1.msra.mxu0 %v998
        %1001 = vmatprep.subr.mxu0 0.0
        %1002 = vmatpush1.msra.mxu0 %v997
        %1003 = vmatprep.subr.mxu0 0.0
        %1004 = vmatpush1.msra.mxu0 %v996
        %1005 = vmatprep.subr.mxu0 0.0
        %1006 = vmatpush1.msra.mxu0 %v995
        %1007 = vmatprep.subr.mxu0 0.0
        %1008 = vmatpush1.msra.mxu0 %v994
        %1009 = vmatprep.subr.mxu0 0.0
        %1010 = vmatpush1.msra.mxu0 %v993
        %1011 = vmatprep.subr.mxu0 0.0
        %1012 = vmatpush1.msra.mxu0 %v992
        %1013 = vmatprep.subr.mxu0 0.0
        %1014 = vmatpush1.msra.mxu0 %v991
        %1015 = vmatprep.subr.mxu0 0.0
        %1016 = vmatpush1.msra.mxu0 %v990
        %1017 = vmatprep.subr.mxu0 0.0
        %1018 = vmatpush1.msra.mxu0 %v989
        %1019 = vmatprep.subr.mxu0 0.0
        %1020 = vmatpush1.msra.mxu0 %v988
        %1021 = vmatprep.subr.mxu0 0.0
        %1022 = vmatpush1.msra.mxu0 %v987
        %1023 = vmatprep.subr.mxu0 0.0
        %1024 = vmatpush1.msra.mxu0 %v986
        %1025 = vmatprep.subr.mxu0 0.0
        %1026 = vmatpush1.msra.mxu0 %v985
        %1027 = vmatprep.subr.mxu0 0.0
        %1028 = vmatpush1.msra.mxu0 %v984
        %1029 = vmatprep.subr.mxu0 0.0
        %1030 = vmatpush1.msra.mxu0 %v983
        %1031 = vmatprep.subr.mxu0 0.0
        %1032 = vmatpush2.msra.mxu0 0.0
        %1033 = vmatprep.subr.mxu0 0.0
        %1034 = vmatpush2.msra.mxu0 0.0
        %1035 = vmatprep.subr.mxu0 0.0
        %1036 = vmatpush2.msra.mxu0 0.0
        %1037 = vmatprep.subr.mxu0 0.0
        %1038 = vmatpush2.msra.mxu0 0.0
        %1039 = vmatprep.subr.mxu0 0.0
        %1040 = vmatpush2.msra.mxu0 0.0
        %1041 = vmatprep.subr.mxu0 0.0
        %1042 = vmatpush2.msra.mxu0 0.0
        %1043 = vmatprep.subr.mxu0 0.0
        %1044 = vmatpush2.msra.mxu0 0.0
        %1045 = vmatprep.subr.mxu0 0.0
        %1046 = vmatpush2.msra.mxu0 0.0
        %1047 = vmatprep.subr.mxu0 0.0
        %1048 = vmatpush2.msra.mxu0 0.0
        %1049 = vmatprep.subr.mxu0 0.0
        %1050 = vmatpush2.msra.mxu0 0.0
        %1051 = vmatprep.subr.mxu0 0.0
        %1052 = vmatpush2.msra.mxu0 0.0
        %1053 = vmatprep.subr.mxu0 0.0
        %1054 = vmatpush2.msra.mxu0 0.0
        %1055 = vmatprep.subr.mxu0 0.0
        %1056 = vmatpush2.msra.mxu0 0.0
        %1057 = vmatprep.subr.mxu0 0.0
        %1058 = vmatpush2.msra.mxu0 0.0
        %1059 = vmatprep.subr.mxu0 0.0
        %1060 = vmatpush2.msra.mxu0 0.0
        %1061 = vmatprep.subr.mxu0 0.0
        %1062 = vmatpush2.msra.mxu0 0.0
        %1063 = vmatprep.mubr.f32.mxu0 0.0
        %1064 = vmatmul.mubr.f32.gmra.mxu0 %v872
        %v1065 = vpop.f32.mrf.mxu0
        %v1066 = vadd.f32 0.0, %v1065
        %v1067 = vpop.f32.mrf.mxu0
        %1068 = vmatprep.mubr.f32.mxu0 0.0
        %1069 = vmatmul.mubr.f32.gmra.mxu0 %v874
        %v1070 = vpop.f32.mrf.mxu0
        %v1071 = vadd.f32 0.0, %v1070
        %v1072 = vpop.f32.mrf.mxu0
        %1073 = vmatprep.mubr.f32.mxu0 0.0
        %1074 = vmatmul.mubr.f32.gmra.mxu0 %v877
        %v1075 = vpop.f32.mrf.mxu0
        %v1076 = vadd.f32 0.0, %v1075
        %v1077 = vpop.f32.mrf.mxu0
        %1078 = vmatprep.mubr.f32.mxu0 0.0
        %1079 = vmatmul.mubr.f32.gmra.mxu0 %v879
        %v1080 = vpop.f32.mrf.mxu0
        %v1081 = vadd.f32 0.0, %v1080
        %v1082 = vpop.f32.mrf.mxu0
        %1083 = vmatprep.mubr.f32.mxu0 0.0
        %1084 = vmatmul.mubr.f32.gmra.mxu0 %v882
        %v1085 = vpop.f32.mrf.mxu0
        %v1086 = vadd.f32 0.0, %v1085
        %v1087 = vpop.f32.mrf.mxu0
        %1088 = vmatprep.mubr.f32.mxu0 0.0
        %1089 = vmatmul.mubr.f32.gmra.mxu0 %v884
        %v1090 = vpop.f32.mrf.mxu0
        %v1091 = vadd.f32 0.0, %v1090
        %v1092 = vpop.f32.mrf.mxu0
        %1093 = vmatprep.mubr.f32.mxu0 0.0
        %1094 = vmatmul.mubr.f32.gmra.mxu0 %v887
        %v1095 = vpop.f32.mrf.mxu0
        %v1096 = vadd.f32 0.0, %v1095
        %v1097 = vpop.f32.mrf.mxu0
        %1098 = vmatprep.mubr.f32.mxu0 0.0
        %1099 = vmatmul.mubr.f32.gmra.mxu0 %v889
        %v1100 = vpop.f32.mrf.mxu0
        %v1101 = vadd.f32 0.0, %v1100
        %v1102 = vpop.f32.mrf.mxu0
        %1103 = vmatprep.mubr.f32.mxu0 0.0
        %1104 = vmatmul.mubr.f32.gmra.mxu0 %v892
        %v1105 = vpop.f32.mrf.mxu0
        %v1106 = vadd.f32 0.0, %v1105
        %v1107 = vpop.f32.mrf.mxu0
        %1108 = vmatprep.mubr.f32.mxu0 0.0
        %1109 = vmatmul.mubr.f32.gmra.mxu0 %v894
        %v1110 = vpop.f32.mrf.mxu0
        %v1111 = vadd.f32 0.0, %v1110
        %v1112 = vpop.f32.mrf.mxu0
        %1113 = vmatprep.mubr.f32.mxu0 0.0
        %1114 = vmatmul.mubr.f32.gmra.mxu0 %v897
        %v1115 = vpop.f32.mrf.mxu0
        %v1116 = vadd.f32 0.0, %v1115
        %v1117 = vpop.f32.mrf.mxu0
        %1118 = vmatprep.mubr.f32.mxu0 0.0
        %1119 = vmatmul.mubr.f32.gmra.mxu0 %v899
        %v1120 = vpop.f32.mrf.mxu0
        %v1121 = vadd.f32 0.0, %v1120
        %v1122 = vpop.f32.mrf.mxu0
        %1123 = vmatprep.mubr.f32.mxu0 0.0
        %1124 = vmatmul.mubr.f32.gmra.mxu0 %v902
        %v1125 = vpop.f32.mrf.mxu0
        %v1126 = vadd.f32 0.0, %v1125
        %v1127 = vpop.f32.mrf.mxu0
        %1128 = vmatprep.mubr.f32.mxu0 0.0
        %1129 = vmatmul.mubr.f32.gmra.mxu0 %v904
        %v1130 = vpop.f32.mrf.mxu0
        %v1131 = vadd.f32 0.0, %v1130
        %v1132 = vpop.f32.mrf.mxu0
        %1133 = vmatprep.mubr.f32.mxu0 0.0
        %1134 = vmatmul.mubr.f32.gmra.mxu0 %v907
        %v1135 = vpop.f32.mrf.mxu0
        %v1136 = vadd.f32 0.0, %v1135
        %v1137 = vpop.f32.mrf.mxu0
        %1138 = vmatprep.mubr.f32.mxu0 0.0
        %1139 = vmatmul.mubr.f32.gmra.mxu0 %v909
        %v1140 = vpop.f32.mrf.mxu0
        %v1141 = vadd.f32 0.0, %v1140
        %v1142 = vpop.f32.mrf.mxu0
        %1143 = vmatprep.mubr.f32.mxu0 0.0
        %1144 = vmatmul.mubr.f32.gmra.mxu0 %v912
        %v1145 = vpop.f32.mrf.mxu0
        %v1146 = vadd.f32 0.0, %v1145
        %v1147 = vpop.f32.mrf.mxu0
        %1148 = vmatprep.mubr.f32.mxu0 0.0
        %1149 = vmatmul.mubr.f32.gmra.mxu0 %v914
        %v1150 = vpop.f32.mrf.mxu0
        %v1151 = vadd.f32 0.0, %v1150
        %v1152 = vpop.f32.mrf.mxu0
        %1153 = vmatprep.mubr.f32.mxu0 0.0
        %1154 = vmatmul.mubr.f32.gmra.mxu0 %v917
        %v1155 = vpop.f32.mrf.mxu0
        %v1156 = vadd.f32 0.0, %v1155
        %v1157 = vpop.f32.mrf.mxu0
        %1158 = vmatprep.mubr.f32.mxu0 0.0
        %1159 = vmatmul.mubr.f32.gmra.mxu0 %v919
        %v1160 = vpop.f32.mrf.mxu0
        %v1161 = vadd.f32 0.0, %v1160
        %v1162 = vpop.f32.mrf.mxu0
        %1163 = vmatprep.mubr.f32.mxu0 0.0
        %1164 = vmatmul.mubr.f32.gmra.mxu0 %v922
        %v1165 = vpop.f32.mrf.mxu0
        %v1166 = vadd.f32 0.0, %v1165
        %v1167 = vpop.f32.mrf.mxu0
        %1168 = vmatprep.mubr.f32.mxu0 0.0
        %1169 = vmatmul.mubr.f32.gmra.mxu0 %v924
        %v1170 = vpop.f32.mrf.mxu0
        %v1171 = vadd.f32 0.0, %v1170
        %v1172 = vpop.f32.mrf.mxu0
        %1173 = vmatprep.mubr.f32.mxu0 0.0
        %1174 = vmatmul.mubr.f32.gmra.mxu0 %v927
        %v1175 = vpop.f32.mrf.mxu0
        %v1176 = vadd.f32 0.0, %v1175
        %v1177 = vpop.f32.mrf.mxu0
        %1178 = vmatprep.mubr.f32.mxu0 0.0
        %1179 = vmatmul.mubr.f32.gmra.mxu0 %v929
        %v1180 = vpop.f32.mrf.mxu0
        %v1181 = vadd.f32 0.0, %v1180
        %v1182 = vpop.f32.mrf.mxu0
        %1183 = vmatprep.mubr.f32.mxu0 0.0
        %1184 = vmatmul.mubr.f32.gmra.mxu0 %v932
        %v1185 = vpop.f32.mrf.mxu0
        %v1186 = vadd.f32 0.0, %v1185
        %v1187 = vpop.f32.mrf.mxu0
        %1188 = vmatprep.mubr.f32.mxu0 0.0
        %1189 = vmatmul.mubr.f32.gmra.mxu0 %v934
        %v1190 = vpop.f32.mrf.mxu0
        %v1191 = vadd.f32 0.0, %v1190
        %v1192 = vpop.f32.mrf.mxu0
        %1193 = vmatprep.mubr.f32.mxu0 0.0
        %1194 = vmatmul.mubr.f32.gmra.mxu0 %v937
        %v1195 = vpop.f32.mrf.mxu0
        %v1196 = vadd.f32 0.0, %v1195
        %v1197 = vpop.f32.mrf.mxu0
        %1198 = vmatprep.mubr.f32.mxu0 0.0
        %1199 = vmatmul.mubr.f32.gmra.mxu0 %v939
        %v1200 = vpop.f32.mrf.mxu0
        %v1201 = vadd.f32 0.0, %v1200
        %v1202 = vpop.f32.mrf.mxu0
        %1203 = vmatprep.mubr.f32.mxu0 0.0
        %1204 = vmatmul.mubr.f32.gmra.mxu0 %v942
        %v1205 = vpop.f32.mrf.mxu0
        %v1206 = vadd.f32 0.0, %v1205
        %v1207 = vpop.f32.mrf.mxu0
        %1208 = vmatprep.mubr.f32.mxu0 0.0
        %1209 = vmatmul.mubr.f32.gmra.mxu0 %v944
        %v1210 = vpop.f32.mrf.mxu0
        %v1211 = vadd.f32 0.0, %v1210
        %v1212 = vpop.f32.mrf.mxu0
        %1213 = vmatprep.mubr.f32.mxu0 0.0
        %1214 = vmatmul.mubr.f32.gmra.mxu0 %v947
        %v1215 = vpop.f32.mrf.mxu0
        %v1216 = vadd.f32 0.0, %v1215
        %v1217 = vpop.f32.mrf.mxu0
        %1218 = vmatprep.mubr.f32.mxu0 0.0
        %1219 = vmatmul.mubr.f32.gmra.mxu0 %v949
        %v1220 = vpop.f32.mrf.mxu0
        %v1221 = vadd.f32 0.0, %v1220
        %v1222 = vpop.f32.mrf.mxu0
        %1223 = vdwg.mxu0
        %1224 = vmatprep.subr.mxu0 0.0
        %1225 = vmatpush1.msra.mxu0 %v836
        %1226 = vmatprep.subr.mxu0 0.0
        %1227 = vmatpush1.msra.mxu0 %v835
        %1228 = vmatprep.subr.mxu0 0.0
        %1229 = vmatpush1.msra.mxu0 %v834
        %1230 = vmatprep.subr.mxu0 0.0
        %1231 = vmatpush1.msra.mxu0 %v833
        %1232 = vmatprep.subr.mxu0 0.0
        %1233 = vmatpush1.msra.mxu0 %v832
        %1234 = vmatprep.subr.mxu0 0.0
        %1235 = vmatpush1.msra.mxu0 %v831
        %1236 = vmatprep.subr.mxu0 0.0
        %1237 = vmatpush1.msra.mxu0 %v830
        %1238 = vmatprep.subr.mxu0 0.0
        %1239 = vmatpush1.msra.mxu0 %v829
        %1240 = vmatprep.subr.mxu0 0.0
        %1241 = vmatpush1.msra.mxu0 %v828
        %1242 = vmatprep.subr.mxu0 0.0
        %1243 = vmatpush1.msra.mxu0 %v827
        %1244 = vmatprep.subr.mxu0 0.0
        %1245 = vmatpush1.msra.mxu0 %v826
        %1246 = vmatprep.subr.mxu0 0.0
        %1247 = vmatpush1.msra.mxu0 %v825
        %1248 = vmatprep.subr.mxu0 0.0
        %1249 = vmatpush1.msra.mxu0 %v824
        %1250 = vmatprep.subr.mxu0 0.0
        %1251 = vmatpush1.msra.mxu0 %v823
        %1252 = vmatprep.subr.mxu0 0.0
        %1253 = vmatpush1.msra.mxu0 %v822
        %1254 = vmatprep.subr.mxu0 0.0
        %1255 = vmatpush1.msra.mxu0 %v821
        %1256 = vmatprep.subr.mxu0 0.0
        %1257 = vmatpush2.msra.mxu0 0.0
        %1258 = vmatprep.subr.mxu0 0.0
        %1259 = vmatpush2.msra.mxu0 0.0
        %1260 = vmatprep.subr.mxu0 0.0
        %1261 = vmatpush2.msra.mxu0 0.0
        %1262 = vmatprep.subr.mxu0 0.0
        %1263 = vmatpush2.msra.mxu0 0.0
        %1264 = vmatprep.subr.mxu0 0.0
        %1265 = vmatpush2.msra.mxu0 0.0
        %1266 = vmatprep.subr.mxu0 0.0
        %1267 = vmatpush2.msra.mxu0 0.0
        %1268 = vmatprep.subr.mxu0 0.0
        %1269 = vmatpush2.msra.mxu0 0.0
        %1270 = vmatprep.subr.mxu0 0.0
        %1271 = vmatpush2.msra.mxu0 0.0
        %1272 = vmatprep.subr.mxu0 0.0
        %1273 = vmatpush2.msra.mxu0 0.0
        %1274 = vmatprep.subr.mxu0 0.0
        %1275 = vmatpush2.msra.mxu0 0.0
        %1276 = vmatprep.subr.mxu0 0.0
        %1277 = vmatpush2.msra.mxu0 0.0
        %1278 = vmatprep.subr.mxu0 0.0
        %1279 = vmatpush2.msra.mxu0 0.0
        %1280 = vmatprep.subr.mxu0 0.0
        %1281 = vmatpush2.msra.mxu0 0.0
        %1282 = vmatprep.subr.mxu0 0.0
        %1283 = vmatpush2.msra.mxu0 0.0
        %1284 = vmatprep.subr.mxu0 0.0
        %1285 = vmatpush2.msra.mxu0 0.0
        %1286 = vmatprep.subr.mxu0 0.0
        %1287 = vmatpush2.msra.mxu0 0.0
        %1288 = vmatprep.mubr.f32.mxu0 0.0
        %1289 = vmatmul.mubr.f32.gmra.mxu0 %v787
        %v1290 = vpop.f32.mrf.mxu0
        %v1291 = vadd.f32 %v1066, %v1290
        %v1292 = vpop.f32.mrf.mxu0
        %1293 = vmatprep.mubr.f32.mxu0 0.0
        %1294 = vmatmul.mubr.f32.gmra.mxu0 %v688
        %v1295 = vpop.f32.mrf.mxu0
        %v1296 = vadd.f32 %v1071, %v1295
        %v1297 = vpop.f32.mrf.mxu0
        %1298 = vmatprep.mubr.f32.mxu0 0.0
        %1299 = vmatmul.mubr.f32.gmra.mxu0 %v788
        %v1300 = vpop.f32.mrf.mxu0
        %v1301 = vadd.f32 %v1076, %v1300
        %v1302 = vpop.f32.mrf.mxu0
        %1303 = vmatprep.mubr.f32.mxu0 0.0
        %1304 = vmatmul.mubr.f32.gmra.mxu0 %v691
        %v1305 = vpop.f32.mrf.mxu0
        %v1306 = vadd.f32 %v1081, %v1305
        %v1307 = vpop.f32.mrf.mxu0
        %1308 = vmatprep.mubr.f32.mxu0 0.0
        %1309 = vmatmul.mubr.f32.gmra.mxu0 %v789
        %v1310 = vpop.f32.mrf.mxu0
        %v1311 = vadd.f32 %v1086, %v1310
        %v1312 = vpop.f32.mrf.mxu0
        %1313 = vmatprep.mubr.f32.mxu0 0.0
        %1314 = vmatmul.mubr.f32.gmra.mxu0 %v694
        %v1315 = vpop.f32.mrf.mxu0
        %v1316 = vadd.f32 %v1091, %v1315
        %v1317 = vpop.f32.mrf.mxu0
        %1318 = vmatprep.mubr.f32.mxu0 0.0
        %1319 = vmatmul.mubr.f32.gmra.mxu0 %v790
        %v1320 = vpop.f32.mrf.mxu0
        %v1321 = vadd.f32 %v1096, %v1320
        %v1322 = vpop.f32.mrf.mxu0
        %1323 = vmatprep.mubr.f32.mxu0 0.0
        %1324 = vmatmul.mubr.f32.gmra.mxu0 %v697
        %v1325 = vpop.f32.mrf.mxu0
        %v1326 = vadd.f32 %v1101, %v1325
        %v1327 = vpop.f32.mrf.mxu0
        %1328 = vmatprep.mubr.f32.mxu0 0.0
        %1329 = vmatmul.mubr.f32.gmra.mxu0 %v791
        %v1330 = vpop.f32.mrf.mxu0
        %v1331 = vadd.f32 %v1106, %v1330
        %v1332 = vpop.f32.mrf.mxu0
        %1333 = vmatprep.mubr.f32.mxu0 0.0
        %1334 = vmatmul.mubr.f32.gmra.mxu0 %v700
        %v1335 = vpop.f32.mrf.mxu0
        %v1336 = vadd.f32 %v1111, %v1335
        %v1337 = vpop.f32.mrf.mxu0
        %1338 = vmatprep.mubr.f32.mxu0 0.0
        %1339 = vmatmul.mubr.f32.gmra.mxu0 %v792
        %v1340 = vpop.f32.mrf.mxu0
        %v1341 = vadd.f32 %v1116, %v1340
        %v1342 = vpop.f32.mrf.mxu0
        %1343 = vmatprep.mubr.f32.mxu0 0.0
        %1344 = vmatmul.mubr.f32.gmra.mxu0 %v703
        %v1345 = vpop.f32.mrf.mxu0
        %v1346 = vadd.f32 %v1121, %v1345
        %v1347 = vpop.f32.mrf.mxu0
        %1348 = vmatprep.mubr.f32.mxu0 0.0
        %1349 = vmatmul.mubr.f32.gmra.mxu0 %v793
        %v1350 = vpop.f32.mrf.mxu0
        %v1351 = vadd.f32 %v1126, %v1350
        %v1352 = vpop.f32.mrf.mxu0
        %1353 = vmatprep.mubr.f32.mxu0 0.0
        %1354 = vmatmul.mubr.f32.gmra.mxu0 %v706
        %v1355 = vpop.f32.mrf.mxu0
        %v1356 = vadd.f32 %v1131, %v1355
        %v1357 = vpop.f32.mrf.mxu0
        %1358 = vmatprep.mubr.f32.mxu0 0.0
        %1359 = vmatmul.mubr.f32.gmra.mxu0 %v794
        %v1360 = vpop.f32.mrf.mxu0
        %v1361 = vadd.f32 %v1136, %v1360
        %v1362 = vpop.f32.mrf.mxu0
        %1363 = vmatprep.mubr.f32.mxu0 0.0
        %1364 = vmatmul.mubr.f32.gmra.mxu0 %v709
        %v1365 = vpop.f32.mrf.mxu0
        %v1366 = vadd.f32 %v1141, %v1365
        %v1367 = vpop.f32.mrf.mxu0
        %1368 = vmatprep.mubr.f32.mxu0 0.0
        %1369 = vmatmul.mubr.f32.gmra.mxu0 %v795
        %v1370 = vpop.f32.mrf.mxu0
        %v1371 = vadd.f32 %v1146, %v1370
        %v1372 = vpop.f32.mrf.mxu0
        %1373 = vmatprep.mubr.f32.mxu0 0.0
        %1374 = vmatmul.mubr.f32.gmra.mxu0 %v712
        %v1375 = vpop.f32.mrf.mxu0
        %v1376 = vadd.f32 %v1151, %v1375
        %v1377 = vpop.f32.mrf.mxu0
        %1378 = vmatprep.mubr.f32.mxu0 0.0
        %1379 = vmatmul.mubr.f32.gmra.mxu0 %v796
        %v1380 = vpop.f32.mrf.mxu0
        %v1381 = vadd.f32 %v1156, %v1380
        %v1382 = vpop.f32.mrf.mxu0
        %1383 = vmatprep.mubr.f32.mxu0 0.0
        %1384 = vmatmul.mubr.f32.gmra.mxu0 %v715
        %v1385 = vpop.f32.mrf.mxu0
        %v1386 = vadd.f32 %v1161, %v1385
        %v1387 = vpop.f32.mrf.mxu0
        %1388 = vmatprep.mubr.f32.mxu0 0.0
        %1389 = vmatmul.mubr.f32.gmra.mxu0 %v797
        %v1390 = vpop.f32.mrf.mxu0
        %v1391 = vadd.f32 %v1166, %v1390
        %v1392 = vpop.f32.mrf.mxu0
        %1393 = vmatprep.mubr.f32.mxu0 0.0
        %1394 = vmatmul.mubr.f32.gmra.mxu0 %v718
        %v1395 = vpop.f32.mrf.mxu0
        %v1396 = vadd.f32 %v1171, %v1395
        %v1397 = vpop.f32.mrf.mxu0
        %1398 = vmatprep.mubr.f32.mxu0 0.0
        %1399 = vmatmul.mubr.f32.gmra.mxu0 %v798
        %v1400 = vpop.f32.mrf.mxu0
        %v1401 = vadd.f32 %v1176, %v1400
        %v1402 = vpop.f32.mrf.mxu0
        %1403 = vmatprep.mubr.f32.mxu0 0.0
        %1404 = vmatmul.mubr.f32.gmra.mxu0 %v721
        %v1405 = vpop.f32.mrf.mxu0
        %v1406 = vadd.f32 %v1181, %v1405
        %v1407 = vpop.f32.mrf.mxu0
        %1408 = vmatprep.mubr.f32.mxu0 0.0
        %1409 = vmatmul.mubr.f32.gmra.mxu0 %v799
        %v1410 = vpop.f32.mrf.mxu0
        %v1411 = vadd.f32 %v1186, %v1410
        %v1412 = vpop.f32.mrf.mxu0
        %1413 = vmatprep.mubr.f32.mxu0 0.0
        %1414 = vmatmul.mubr.f32.gmra.mxu0 %v724
        %v1415 = vpop.f32.mrf.mxu0
        %v1416 = vadd.f32 %v1191, %v1415
        %v1417 = vpop.f32.mrf.mxu0
        %1418 = vmatprep.mubr.f32.mxu0 0.0
        %1419 = vmatmul.mubr.f32.gmra.mxu0 %v800
        %v1420 = vpop.f32.mrf.mxu0
        %v1421 = vadd.f32 %v1196, %v1420
        %v1422 = vpop.f32.mrf.mxu0
        %1423 = vmatprep.mubr.f32.mxu0 0.0
        %1424 = vmatmul.mubr.f32.gmra.mxu0 %v727
        %v1425 = vpop.f32.mrf.mxu0
        %v1426 = vadd.f32 %v1201, %v1425
        %v1427 = vpop.f32.mrf.mxu0
        %1428 = vmatprep.mubr.f32.mxu0 0.0
        %1429 = vmatmul.mubr.f32.gmra.mxu0 %v801
        %v1430 = vpop.f32.mrf.mxu0
        %v1431 = vadd.f32 %v1206, %v1430
        %v1432 = vpop.f32.mrf.mxu0
        %1433 = vmatprep.mubr.f32.mxu0 0.0
        %1434 = vmatmul.mubr.f32.gmra.mxu0 %v730
        %v1435 = vpop.f32.mrf.mxu0
        %v1436 = vadd.f32 %v1211, %v1435
        %v1437 = vpop.f32.mrf.mxu0
        %1438 = vmatprep.mubr.f32.mxu0 0.0
        %1439 = vmatmul.mubr.f32.gmra.mxu0 %v802
        %v1440 = vpop.f32.mrf.mxu0
        %v1441 = vadd.f32 %v1216, %v1440
        %v1442 = vpop.f32.mrf.mxu0
        %1443 = vmatprep.mubr.f32.mxu0 0.0
        %1444 = vmatmul.mubr.f32.gmra.mxu0 %v733
        %v1445 = vpop.f32.mrf.mxu0
        %v1446 = vadd.f32 %v1221, %v1445
        %v1447 = vpop.f32.mrf.mxu0
        %1448 = vdwg.mxu0
        %vm1449 = vcmask 1045504
        %v1450 = vrot.slane %v787, 2
        %v1451 = vrot.slane %v688, 2
        %v1452 = vsel %vm1449, %v1450, %v1451
        %v1453 = vrot.slane %v804, 2
        %v1454 = vsel %vm1449, %v1451, %v1453
        %v1455 = vrot.slane %v788, 2
        %v1456 = vrot.slane %v691, 2
        %v1457 = vsel %vm1449, %v1455, %v1456
        %v1458 = vrot.slane %v805, 2
        %v1459 = vsel %vm1449, %v1456, %v1458
        %v1460 = vrot.slane %v789, 2
        %v1461 = vrot.slane %v694, 2
        %v1462 = vsel %vm1449, %v1460, %v1461
        %v1463 = vrot.slane %v806, 2
        %v1464 = vsel %vm1449, %v1461, %v1463
        %v1465 = vrot.slane %v790, 2
        %v1466 = vrot.slane %v697, 2
        %v1467 = vsel %vm1449, %v1465, %v1466
        %v1468 = vrot.slane %v807, 2
        %v1469 = vsel %vm1449, %v1466, %v1468
        %v1470 = vrot.slane %v791, 2
        %v1471 = vrot.slane %v700, 2
        %v1472 = vsel %vm1449, %v1470, %v1471
        %v1473 = vrot.slane %v808, 2
        %v1474 = vsel %vm1449, %v1471, %v1473
        %v1475 = vrot.slane %v792, 2
        %v1476 = vrot.slane %v703, 2
        %v1477 = vsel %vm1449, %v1475, %v1476
        %v1478 = vrot.slane %v809, 2
        %v1479 = vsel %vm1449, %v1476, %v1478
        %v1480 = vrot.slane %v793, 2
        %v1481 = vrot.slane %v706, 2
        %v1482 = vsel %vm1449, %v1480, %v1481
        %v1483 = vrot.slane %v810, 2
        %v1484 = vsel %vm1449, %v1481, %v1483
        %v1485 = vrot.slane %v794, 2
        %v1486 = vrot.slane %v709, 2
        %v1487 = vsel %vm1449, %v1485, %v1486
        %v1488 = vrot.slane %v811, 2
        %v1489 = vsel %vm1449, %v1486, %v1488
        %v1490 = vrot.slane %v795, 2
        %v1491 = vrot.slane %v712, 2
        %v1492 = vsel %vm1449, %v1490, %v1491
        %v1493 = vrot.slane %v812, 2
        %v1494 = vsel %vm1449, %v1491, %v1493
        %v1495 = vrot.slane %v796, 2
        %v1496 = vrot.slane %v715, 2
        %v1497 = vsel %vm1449, %v1495, %v1496
        %v1498 = vrot.slane %v813, 2
        %v1499 = vsel %vm1449, %v1496, %v1498
        %v1500 = vrot.slane %v797, 2
        %v1501 = vrot.slane %v718, 2
        %v1502 = vsel %vm1449, %v1500, %v1501
        %v1503 = vrot.slane %v814, 2
        %v1504 = vsel %vm1449, %v1501, %v1503
        %v1505 = vrot.slane %v798, 2
        %v1506 = vrot.slane %v721, 2
        %v1507 = vsel %vm1449, %v1505, %v1506
        %v1508 = vrot.slane %v815, 2
        %v1509 = vsel %vm1449, %v1506, %v1508
        %v1510 = vrot.slane %v799, 2
        %v1511 = vrot.slane %v724, 2
        %v1512 = vsel %vm1449, %v1510, %v1511
        %v1513 = vrot.slane %v816, 2
        %v1514 = vsel %vm1449, %v1511, %v1513
        %v1515 = vrot.slane %v800, 2
        %v1516 = vrot.slane %v727, 2
        %v1517 = vsel %vm1449, %v1515, %v1516
        %v1518 = vrot.slane %v817, 2
        %v1519 = vsel %vm1449, %v1516, %v1518
        %v1520 = vrot.slane %v801, 2
        %v1521 = vrot.slane %v730, 2
        %v1522 = vsel %vm1449, %v1520, %v1521
        %v1523 = vrot.slane %v818, 2
        %v1524 = vsel %vm1449, %v1521, %v1523
        %v1525 = vrot.slane %v802, 2
        %v1526 = vrot.slane %v733, 2
        %v1527 = vsel %vm1449, %v1525, %v1526
        %v1528 = vrot.slane %v819, 2
        %v1529 = vsel %vm1449, %v1526, %v1528
        %s1562 = scalar_lea.vmem [#allocation7], 256
        %v1563 = vld [vmem:[%s1562] sm:$0xff]
        %v1564 = vld [vmem:[%s1562 + $0x8] sm:$0xff]
        %v1565 = vld [vmem:[%s1562 + $0x10] sm:$0xff]
        %v1566 = vld [vmem:[%s1562 + $0x18] sm:$0xff]
        %v1567 = vld [vmem:[%s1562 + $0x20] sm:$0xff]
        %v1568 = vld [vmem:[%s1562 + $0x28] sm:$0xff]
        %v1569 = vld [vmem:[%s1562 + $0x30] sm:$0xff]
        %v1570 = vld [vmem:[%s1562 + $0x38] sm:$0xff]
        %v1571 = vld [vmem:[%s1562 + $0x40] sm:$0xff]
        %v1572 = vld [vmem:[%s1562 + $0x48] sm:$0xff]
        %v1573 = vld [vmem:[%s1562 + $0x50] sm:$0xff]
        %v1574 = vld [vmem:[%s1562 + $0x58] sm:$0xff]
        %v1575 = vld [vmem:[%s1562 + $0x60] sm:$0xff]
        %v1576 = vld [vmem:[%s1562 + $0x68] sm:$0xff]
        %v1577 = vld [vmem:[%s1562 + $0x70] sm:$0xff]
        %v1578 = vld [vmem:[%s1562 + $0x78] sm:$0xff]
        %1579 = vmatprep.subr.mxu0 0.0
        %1580 = vmatpush1.msra.mxu0 %v1578
        %1581 = vmatprep.subr.mxu0 0.0
        %1582 = vmatpush1.msra.mxu0 %v1577
        %1583 = vmatprep.subr.mxu0 0.0
        %1584 = vmatpush1.msra.mxu0 %v1576
        %1585 = vmatprep.subr.mxu0 0.0
        %1586 = vmatpush1.msra.mxu0 %v1575
        %1587 = vmatprep.subr.mxu0 0.0
        %1588 = vmatpush1.msra.mxu0 %v1574
        %1589 = vmatprep.subr.mxu0 0.0
        %1590 = vmatpush1.msra.mxu0 %v1573
        %1591 = vmatprep.subr.mxu0 0.0
        %1592 = vmatpush1.msra.mxu0 %v1572
        %1593 = vmatprep.subr.mxu0 0.0
        %1594 = vmatpush1.msra.mxu0 %v1571
        %1595 = vmatprep.subr.mxu0 0.0
        %1596 = vmatpush1.msra.mxu0 %v1570
        %1597 = vmatprep.subr.mxu0 0.0
        %1598 = vmatpush1.msra.mxu0 %v1569
        %1599 = vmatprep.subr.mxu0 0.0
        %1600 = vmatpush1.msra.mxu0 %v1568
        %1601 = vmatprep.subr.mxu0 0.0
        %1602 = vmatpush1.msra.mxu0 %v1567
        %1603 = vmatprep.subr.mxu0 0.0
        %1604 = vmatpush1.msra.mxu0 %v1566
        %1605 = vmatprep.subr.mxu0 0.0
        %1606 = vmatpush1.msra.mxu0 %v1565
        %1607 = vmatprep.subr.mxu0 0.0
        %1608 = vmatpush1.msra.mxu0 %v1564
        %1609 = vmatprep.subr.mxu0 0.0
        %1610 = vmatpush1.msra.mxu0 %v1563
        %1611 = vmatprep.subr.mxu0 0.0
        %1612 = vmatpush2.msra.mxu0 0.0
        %1613 = vmatprep.subr.mxu0 0.0
        %1614 = vmatpush2.msra.mxu0 0.0
        %1615 = vmatprep.subr.mxu0 0.0
        %1616 = vmatpush2.msra.mxu0 0.0
        %1617 = vmatprep.subr.mxu0 0.0
        %1618 = vmatpush2.msra.mxu0 0.0
        %1619 = vmatprep.subr.mxu0 0.0
        %1620 = vmatpush2.msra.mxu0 0.0
        %1621 = vmatprep.subr.mxu0 0.0
        %1622 = vmatpush2.msra.mxu0 0.0
        %1623 = vmatprep.subr.mxu0 0.0
        %1624 = vmatpush2.msra.mxu0 0.0
        %1625 = vmatprep.subr.mxu0 0.0
        %1626 = vmatpush2.msra.mxu0 0.0
        %1627 = vmatprep.subr.mxu0 0.0
        %1628 = vmatpush2.msra.mxu0 0.0
        %1629 = vmatprep.subr.mxu0 0.0
        %1630 = vmatpush2.msra.mxu0 0.0
        %1631 = vmatprep.subr.mxu0 0.0
        %1632 = vmatpush2.msra.mxu0 0.0
        %1633 = vmatprep.subr.mxu0 0.0
        %1634 = vmatpush2.msra.mxu0 0.0
        %1635 = vmatprep.subr.mxu0 0.0
        %1636 = vmatpush2.msra.mxu0 0.0
        %1637 = vmatprep.subr.mxu0 0.0
        %1638 = vmatpush2.msra.mxu0 0.0
        %1639 = vmatprep.subr.mxu0 0.0
        %1640 = vmatpush2.msra.mxu0 0.0
        %1641 = vmatprep.subr.mxu0 0.0
        %1642 = vmatpush2.msra.mxu0 0.0
        %1643 = vmatprep.mubr.f32.mxu0 0.0
        %1644 = vmatmul.mubr.f32.gmra.mxu0 %v1452
        %v1645 = vpop.f32.mrf.mxu0
        %v1646 = vadd.f32 0.0, %v1645
        %v1647 = vpop.f32.mrf.mxu0
        %1648 = vmatprep.mubr.f32.mxu0 0.0
        %1649 = vmatmul.mubr.f32.gmra.mxu0 %v1454
        %v1650 = vpop.f32.mrf.mxu0
        %v1651 = vadd.f32 0.0, %v1650
        %v1652 = vpop.f32.mrf.mxu0
        %1653 = vmatprep.mubr.f32.mxu0 0.0
        %1654 = vmatmul.mubr.f32.gmra.mxu0 %v1457
        %v1655 = vpop.f32.mrf.mxu0
        %v1656 = vadd.f32 0.0, %v1655
        %v1657 = vpop.f32.mrf.mxu0
        %1658 = vmatprep.mubr.f32.mxu0 0.0
        %1659 = vmatmul.mubr.f32.gmra.mxu0 %v1459
        %v1660 = vpop.f32.mrf.mxu0
        %v1661 = vadd.f32 0.0, %v1660
        %v1662 = vpop.f32.mrf.mxu0
        %1663 = vmatprep.mubr.f32.mxu0 0.0
        %1664 = vmatmul.mubr.f32.gmra.mxu0 %v1462
        %v1665 = vpop.f32.mrf.mxu0
        %v1666 = vadd.f32 0.0, %v1665
        %v1667 = vpop.f32.mrf.mxu0
        %1668 = vmatprep.mubr.f32.mxu0 0.0
        %1669 = vmatmul.mubr.f32.gmra.mxu0 %v1464
        %v1670 = vpop.f32.mrf.mxu0
        %v1671 = vadd.f32 0.0, %v1670
        %v1672 = vpop.f32.mrf.mxu0
        %1673 = vmatprep.mubr.f32.mxu0 0.0
        %1674 = vmatmul.mubr.f32.gmra.mxu0 %v1467
        %v1675 = vpop.f32.mrf.mxu0
        %v1676 = vadd.f32 0.0, %v1675
        %v1677 = vpop.f32.mrf.mxu0
        %1678 = vmatprep.mubr.f32.mxu0 0.0
        %1679 = vmatmul.mubr.f32.gmra.mxu0 %v1469
        %v1680 = vpop.f32.mrf.mxu0
        %v1681 = vadd.f32 0.0, %v1680
        %v1682 = vpop.f32.mrf.mxu0
        %1683 = vmatprep.mubr.f32.mxu0 0.0
        %1684 = vmatmul.mubr.f32.gmra.mxu0 %v1472
        %v1685 = vpop.f32.mrf.mxu0
        %v1686 = vadd.f32 0.0, %v1685
        %v1687 = vpop.f32.mrf.mxu0
        %1688 = vmatprep.mubr.f32.mxu0 0.0
        %1689 = vmatmul.mubr.f32.gmra.mxu0 %v1474
        %v1690 = vpop.f32.mrf.mxu0
        %v1691 = vadd.f32 0.0, %v1690
        %v1692 = vpop.f32.mrf.mxu0
        %1693 = vmatprep.mubr.f32.mxu0 0.0
        %1694 = vmatmul.mubr.f32.gmra.mxu0 %v1477
        %v1695 = vpop.f32.mrf.mxu0
        %v1696 = vadd.f32 0.0, %v1695
        %v1697 = vpop.f32.mrf.mxu0
        %1698 = vmatprep.mubr.f32.mxu0 0.0
        %1699 = vmatmul.mubr.f32.gmra.mxu0 %v1479
        %v1700 = vpop.f32.mrf.mxu0
        %v1701 = vadd.f32 0.0, %v1700
        %v1702 = vpop.f32.mrf.mxu0
        %1703 = vmatprep.mubr.f32.mxu0 0.0
        %1704 = vmatmul.mubr.f32.gmra.mxu0 %v1482
        %v1705 = vpop.f32.mrf.mxu0
        %v1706 = vadd.f32 0.0, %v1705
        %v1707 = vpop.f32.mrf.mxu0
        %1708 = vmatprep.mubr.f32.mxu0 0.0
        %1709 = vmatmul.mubr.f32.gmra.mxu0 %v1484
        %v1710 = vpop.f32.mrf.mxu0
        %v1711 = vadd.f32 0.0, %v1710
        %v1712 = vpop.f32.mrf.mxu0
        %1713 = vmatprep.mubr.f32.mxu0 0.0
        %1714 = vmatmul.mubr.f32.gmra.mxu0 %v1487
        %v1715 = vpop.f32.mrf.mxu0
        %v1716 = vadd.f32 0.0, %v1715
        %v1717 = vpop.f32.mrf.mxu0
        %1718 = vmatprep.mubr.f32.mxu0 0.0
        %1719 = vmatmul.mubr.f32.gmra.mxu0 %v1489
        %v1720 = vpop.f32.mrf.mxu0
        %v1721 = vadd.f32 0.0, %v1720
        %v1722 = vpop.f32.mrf.mxu0
        %1723 = vmatprep.mubr.f32.mxu0 0.0
        %1724 = vmatmul.mubr.f32.gmra.mxu0 %v1492
        %v1725 = vpop.f32.mrf.mxu0
        %v1726 = vadd.f32 0.0, %v1725
        %v1727 = vpop.f32.mrf.mxu0
        %1728 = vmatprep.mubr.f32.mxu0 0.0
        %1729 = vmatmul.mubr.f32.gmra.mxu0 %v1494
        %v1730 = vpop.f32.mrf.mxu0
        %v1731 = vadd.f32 0.0, %v1730
        %v1732 = vpop.f32.mrf.mxu0
        %1733 = vmatprep.mubr.f32.mxu0 0.0
        %1734 = vmatmul.mubr.f32.gmra.mxu0 %v1497
        %v1735 = vpop.f32.mrf.mxu0
        %v1736 = vadd.f32 0.0, %v1735
        %v1737 = vpop.f32.mrf.mxu0
        %1738 = vmatprep.mubr.f32.mxu0 0.0
        %1739 = vmatmul.mubr.f32.gmra.mxu0 %v1499
        %v1740 = vpop.f32.mrf.mxu0
        %v1741 = vadd.f32 0.0, %v1740
        %v1742 = vpop.f32.mrf.mxu0
        %1743 = vmatprep.mubr.f32.mxu0 0.0
        %1744 = vmatmul.mubr.f32.gmra.mxu0 %v1502
        %v1745 = vpop.f32.mrf.mxu0
        %v1746 = vadd.f32 0.0, %v1745
        %v1747 = vpop.f32.mrf.mxu0
        %1748 = vmatprep.mubr.f32.mxu0 0.0
        %1749 = vmatmul.mubr.f32.gmra.mxu0 %v1504
        %v1750 = vpop.f32.mrf.mxu0
        %v1751 = vadd.f32 0.0, %v1750
        %v1752 = vpop.f32.mrf.mxu0
        %1753 = vmatprep.mubr.f32.mxu0 0.0
        %1754 = vmatmul.mubr.f32.gmra.mxu0 %v1507
        %v1755 = vpop.f32.mrf.mxu0
        %v1756 = vadd.f32 0.0, %v1755
        %v1757 = vpop.f32.mrf.mxu0
        %1758 = vmatprep.mubr.f32.mxu0 0.0
        %1759 = vmatmul.mubr.f32.gmra.mxu0 %v1509
        %v1760 = vpop.f32.mrf.mxu0
        %v1761 = vadd.f32 0.0, %v1760
        %v1762 = vpop.f32.mrf.mxu0
        %1763 = vmatprep.mubr.f32.mxu0 0.0
        %1764 = vmatmul.mubr.f32.gmra.mxu0 %v1512
        %v1765 = vpop.f32.mrf.mxu0
        %v1766 = vadd.f32 0.0, %v1765
        %v1767 = vpop.f32.mrf.mxu0
        %1768 = vmatprep.mubr.f32.mxu0 0.0
        %1769 = vmatmul.mubr.f32.gmra.mxu0 %v1514
        %v1770 = vpop.f32.mrf.mxu0
        %v1771 = vadd.f32 0.0, %v1770
        %v1772 = vpop.f32.mrf.mxu0
        %1773 = vmatprep.mubr.f32.mxu0 0.0
        %1774 = vmatmul.mubr.f32.gmra.mxu0 %v1517
        %v1775 = vpop.f32.mrf.mxu0
        %v1776 = vadd.f32 0.0, %v1775
        %v1777 = vpop.f32.mrf.mxu0
        %1778 = vmatprep.mubr.f32.mxu0 0.0
        %1779 = vmatmul.mubr.f32.gmra.mxu0 %v1519
        %v1780 = vpop.f32.mrf.mxu0
        %v1781 = vadd.f32 0.0, %v1780
        %v1782 = vpop.f32.mrf.mxu0
        %1783 = vmatprep.mubr.f32.mxu0 0.0
        %1784 = vmatmul.mubr.f32.gmra.mxu0 %v1522
        %v1785 = vpop.f32.mrf.mxu0
        %v1786 = vadd.f32 0.0, %v1785
        %v1787 = vpop.f32.mrf.mxu0
        %1788 = vmatprep.mubr.f32.mxu0 0.0
        %1789 = vmatmul.mubr.f32.gmra.mxu0 %v1524
        %v1790 = vpop.f32.mrf.mxu0
        %v1791 = vadd.f32 0.0, %v1790
        %v1792 = vpop.f32.mrf.mxu0
        %1793 = vmatprep.mubr.f32.mxu0 0.0
        %1794 = vmatmul.mubr.f32.gmra.mxu0 %v1527
        %v1795 = vpop.f32.mrf.mxu0
        %v1796 = vadd.f32 0.0, %v1795
        %v1797 = vpop.f32.mrf.mxu0
        %1798 = vmatprep.mubr.f32.mxu0 0.0
        %1799 = vmatmul.mubr.f32.gmra.mxu0 %v1529
        %v1800 = vpop.f32.mrf.mxu0
        %v1801 = vadd.f32 0.0, %v1800
        %v1802 = vpop.f32.mrf.mxu0
        %1803 = vdwg.mxu0
        %v1804 = vadd.f32 %v1291, %v1646
        %v1805 = vadd.f32 %v1296, %v1651
        %v1806 = vadd.f32 %v1301, %v1656
        %v1807 = vadd.f32 %v1306, %v1661
        %v1808 = vadd.f32 %v1311, %v1666
        %v1809 = vadd.f32 %v1316, %v1671
        %v1810 = vadd.f32 %v1321, %v1676
        %v1811 = vadd.f32 %v1326, %v1681
        %v1812 = vadd.f32 %v1331, %v1686
        %v1813 = vadd.f32 %v1336, %v1691
        %v1814 = vadd.f32 %v1341, %v1696
        %v1815 = vadd.f32 %v1346, %v1701
        %v1816 = vadd.f32 %v1351, %v1706
        %v1817 = vadd.f32 %v1356, %v1711
        %v1818 = vadd.f32 %v1361, %v1716
        %v1819 = vadd.f32 %v1366, %v1721
        %v1820 = vadd.f32 %v1371, %v1726
        %v1821 = vadd.f32 %v1376, %v1731
        %v1822 = vadd.f32 %v1381, %v1736
        %v1823 = vadd.f32 %v1386, %v1741
        %v1824 = vadd.f32 %v1391, %v1746
        %v1825 = vadd.f32 %v1396, %v1751
        %v1826 = vadd.f32 %v1401, %v1756
        %v1827 = vadd.f32 %v1406, %v1761
        %v1828 = vadd.f32 %v1411, %v1766
        %v1829 = vadd.f32 %v1416, %v1771
        %v1830 = vadd.f32 %v1421, %v1776
        %v1831 = vadd.f32 %v1426, %v1781
        %v1832 = vadd.f32 %v1431, %v1786
        %v1833 = vadd.f32 %v1436, %v1791
        %v1834 = vadd.f32 %v1441, %v1796
        %v1835 = vadd.f32 %v1446, %v1801
        %s1836 = scalar_lea.vmem [#allocation7], 384
        %v1837 = vld [vmem:[%s1836] sm:$0xff]
        %v1838 = vld [vmem:[%s1836 + $0x8] sm:$0xff]
        %v1839 = vld [vmem:[%s1836 + $0x10] sm:$0xff]
        %v1840 = vld [vmem:[%s1836 + $0x18] sm:$0xff]
        %v1841 = vld [vmem:[%s1836 + $0x20] sm:$0xff]
        %v1842 = vld [vmem:[%s1836 + $0x28] sm:$0xff]
        %v1843 = vld [vmem:[%s1836 + $0x30] sm:$0xff]
        %v1844 = vld [vmem:[%s1836 + $0x38] sm:$0xff]
        %v1845 = vld [vmem:[%s1836 + $0x40] sm:$0xff]
        %v1846 = vld [vmem:[%s1836 + $0x48] sm:$0xff]
        %v1847 = vld [vmem:[%s1836 + $0x50] sm:$0xff]
        %v1848 = vld [vmem:[%s1836 + $0x58] sm:$0xff]
        %v1849 = vld [vmem:[%s1836 + $0x60] sm:$0xff]
        %v1850 = vld [vmem:[%s1836 + $0x68] sm:$0xff]
        %v1851 = vld [vmem:[%s1836 + $0x70] sm:$0xff]
        %v1852 = vld [vmem:[%s1836 + $0x78] sm:$0xff]
        %1853 = vmatprep.subr.mxu0 0.0
        %1854 = vmatpush1.msra.mxu0 %v1852
        %1855 = vmatprep.subr.mxu0 0.0
        %1856 = vmatpush1.msra.mxu0 %v1851
        %1857 = vmatprep.subr.mxu0 0.0
        %1858 = vmatpush1.msra.mxu0 %v1850
        %1859 = vmatprep.subr.mxu0 0.0
        %1860 = vmatpush1.msra.mxu0 %v1849
        %1861 = vmatprep.subr.mxu0 0.0
        %1862 = vmatpush1.msra.mxu0 %v1848
        %1863 = vmatprep.subr.mxu0 0.0
        %1864 = vmatpush1.msra.mxu0 %v1847
        %1865 = vmatprep.subr.mxu0 0.0
        %1866 = vmatpush1.msra.mxu0 %v1846
        %1867 = vmatprep.subr.mxu0 0.0
        %1868 = vmatpush1.msra.mxu0 %v1845
        %1869 = vmatprep.subr.mxu0 0.0
        %1870 = vmatpush1.msra.mxu0 %v1844
        %1871 = vmatprep.subr.mxu0 0.0
        %1872 = vmatpush1.msra.mxu0 %v1843
        %1873 = vmatprep.subr.mxu0 0.0
        %1874 = vmatpush1.msra.mxu0 %v1842
        %1875 = vmatprep.subr.mxu0 0.0
        %1876 = vmatpush1.msra.mxu0 %v1841
        %1877 = vmatprep.subr.mxu0 0.0
        %1878 = vmatpush1.msra.mxu0 %v1840
        %1879 = vmatprep.subr.mxu0 0.0
        %1880 = vmatpush1.msra.mxu0 %v1839
        %1881 = vmatprep.subr.mxu0 0.0
        %1882 = vmatpush1.msra.mxu0 %v1838
        %1883 = vmatprep.subr.mxu0 0.0
        %1884 = vmatpush1.msra.mxu0 %v1837
        %1885 = vmatprep.subr.mxu0 0.0
        %1886 = vmatpush2.msra.mxu0 0.0
        %1887 = vmatprep.subr.mxu0 0.0
        %1888 = vmatpush2.msra.mxu0 0.0
        %1889 = vmatprep.subr.mxu0 0.0
        %1890 = vmatpush2.msra.mxu0 0.0
        %1891 = vmatprep.subr.mxu0 0.0
        %1892 = vmatpush2.msra.mxu0 0.0
        %1893 = vmatprep.subr.mxu0 0.0
        %1894 = vmatpush2.msra.mxu0 0.0
        %1895 = vmatprep.subr.mxu0 0.0
        %1896 = vmatpush2.msra.mxu0 0.0
        %1897 = vmatprep.subr.mxu0 0.0
        %1898 = vmatpush2.msra.mxu0 0.0
        %1899 = vmatprep.subr.mxu0 0.0
        %1900 = vmatpush2.msra.mxu0 0.0
        %1901 = vmatprep.subr.mxu0 0.0
        %1902 = vmatpush2.msra.mxu0 0.0
        %1903 = vmatprep.subr.mxu0 0.0
        %1904 = vmatpush2.msra.mxu0 0.0
        %1905 = vmatprep.subr.mxu0 0.0
        %1906 = vmatpush2.msra.mxu0 0.0
        %1907 = vmatprep.subr.mxu0 0.0
        %1908 = vmatpush2.msra.mxu0 0.0
        %1909 = vmatprep.subr.mxu0 0.0
        %1910 = vmatpush2.msra.mxu0 0.0
        %1911 = vmatprep.subr.mxu0 0.0
        %1912 = vmatpush2.msra.mxu0 0.0
        %1913 = vmatprep.subr.mxu0 0.0
        %1914 = vmatpush2.msra.mxu0 0.0
        %1915 = vmatprep.subr.mxu0 0.0
        %1916 = vmatpush2.msra.mxu0 0.0
        %1917 = vmatprep.mubr.f32.mxu0 0.0
        %1918 = vmatmul.mubr.f32.gmra.mxu0 %v788
        %v1919 = vpop.f32.mrf.mxu0
        %v1920 = vadd.f32 0.0, %v1919
        %v1921 = vpop.f32.mrf.mxu0
        %1922 = vmatprep.mubr.f32.mxu0 0.0
        %1923 = vmatmul.mubr.f32.gmra.mxu0 %v691
        %v1924 = vpop.f32.mrf.mxu0
        %v1925 = vadd.f32 0.0, %v1924
        %v1926 = vpop.f32.mrf.mxu0
        %1927 = vmatprep.mubr.f32.mxu0 0.0
        %1928 = vmatmul.mubr.f32.gmra.mxu0 %v789
        %v1929 = vpop.f32.mrf.mxu0
        %v1930 = vadd.f32 0.0, %v1929
        %v1931 = vpop.f32.mrf.mxu0
        %1932 = vmatprep.mubr.f32.mxu0 0.0
        %1933 = vmatmul.mubr.f32.gmra.mxu0 %v694
        %v1934 = vpop.f32.mrf.mxu0
        %v1935 = vadd.f32 0.0, %v1934
        %v1936 = vpop.f32.mrf.mxu0
        %1937 = vmatprep.mubr.f32.mxu0 0.0
        %1938 = vmatmul.mubr.f32.gmra.mxu0 %v790
        %v1939 = vpop.f32.mrf.mxu0
        %v1940 = vadd.f32 0.0, %v1939
        %v1941 = vpop.f32.mrf.mxu0
        %1942 = vmatprep.mubr.f32.mxu0 0.0
        %1943 = vmatmul.mubr.f32.gmra.mxu0 %v697
        %v1944 = vpop.f32.mrf.mxu0
        %v1945 = vadd.f32 0.0, %v1944
        %v1946 = vpop.f32.mrf.mxu0
        %1947 = vmatprep.mubr.f32.mxu0 0.0
        %1948 = vmatmul.mubr.f32.gmra.mxu0 %v791
        %v1949 = vpop.f32.mrf.mxu0
        %v1950 = vadd.f32 0.0, %v1949
        %v1951 = vpop.f32.mrf.mxu0
        %1952 = vmatprep.mubr.f32.mxu0 0.0
        %1953 = vmatmul.mubr.f32.gmra.mxu0 %v700
        %v1954 = vpop.f32.mrf.mxu0
        %v1955 = vadd.f32 0.0, %v1954
        %v1956 = vpop.f32.mrf.mxu0
        %1957 = vmatprep.mubr.f32.mxu0 0.0
        %1958 = vmatmul.mubr.f32.gmra.mxu0 %v792
        %v1959 = vpop.f32.mrf.mxu0
        %v1960 = vadd.f32 0.0, %v1959
        %v1961 = vpop.f32.mrf.mxu0
        %1962 = vmatprep.mubr.f32.mxu0 0.0
        %1963 = vmatmul.mubr.f32.gmra.mxu0 %v703
        %v1964 = vpop.f32.mrf.mxu0
        %v1965 = vadd.f32 0.0, %v1964
        %v1966 = vpop.f32.mrf.mxu0
        %1967 = vmatprep.mubr.f32.mxu0 0.0
        %1968 = vmatmul.mubr.f32.gmra.mxu0 %v793
        %v1969 = vpop.f32.mrf.mxu0
        %v1970 = vadd.f32 0.0, %v1969
        %v1971 = vpop.f32.mrf.mxu0
        %1972 = vmatprep.mubr.f32.mxu0 0.0
        %1973 = vmatmul.mubr.f32.gmra.mxu0 %v706
        %v1974 = vpop.f32.mrf.mxu0
        %v1975 = vadd.f32 0.0, %v1974
        %v1976 = vpop.f32.mrf.mxu0
        %1977 = vmatprep.mubr.f32.mxu0 0.0
        %1978 = vmatmul.mubr.f32.gmra.mxu0 %v794
        %v1979 = vpop.f32.mrf.mxu0
        %v1980 = vadd.f32 0.0, %v1979
        %v1981 = vpop.f32.mrf.mxu0
        %1982 = vmatprep.mubr.f32.mxu0 0.0
        %1983 = vmatmul.mubr.f32.gmra.mxu0 %v709
        %v1984 = vpop.f32.mrf.mxu0
        %v1985 = vadd.f32 0.0, %v1984
        %v1986 = vpop.f32.mrf.mxu0
        %1987 = vmatprep.mubr.f32.mxu0 0.0
        %1988 = vmatmul.mubr.f32.gmra.mxu0 %v795
        %v1989 = vpop.f32.mrf.mxu0
        %v1990 = vadd.f32 0.0, %v1989
        %v1991 = vpop.f32.mrf.mxu0
        %1992 = vmatprep.mubr.f32.mxu0 0.0
        %1993 = vmatmul.mubr.f32.gmra.mxu0 %v712
        %v1994 = vpop.f32.mrf.mxu0
        %v1995 = vadd.f32 0.0, %v1994
        %v1996 = vpop.f32.mrf.mxu0
        %1997 = vmatprep.mubr.f32.mxu0 0.0
        %1998 = vmatmul.mubr.f32.gmra.mxu0 %v796
        %v1999 = vpop.f32.mrf.mxu0
        %v2000 = vadd.f32 0.0, %v1999
        %v2001 = vpop.f32.mrf.mxu0
        %2002 = vmatprep.mubr.f32.mxu0 0.0
        %2003 = vmatmul.mubr.f32.gmra.mxu0 %v715
        %v2004 = vpop.f32.mrf.mxu0
        %v2005 = vadd.f32 0.0, %v2004
        %v2006 = vpop.f32.mrf.mxu0
        %2007 = vmatprep.mubr.f32.mxu0 0.0
        %2008 = vmatmul.mubr.f32.gmra.mxu0 %v797
        %v2009 = vpop.f32.mrf.mxu0
        %v2010 = vadd.f32 0.0, %v2009
        %v2011 = vpop.f32.mrf.mxu0
        %2012 = vmatprep.mubr.f32.mxu0 0.0
        %2013 = vmatmul.mubr.f32.gmra.mxu0 %v718
        %v2014 = vpop.f32.mrf.mxu0
        %v2015 = vadd.f32 0.0, %v2014
        %v2016 = vpop.f32.mrf.mxu0
        %2017 = vmatprep.mubr.f32.mxu0 0.0
        %2018 = vmatmul.mubr.f32.gmra.mxu0 %v798
        %v2019 = vpop.f32.mrf.mxu0
        %v2020 = vadd.f32 0.0, %v2019
        %v2021 = vpop.f32.mrf.mxu0
        %2022 = vmatprep.mubr.f32.mxu0 0.0
        %2023 = vmatmul.mubr.f32.gmra.mxu0 %v721
        %v2024 = vpop.f32.mrf.mxu0
        %v2025 = vadd.f32 0.0, %v2024
        %v2026 = vpop.f32.mrf.mxu0
        %2027 = vmatprep.mubr.f32.mxu0 0.0
        %2028 = vmatmul.mubr.f32.gmra.mxu0 %v799
        %v2029 = vpop.f32.mrf.mxu0
        %v2030 = vadd.f32 0.0, %v2029
        %v2031 = vpop.f32.mrf.mxu0
        %2032 = vmatprep.mubr.f32.mxu0 0.0
        %2033 = vmatmul.mubr.f32.gmra.mxu0 %v724
        %v2034 = vpop.f32.mrf.mxu0
        %v2035 = vadd.f32 0.0, %v2034
        %v2036 = vpop.f32.mrf.mxu0
        %2037 = vmatprep.mubr.f32.mxu0 0.0
        %2038 = vmatmul.mubr.f32.gmra.mxu0 %v800
        %v2039 = vpop.f32.mrf.mxu0
        %v2040 = vadd.f32 0.0, %v2039
        %v2041 = vpop.f32.mrf.mxu0
        %2042 = vmatprep.mubr.f32.mxu0 0.0
        %2043 = vmatmul.mubr.f32.gmra.mxu0 %v727
        %v2044 = vpop.f32.mrf.mxu0
        %v2045 = vadd.f32 0.0, %v2044
        %v2046 = vpop.f32.mrf.mxu0
        %2047 = vmatprep.mubr.f32.mxu0 0.0
        %2048 = vmatmul.mubr.f32.gmra.mxu0 %v801
        %v2049 = vpop.f32.mrf.mxu0
        %v2050 = vadd.f32 0.0, %v2049
        %v2051 = vpop.f32.mrf.mxu0
        %2052 = vmatprep.mubr.f32.mxu0 0.0
        %2053 = vmatmul.mubr.f32.gmra.mxu0 %v730
        %v2054 = vpop.f32.mrf.mxu0
        %v2055 = vadd.f32 0.0, %v2054
        %v2056 = vpop.f32.mrf.mxu0
        %2057 = vmatprep.mubr.f32.mxu0 0.0
        %2058 = vmatmul.mubr.f32.gmra.mxu0 %v802
        %v2059 = vpop.f32.mrf.mxu0
        %v2060 = vadd.f32 0.0, %v2059
        %v2061 = vpop.f32.mrf.mxu0
        %2062 = vmatprep.mubr.f32.mxu0 0.0
        %2063 = vmatmul.mubr.f32.gmra.mxu0 %v733
        %v2064 = vpop.f32.mrf.mxu0
        %v2065 = vadd.f32 0.0, %v2064
        %v2066 = vpop.f32.mrf.mxu0
        %2067 = vmatprep.mubr.f32.mxu0 0.0
        %2068 = vmatmul.mubr.f32.gmra.mxu0 %v803
        %v2069 = vpop.f32.mrf.mxu0
        %v2070 = vadd.f32 0.0, %v2069
        %v2071 = vpop.f32.mrf.mxu0
        %2072 = vmatprep.mubr.f32.mxu0 0.0
        %2073 = vmatmul.mubr.f32.gmra.mxu0 %v736
        %v2074 = vpop.f32.mrf.mxu0
        %v2075 = vadd.f32 0.0, %v2074
        %v2076 = vpop.f32.mrf.mxu0
        %2077 = vdwg.mxu0
        %v2078 = vadd.f32 %v1804, %v1920
        %v2079 = vadd.f32 %v1805, %v1925
        %v2080 = vadd.f32 %v1806, %v1930
        %v2081 = vadd.f32 %v1807, %v1935
        %v2082 = vadd.f32 %v1808, %v1940
        %v2083 = vadd.f32 %v1809, %v1945
        %v2084 = vadd.f32 %v1810, %v1950
        %v2085 = vadd.f32 %v1811, %v1955
        %v2086 = vadd.f32 %v1812, %v1960
        %v2087 = vadd.f32 %v1813, %v1965
        %v2088 = vadd.f32 %v1814, %v1970
        %v2089 = vadd.f32 %v1815, %v1975
        %v2090 = vadd.f32 %v1816, %v1980
        %v2091 = vadd.f32 %v1817, %v1985
        %v2092 = vadd.f32 %v1818, %v1990
        %v2093 = vadd.f32 %v1819, %v1995
        %v2094 = vadd.f32 %v1820, %v2000
        %v2095 = vadd.f32 %v1821, %v2005
        %v2096 = vadd.f32 %v1822, %v2010
        %v2097 = vadd.f32 %v1823, %v2015
        %v2098 = vadd.f32 %v1824, %v2020
        %v2099 = vadd.f32 %v1825, %v2025
        %v2100 = vadd.f32 %v1826, %v2030
        %v2101 = vadd.f32 %v1827, %v2035
        %v2102 = vadd.f32 %v1828, %v2040
        %v2103 = vadd.f32 %v1829, %v2045
        %v2104 = vadd.f32 %v1830, %v2050
        %v2105 = vadd.f32 %v1831, %v2055
        %v2106 = vadd.f32 %v1832, %v2060
        %v2107 = vadd.f32 %v1833, %v2065
        %v2108 = vadd.f32 %v1834, %v2070
        %v2109 = vadd.f32 %v1835, %v2075
        %v2112 = vrot.slane %v803, 1
        %v2113 = vrot.slane %v736, 1
        %v2114 = vsel %vm869, %v2112, %v2113
        %v2115 = vrot.slane %v820, 1
        %v2116 = vsel %vm869, %v2113, %v2115
        %s2119 = scalar_lea.vmem [#allocation7], 512
        %v2120 = vld [vmem:[%s2119] sm:$0xff]
        %v2121 = vld [vmem:[%s2119 + $0x8] sm:$0xff]
        %v2122 = vld [vmem:[%s2119 + $0x10] sm:$0xff]
        %v2123 = vld [vmem:[%s2119 + $0x18] sm:$0xff]
        %v2124 = vld [vmem:[%s2119 + $0x20] sm:$0xff]
        %v2125 = vld [vmem:[%s2119 + $0x28] sm:$0xff]
        %v2126 = vld [vmem:[%s2119 + $0x30] sm:$0xff]
        %v2127 = vld [vmem:[%s2119 + $0x38] sm:$0xff]
        %v2128 = vld [vmem:[%s2119 + $0x40] sm:$0xff]
        %v2129 = vld [vmem:[%s2119 + $0x48] sm:$0xff]
        %v2130 = vld [vmem:[%s2119 + $0x50] sm:$0xff]
        %v2131 = vld [vmem:[%s2119 + $0x58] sm:$0xff]
        %v2132 = vld [vmem:[%s2119 + $0x60] sm:$0xff]
        %v2133 = vld [vmem:[%s2119 + $0x68] sm:$0xff]
        %v2134 = vld [vmem:[%s2119 + $0x70] sm:$0xff]
        %v2135 = vld [vmem:[%s2119 + $0x78] sm:$0xff]
        %2136 = vmatprep.subr.mxu0 0.0
        %2137 = vmatpush1.msra.mxu0 %v2135
        %2138 = vmatprep.subr.mxu0 0.0
        %2139 = vmatpush1.msra.mxu0 %v2134
        %2140 = vmatprep.subr.mxu0 0.0
        %2141 = vmatpush1.msra.mxu0 %v2133
        %2142 = vmatprep.subr.mxu0 0.0
        %2143 = vmatpush1.msra.mxu0 %v2132
        %2144 = vmatprep.subr.mxu0 0.0
        %2145 = vmatpush1.msra.mxu0 %v2131
        %2146 = vmatprep.subr.mxu0 0.0
        %2147 = vmatpush1.msra.mxu0 %v2130
        %2148 = vmatprep.subr.mxu0 0.0
        %2149 = vmatpush1.msra.mxu0 %v2129
        %2150 = vmatprep.subr.mxu0 0.0
        %2151 = vmatpush1.msra.mxu0 %v2128
        %2152 = vmatprep.subr.mxu0 0.0
        %2153 = vmatpush1.msra.mxu0 %v2127
        %2154 = vmatprep.subr.mxu0 0.0
        %2155 = vmatpush1.msra.mxu0 %v2126
        %2156 = vmatprep.subr.mxu0 0.0
        %2157 = vmatpush1.msra.mxu0 %v2125
        %2158 = vmatprep.subr.mxu0 0.0
        %2159 = vmatpush1.msra.mxu0 %v2124
        %2160 = vmatprep.subr.mxu0 0.0
        %2161 = vmatpush1.msra.mxu0 %v2123
        %2162 = vmatprep.subr.mxu0 0.0
        %2163 = vmatpush1.msra.mxu0 %v2122
        %2164 = vmatprep.subr.mxu0 0.0
        %2165 = vmatpush1.msra.mxu0 %v2121
        %2166 = vmatprep.subr.mxu0 0.0
        %2167 = vmatpush1.msra.mxu0 %v2120
        %2168 = vmatprep.subr.mxu0 0.0
        %2169 = vmatpush2.msra.mxu0 0.0
        %2170 = vmatprep.subr.mxu0 0.0
        %2171 = vmatpush2.msra.mxu0 0.0
        %2172 = vmatprep.subr.mxu0 0.0
        %2173 = vmatpush2.msra.mxu0 0.0
        %2174 = vmatprep.subr.mxu0 0.0
        %2175 = vmatpush2.msra.mxu0 0.0
        %2176 = vmatprep.subr.mxu0 0.0
        %2177 = vmatpush2.msra.mxu0 0.0
        %2178 = vmatprep.subr.mxu0 0.0
        %2179 = vmatpush2.msra.mxu0 0.0
        %2180 = vmatprep.subr.mxu0 0.0
        %2181 = vmatpush2.msra.mxu0 0.0
        %2182 = vmatprep.subr.mxu0 0.0
        %2183 = vmatpush2.msra.mxu0 0.0
        %2184 = vmatprep.subr.mxu0 0.0
        %2185 = vmatpush2.msra.mxu0 0.0
        %2186 = vmatprep.subr.mxu0 0.0
        %2187 = vmatpush2.msra.mxu0 0.0
        %2188 = vmatprep.subr.mxu0 0.0
        %2189 = vmatpush2.msra.mxu0 0.0
        %2190 = vmatprep.subr.mxu0 0.0
        %2191 = vmatpush2.msra.mxu0 0.0
        %2192 = vmatprep.subr.mxu0 0.0
        %2193 = vmatpush2.msra.mxu0 0.0
        %2194 = vmatprep.subr.mxu0 0.0
        %2195 = vmatpush2.msra.mxu0 0.0
        %2196 = vmatprep.subr.mxu0 0.0
        %2197 = vmatpush2.msra.mxu0 0.0
        %2198 = vmatprep.subr.mxu0 0.0
        %2199 = vmatpush2.msra.mxu0 0.0
        %2200 = vmatprep.mubr.f32.mxu0 0.0
        %2201 = vmatmul.mubr.f32.gmra.mxu0 %v877
        %v2202 = vpop.f32.mrf.mxu0
        %v2203 = vadd.f32 0.0, %v2202
        %v2204 = vpop.f32.mrf.mxu0
        %2205 = vmatprep.mubr.f32.mxu0 0.0
        %2206 = vmatmul.mubr.f32.gmra.mxu0 %v879
        %v2207 = vpop.f32.mrf.mxu0
        %v2208 = vadd.f32 0.0, %v2207
        %v2209 = vpop.f32.mrf.mxu0
        %2210 = vmatprep.mubr.f32.mxu0 0.0
        %2211 = vmatmul.mubr.f32.gmra.mxu0 %v882
        %v2212 = vpop.f32.mrf.mxu0
        %v2213 = vadd.f32 0.0, %v2212
        %v2214 = vpop.f32.mrf.mxu0
        %2215 = vmatprep.mubr.f32.mxu0 0.0
        %2216 = vmatmul.mubr.f32.gmra.mxu0 %v884
        %v2217 = vpop.f32.mrf.mxu0
        %v2218 = vadd.f32 0.0, %v2217
        %v2219 = vpop.f32.mrf.mxu0
        %2220 = vmatprep.mubr.f32.mxu0 0.0
        %2221 = vmatmul.mubr.f32.gmra.mxu0 %v887
        %v2222 = vpop.f32.mrf.mxu0
        %v2223 = vadd.f32 0.0, %v2222
        %v2224 = vpop.f32.mrf.mxu0
        %2225 = vmatprep.mubr.f32.mxu0 0.0
        %2226 = vmatmul.mubr.f32.gmra.mxu0 %v889
        %v2227 = vpop.f32.mrf.mxu0
        %v2228 = vadd.f32 0.0, %v2227
        %v2229 = vpop.f32.mrf.mxu0
        %2230 = vmatprep.mubr.f32.mxu0 0.0
        %2231 = vmatmul.mubr.f32.gmra.mxu0 %v892
        %v2232 = vpop.f32.mrf.mxu0
        %v2233 = vadd.f32 0.0, %v2232
        %v2234 = vpop.f32.mrf.mxu0
        %2235 = vmatprep.mubr.f32.mxu0 0.0
        %2236 = vmatmul.mubr.f32.gmra.mxu0 %v894
        %v2237 = vpop.f32.mrf.mxu0
        %v2238 = vadd.f32 0.0, %v2237
        %v2239 = vpop.f32.mrf.mxu0
        %2240 = vmatprep.mubr.f32.mxu0 0.0
        %2241 = vmatmul.mubr.f32.gmra.mxu0 %v897
        %v2242 = vpop.f32.mrf.mxu0
        %v2243 = vadd.f32 0.0, %v2242
        %v2244 = vpop.f32.mrf.mxu0
        %2245 = vmatprep.mubr.f32.mxu0 0.0
        %2246 = vmatmul.mubr.f32.gmra.mxu0 %v899
        %v2247 = vpop.f32.mrf.mxu0
        %v2248 = vadd.f32 0.0, %v2247
        %v2249 = vpop.f32.mrf.mxu0
        %2250 = vmatprep.mubr.f32.mxu0 0.0
        %2251 = vmatmul.mubr.f32.gmra.mxu0 %v902
        %v2252 = vpop.f32.mrf.mxu0
        %v2253 = vadd.f32 0.0, %v2252
        %v2254 = vpop.f32.mrf.mxu0
        %2255 = vmatprep.mubr.f32.mxu0 0.0
        %2256 = vmatmul.mubr.f32.gmra.mxu0 %v904
        %v2257 = vpop.f32.mrf.mxu0
        %v2258 = vadd.f32 0.0, %v2257
        %v2259 = vpop.f32.mrf.mxu0
        %2260 = vmatprep.mubr.f32.mxu0 0.0
        %2261 = vmatmul.mubr.f32.gmra.mxu0 %v907
        %v2262 = vpop.f32.mrf.mxu0
        %v2263 = vadd.f32 0.0, %v2262
        %v2264 = vpop.f32.mrf.mxu0
        %2265 = vmatprep.mubr.f32.mxu0 0.0
        %2266 = vmatmul.mubr.f32.gmra.mxu0 %v909
        %v2267 = vpop.f32.mrf.mxu0
        %v2268 = vadd.f32 0.0, %v2267
        %v2269 = vpop.f32.mrf.mxu0
        %2270 = vmatprep.mubr.f32.mxu0 0.0
        %2271 = vmatmul.mubr.f32.gmra.mxu0 %v912
        %v2272 = vpop.f32.mrf.mxu0
        %v2273 = vadd.f32 0.0, %v2272
        %v2274 = vpop.f32.mrf.mxu0
        %2275 = vmatprep.mubr.f32.mxu0 0.0
        %2276 = vmatmul.mubr.f32.gmra.mxu0 %v914
        %v2277 = vpop.f32.mrf.mxu0
        %v2278 = vadd.f32 0.0, %v2277
        %v2279 = vpop.f32.mrf.mxu0
        %2280 = vmatprep.mubr.f32.mxu0 0.0
        %2281 = vmatmul.mubr.f32.gmra.mxu0 %v917
        %v2282 = vpop.f32.mrf.mxu0
        %v2283 = vadd.f32 0.0, %v2282
        %v2284 = vpop.f32.mrf.mxu0
        %2285 = vmatprep.mubr.f32.mxu0 0.0
        %2286 = vmatmul.mubr.f32.gmra.mxu0 %v919
        %v2287 = vpop.f32.mrf.mxu0
        %v2288 = vadd.f32 0.0, %v2287
        %v2289 = vpop.f32.mrf.mxu0
        %2290 = vmatprep.mubr.f32.mxu0 0.0
        %2291 = vmatmul.mubr.f32.gmra.mxu0 %v922
        %v2292 = vpop.f32.mrf.mxu0
        %v2293 = vadd.f32 0.0, %v2292
        %v2294 = vpop.f32.mrf.mxu0
        %2295 = vmatprep.mubr.f32.mxu0 0.0
        %2296 = vmatmul.mubr.f32.gmra.mxu0 %v924
        %v2297 = vpop.f32.mrf.mxu0
        %v2298 = vadd.f32 0.0, %v2297
        %v2299 = vpop.f32.mrf.mxu0
        %2300 = vmatprep.mubr.f32.mxu0 0.0
        %2301 = vmatmul.mubr.f32.gmra.mxu0 %v927
        %v2302 = vpop.f32.mrf.mxu0
        %v2303 = vadd.f32 0.0, %v2302
        %v2304 = vpop.f32.mrf.mxu0
        %2305 = vmatprep.mubr.f32.mxu0 0.0
        %2306 = vmatmul.mubr.f32.gmra.mxu0 %v929
        %v2307 = vpop.f32.mrf.mxu0
        %v2308 = vadd.f32 0.0, %v2307
        %v2309 = vpop.f32.mrf.mxu0
        %2310 = vmatprep.mubr.f32.mxu0 0.0
        %2311 = vmatmul.mubr.f32.gmra.mxu0 %v932
        %v2312 = vpop.f32.mrf.mxu0
        %v2313 = vadd.f32 0.0, %v2312
        %v2314 = vpop.f32.mrf.mxu0
        %2315 = vmatprep.mubr.f32.mxu0 0.0
        %2316 = vmatmul.mubr.f32.gmra.mxu0 %v934
        %v2317 = vpop.f32.mrf.mxu0
        %v2318 = vadd.f32 0.0, %v2317
        %v2319 = vpop.f32.mrf.mxu0
        %2320 = vmatprep.mubr.f32.mxu0 0.0
        %2321 = vmatmul.mubr.f32.gmra.mxu0 %v937
        %v2322 = vpop.f32.mrf.mxu0
        %v2323 = vadd.f32 0.0, %v2322
        %v2324 = vpop.f32.mrf.mxu0
        %2325 = vmatprep.mubr.f32.mxu0 0.0
        %2326 = vmatmul.mubr.f32.gmra.mxu0 %v939
        %v2327 = vpop.f32.mrf.mxu0
        %v2328 = vadd.f32 0.0, %v2327
        %v2329 = vpop.f32.mrf.mxu0
        %2330 = vmatprep.mubr.f32.mxu0 0.0
        %2331 = vmatmul.mubr.f32.gmra.mxu0 %v942
        %v2332 = vpop.f32.mrf.mxu0
        %v2333 = vadd.f32 0.0, %v2332
        %v2334 = vpop.f32.mrf.mxu0
        %2335 = vmatprep.mubr.f32.mxu0 0.0
        %2336 = vmatmul.mubr.f32.gmra.mxu0 %v944
        %v2337 = vpop.f32.mrf.mxu0
        %v2338 = vadd.f32 0.0, %v2337
        %v2339 = vpop.f32.mrf.mxu0
        %2340 = vmatprep.mubr.f32.mxu0 0.0
        %2341 = vmatmul.mubr.f32.gmra.mxu0 %v947
        %v2342 = vpop.f32.mrf.mxu0
        %v2343 = vadd.f32 0.0, %v2342
        %v2344 = vpop.f32.mrf.mxu0
        %2345 = vmatprep.mubr.f32.mxu0 0.0
        %2346 = vmatmul.mubr.f32.gmra.mxu0 %v949
        %v2347 = vpop.f32.mrf.mxu0
        %v2348 = vadd.f32 0.0, %v2347
        %v2349 = vpop.f32.mrf.mxu0
        %2350 = vmatprep.mubr.f32.mxu0 0.0
        %2351 = vmatmul.mubr.f32.gmra.mxu0 %v2114
        %v2352 = vpop.f32.mrf.mxu0
        %v2353 = vadd.f32 0.0, %v2352
        %v2354 = vpop.f32.mrf.mxu0
        %2355 = vmatprep.mubr.f32.mxu0 0.0
        %2356 = vmatmul.mubr.f32.gmra.mxu0 %v2116
        %v2357 = vpop.f32.mrf.mxu0
        %v2358 = vadd.f32 0.0, %v2357
        %v2359 = vpop.f32.mrf.mxu0
        %2360 = vdwg.mxu0
        %v2361 = vadd.f32 %v2078, %v2203
        %v2362 = vadd.f32 %v2079, %v2208
        %v2363 = vadd.f32 %v2080, %v2213
        %v2364 = vadd.f32 %v2081, %v2218
        %v2365 = vadd.f32 %v2082, %v2223
        %v2366 = vadd.f32 %v2083, %v2228
        %v2367 = vadd.f32 %v2084, %v2233
        %v2368 = vadd.f32 %v2085, %v2238
        %v2369 = vadd.f32 %v2086, %v2243
        %v2370 = vadd.f32 %v2087, %v2248
        %v2371 = vadd.f32 %v2088, %v2253
        %v2372 = vadd.f32 %v2089, %v2258
        %v2373 = vadd.f32 %v2090, %v2263
        %v2374 = vadd.f32 %v2091, %v2268
        %v2375 = vadd.f32 %v2092, %v2273
        %v2376 = vadd.f32 %v2093, %v2278
        %v2377 = vadd.f32 %v2094, %v2283
        %v2378 = vadd.f32 %v2095, %v2288
        %v2379 = vadd.f32 %v2096, %v2293
        %v2380 = vadd.f32 %v2097, %v2298
        %v2381 = vadd.f32 %v2098, %v2303
        %v2382 = vadd.f32 %v2099, %v2308
        %v2383 = vadd.f32 %v2100, %v2313
        %v2384 = vadd.f32 %v2101, %v2318
        %v2385 = vadd.f32 %v2102, %v2323
        %v2386 = vadd.f32 %v2103, %v2328
        %v2387 = vadd.f32 %v2104, %v2333
        %v2388 = vadd.f32 %v2105, %v2338
        %v2389 = vadd.f32 %v2106, %v2343
        %v2390 = vadd.f32 %v2107, %v2348
        %v2391 = vadd.f32 %v2108, %v2353
        %v2392 = vadd.f32 %v2109, %v2358
        %v2393 = vrot.slane %v803, 2
        %v2394 = vrot.slane %v736, 2
        %v2395 = vsel %vm1449, %v2393, %v2394
        %v2396 = vrot.slane %v820, 2
        %v2397 = vsel %vm1449, %v2394, %v2396
        %s2400 = scalar_lea.vmem [#allocation7], 640
        %v2401 = vld [vmem:[%s2400] sm:$0xff]
        %v2402 = vld [vmem:[%s2400 + $0x8] sm:$0xff]
        %v2403 = vld [vmem:[%s2400 + $0x10] sm:$0xff]
        %v2404 = vld [vmem:[%s2400 + $0x18] sm:$0xff]
        %v2405 = vld [vmem:[%s2400 + $0x20] sm:$0xff]
        %v2406 = vld [vmem:[%s2400 + $0x28] sm:$0xff]
        %v2407 = vld [vmem:[%s2400 + $0x30] sm:$0xff]
        %v2408 = vld [vmem:[%s2400 + $0x38] sm:$0xff]
        %v2409 = vld [vmem:[%s2400 + $0x40] sm:$0xff]
        %v2410 = vld [vmem:[%s2400 + $0x48] sm:$0xff]
        %v2411 = vld [vmem:[%s2400 + $0x50] sm:$0xff]
        %v2412 = vld [vmem:[%s2400 + $0x58] sm:$0xff]
        %v2413 = vld [vmem:[%s2400 + $0x60] sm:$0xff]
        %v2414 = vld [vmem:[%s2400 + $0x68] sm:$0xff]
        %v2415 = vld [vmem:[%s2400 + $0x70] sm:$0xff]
        %v2416 = vld [vmem:[%s2400 + $0x78] sm:$0xff]
        %2417 = vmatprep.subr.mxu0 0.0
        %2418 = vmatpush1.msra.mxu0 %v2416
        %2419 = vmatprep.subr.mxu0 0.0
        %2420 = vmatpush1.msra.mxu0 %v2415
        %2421 = vmatprep.subr.mxu0 0.0
        %2422 = vmatpush1.msra.mxu0 %v2414
        %2423 = vmatprep.subr.mxu0 0.0
        %2424 = vmatpush1.msra.mxu0 %v2413
        %2425 = vmatprep.subr.mxu0 0.0
        %2426 = vmatpush1.msra.mxu0 %v2412
        %2427 = vmatprep.subr.mxu0 0.0
        %2428 = vmatpush1.msra.mxu0 %v2411
        %2429 = vmatprep.subr.mxu0 0.0
        %2430 = vmatpush1.msra.mxu0 %v2410
        %2431 = vmatprep.subr.mxu0 0.0
        %2432 = vmatpush1.msra.mxu0 %v2409
        %2433 = vmatprep.subr.mxu0 0.0
        %2434 = vmatpush1.msra.mxu0 %v2408
        %2435 = vmatprep.subr.mxu0 0.0
        %2436 = vmatpush1.msra.mxu0 %v2407
        %2437 = vmatprep.subr.mxu0 0.0
        %2438 = vmatpush1.msra.mxu0 %v2406
        %2439 = vmatprep.subr.mxu0 0.0
        %2440 = vmatpush1.msra.mxu0 %v2405
        %2441 = vmatprep.subr.mxu0 0.0
        %2442 = vmatpush1.msra.mxu0 %v2404
        %2443 = vmatprep.subr.mxu0 0.0
        %2444 = vmatpush1.msra.mxu0 %v2403
        %2445 = vmatprep.subr.mxu0 0.0
        %2446 = vmatpush1.msra.mxu0 %v2402
        %2447 = vmatprep.subr.mxu0 0.0
        %2448 = vmatpush1.msra.mxu0 %v2401
        %2449 = vmatprep.subr.mxu0 0.0
        %2450 = vmatpush2.msra.mxu0 0.0
        %2451 = vmatprep.subr.mxu0 0.0
        %2452 = vmatpush2.msra.mxu0 0.0
        %2453 = vmatprep.subr.mxu0 0.0
        %2454 = vmatpush2.msra.mxu0 0.0
        %2455 = vmatprep.subr.mxu0 0.0
        %2456 = vmatpush2.msra.mxu0 0.0
        %2457 = vmatprep.subr.mxu0 0.0
        %2458 = vmatpush2.msra.mxu0 0.0
        %2459 = vmatprep.subr.mxu0 0.0
        %2460 = vmatpush2.msra.mxu0 0.0
        %2461 = vmatprep.subr.mxu0 0.0
        %2462 = vmatpush2.msra.mxu0 0.0
        %2463 = vmatprep.subr.mxu0 0.0
        %2464 = vmatpush2.msra.mxu0 0.0
        %2465 = vmatprep.subr.mxu0 0.0
        %2466 = vmatpush2.msra.mxu0 0.0
        %2467 = vmatprep.subr.mxu0 0.0
        %2468 = vmatpush2.msra.mxu0 0.0
        %2469 = vmatprep.subr.mxu0 0.0
        %2470 = vmatpush2.msra.mxu0 0.0
        %2471 = vmatprep.subr.mxu0 0.0
        %2472 = vmatpush2.msra.mxu0 0.0
        %2473 = vmatprep.subr.mxu0 0.0
        %2474 = vmatpush2.msra.mxu0 0.0
        %2475 = vmatprep.subr.mxu0 0.0
        %2476 = vmatpush2.msra.mxu0 0.0
        %2477 = vmatprep.subr.mxu0 0.0
        %2478 = vmatpush2.msra.mxu0 0.0
        %2479 = vmatprep.subr.mxu0 0.0
        %2480 = vmatpush2.msra.mxu0 0.0
        %2481 = vmatprep.mubr.f32.mxu0 0.0
        %2482 = vmatmul.mubr.f32.gmra.mxu0 %v1457
        %v2483 = vpop.f32.mrf.mxu0
        %v2484 = vadd.f32 0.0, %v2483
        %v2485 = vpop.f32.mrf.mxu0
        %2486 = vmatprep.mubr.f32.mxu0 0.0
        %2487 = vmatmul.mubr.f32.gmra.mxu0 %v1459
        %v2488 = vpop.f32.mrf.mxu0
        %v2489 = vadd.f32 0.0, %v2488
        %v2490 = vpop.f32.mrf.mxu0
        %2491 = vmatprep.mubr.f32.mxu0 0.0
        %2492 = vmatmul.mubr.f32.gmra.mxu0 %v1462
        %v2493 = vpop.f32.mrf.mxu0
        %v2494 = vadd.f32 0.0, %v2493
        %v2495 = vpop.f32.mrf.mxu0
        %2496 = vmatprep.mubr.f32.mxu0 0.0
        %2497 = vmatmul.mubr.f32.gmra.mxu0 %v1464
        %v2498 = vpop.f32.mrf.mxu0
        %v2499 = vadd.f32 0.0, %v2498
        %v2500 = vpop.f32.mrf.mxu0
        %2501 = vmatprep.mubr.f32.mxu0 0.0
        %2502 = vmatmul.mubr.f32.gmra.mxu0 %v1467
        %v2503 = vpop.f32.mrf.mxu0
        %v2504 = vadd.f32 0.0, %v2503
        %v2505 = vpop.f32.mrf.mxu0
        %2506 = vmatprep.mubr.f32.mxu0 0.0
        %2507 = vmatmul.mubr.f32.gmra.mxu0 %v1469
        %v2508 = vpop.f32.mrf.mxu0
        %v2509 = vadd.f32 0.0, %v2508
        %v2510 = vpop.f32.mrf.mxu0
        %2511 = vmatprep.mubr.f32.mxu0 0.0
        %2512 = vmatmul.mubr.f32.gmra.mxu0 %v1472
        %v2513 = vpop.f32.mrf.mxu0
        %v2514 = vadd.f32 0.0, %v2513
        %v2515 = vpop.f32.mrf.mxu0
        %2516 = vmatprep.mubr.f32.mxu0 0.0
        %2517 = vmatmul.mubr.f32.gmra.mxu0 %v1474
        %v2518 = vpop.f32.mrf.mxu0
        %v2519 = vadd.f32 0.0, %v2518
        %v2520 = vpop.f32.mrf.mxu0
        %2521 = vmatprep.mubr.f32.mxu0 0.0
        %2522 = vmatmul.mubr.f32.gmra.mxu0 %v1477
        %v2523 = vpop.f32.mrf.mxu0
        %v2524 = vadd.f32 0.0, %v2523
        %v2525 = vpop.f32.mrf.mxu0
        %2526 = vmatprep.mubr.f32.mxu0 0.0
        %2527 = vmatmul.mubr.f32.gmra.mxu0 %v1479
        %v2528 = vpop.f32.mrf.mxu0
        %v2529 = vadd.f32 0.0, %v2528
        %v2530 = vpop.f32.mrf.mxu0
        %2531 = vmatprep.mubr.f32.mxu0 0.0
        %2532 = vmatmul.mubr.f32.gmra.mxu0 %v1482
        %v2533 = vpop.f32.mrf.mxu0
        %v2534 = vadd.f32 0.0, %v2533
        %v2535 = vpop.f32.mrf.mxu0
        %2536 = vmatprep.mubr.f32.mxu0 0.0
        %2537 = vmatmul.mubr.f32.gmra.mxu0 %v1484
        %v2538 = vpop.f32.mrf.mxu0
        %v2539 = vadd.f32 0.0, %v2538
        %v2540 = vpop.f32.mrf.mxu0
        %2541 = vmatprep.mubr.f32.mxu0 0.0
        %2542 = vmatmul.mubr.f32.gmra.mxu0 %v1487
        %v2543 = vpop.f32.mrf.mxu0
        %v2544 = vadd.f32 0.0, %v2543
        %v2545 = vpop.f32.mrf.mxu0
        %2546 = vmatprep.mubr.f32.mxu0 0.0
        %2547 = vmatmul.mubr.f32.gmra.mxu0 %v1489
        %v2548 = vpop.f32.mrf.mxu0
        %v2549 = vadd.f32 0.0, %v2548
        %v2550 = vpop.f32.mrf.mxu0
        %2551 = vmatprep.mubr.f32.mxu0 0.0
        %2552 = vmatmul.mubr.f32.gmra.mxu0 %v1492
        %v2553 = vpop.f32.mrf.mxu0
        %v2554 = vadd.f32 0.0, %v2553
        %v2555 = vpop.f32.mrf.mxu0
        %2556 = vmatprep.mubr.f32.mxu0 0.0
        %2557 = vmatmul.mubr.f32.gmra.mxu0 %v1494
        %v2558 = vpop.f32.mrf.mxu0
        %v2559 = vadd.f32 0.0, %v2558
        %v2560 = vpop.f32.mrf.mxu0
        %2561 = vmatprep.mubr.f32.mxu0 0.0
        %2562 = vmatmul.mubr.f32.gmra.mxu0 %v1497
        %v2563 = vpop.f32.mrf.mxu0
        %v2564 = vadd.f32 0.0, %v2563
        %v2565 = vpop.f32.mrf.mxu0
        %2566 = vmatprep.mubr.f32.mxu0 0.0
        %2567 = vmatmul.mubr.f32.gmra.mxu0 %v1499
        %v2568 = vpop.f32.mrf.mxu0
        %v2569 = vadd.f32 0.0, %v2568
        %v2570 = vpop.f32.mrf.mxu0
        %2571 = vmatprep.mubr.f32.mxu0 0.0
        %2572 = vmatmul.mubr.f32.gmra.mxu0 %v1502
        %v2573 = vpop.f32.mrf.mxu0
        %v2574 = vadd.f32 0.0, %v2573
        %v2575 = vpop.f32.mrf.mxu0
        %2576 = vmatprep.mubr.f32.mxu0 0.0
        %2577 = vmatmul.mubr.f32.gmra.mxu0 %v1504
        %v2578 = vpop.f32.mrf.mxu0
        %v2579 = vadd.f32 0.0, %v2578
        %v2580 = vpop.f32.mrf.mxu0
        %2581 = vmatprep.mubr.f32.mxu0 0.0
        %2582 = vmatmul.mubr.f32.gmra.mxu0 %v1507
        %v2583 = vpop.f32.mrf.mxu0
        %v2584 = vadd.f32 0.0, %v2583
        %v2585 = vpop.f32.mrf.mxu0
        %2586 = vmatprep.mubr.f32.mxu0 0.0
        %2587 = vmatmul.mubr.f32.gmra.mxu0 %v1509
        %v2588 = vpop.f32.mrf.mxu0
        %v2589 = vadd.f32 0.0, %v2588
        %v2590 = vpop.f32.mrf.mxu0
        %2591 = vmatprep.mubr.f32.mxu0 0.0
        %2592 = vmatmul.mubr.f32.gmra.mxu0 %v1512
        %v2593 = vpop.f32.mrf.mxu0
        %v2594 = vadd.f32 0.0, %v2593
        %v2595 = vpop.f32.mrf.mxu0
        %2596 = vmatprep.mubr.f32.mxu0 0.0
        %2597 = vmatmul.mubr.f32.gmra.mxu0 %v1514
        %v2598 = vpop.f32.mrf.mxu0
        %v2599 = vadd.f32 0.0, %v2598
        %v2600 = vpop.f32.mrf.mxu0
        %2601 = vmatprep.mubr.f32.mxu0 0.0
        %2602 = vmatmul.mubr.f32.gmra.mxu0 %v1517
        %v2603 = vpop.f32.mrf.mxu0
        %v2604 = vadd.f32 0.0, %v2603
        %v2605 = vpop.f32.mrf.mxu0
        %2606 = vmatprep.mubr.f32.mxu0 0.0
        %2607 = vmatmul.mubr.f32.gmra.mxu0 %v1519
        %v2608 = vpop.f32.mrf.mxu0
        %v2609 = vadd.f32 0.0, %v2608
        %v2610 = vpop.f32.mrf.mxu0
        %2611 = vmatprep.mubr.f32.mxu0 0.0
        %2612 = vmatmul.mubr.f32.gmra.mxu0 %v1522
        %v2613 = vpop.f32.mrf.mxu0
        %v2614 = vadd.f32 0.0, %v2613
        %v2615 = vpop.f32.mrf.mxu0
        %2616 = vmatprep.mubr.f32.mxu0 0.0
        %2617 = vmatmul.mubr.f32.gmra.mxu0 %v1524
        %v2618 = vpop.f32.mrf.mxu0
        %v2619 = vadd.f32 0.0, %v2618
        %v2620 = vpop.f32.mrf.mxu0
        %2621 = vmatprep.mubr.f32.mxu0 0.0
        %2622 = vmatmul.mubr.f32.gmra.mxu0 %v1527
        %v2623 = vpop.f32.mrf.mxu0
        %v2624 = vadd.f32 0.0, %v2623
        %v2625 = vpop.f32.mrf.mxu0
        %2626 = vmatprep.mubr.f32.mxu0 0.0
        %2627 = vmatmul.mubr.f32.gmra.mxu0 %v1529
        %v2628 = vpop.f32.mrf.mxu0
        %v2629 = vadd.f32 0.0, %v2628
        %v2630 = vpop.f32.mrf.mxu0
        %2631 = vmatprep.mubr.f32.mxu0 0.0
        %2632 = vmatmul.mubr.f32.gmra.mxu0 %v2395
        %v2633 = vpop.f32.mrf.mxu0
        %v2634 = vadd.f32 0.0, %v2633
        %v2635 = vpop.f32.mrf.mxu0
        %2636 = vmatprep.mubr.f32.mxu0 0.0
        %2637 = vmatmul.mubr.f32.gmra.mxu0 %v2397
        %v2638 = vpop.f32.mrf.mxu0
        %v2639 = vadd.f32 0.0, %v2638
        %v2640 = vpop.f32.mrf.mxu0
        %2641 = vdwg.mxu0
        %v2642 = vadd.f32 %v2361, %v2484
        %v2643 = vadd.f32 %v2362, %v2489
        %v2644 = vadd.f32 %v2363, %v2494
        %v2645 = vadd.f32 %v2364, %v2499
        %v2646 = vadd.f32 %v2365, %v2504
        %v2647 = vadd.f32 %v2366, %v2509
        %v2648 = vadd.f32 %v2367, %v2514
        %v2649 = vadd.f32 %v2368, %v2519
        %v2650 = vadd.f32 %v2369, %v2524
        %v2651 = vadd.f32 %v2370, %v2529
        %v2652 = vadd.f32 %v2371, %v2534
        %v2653 = vadd.f32 %v2372, %v2539
        %v2654 = vadd.f32 %v2373, %v2544
        %v2655 = vadd.f32 %v2374, %v2549
        %v2656 = vadd.f32 %v2375, %v2554
        %v2657 = vadd.f32 %v2376, %v2559
        %v2658 = vadd.f32 %v2377, %v2564
        %v2659 = vadd.f32 %v2378, %v2569
        %v2660 = vadd.f32 %v2379, %v2574
        %v2661 = vadd.f32 %v2380, %v2579
        %v2662 = vadd.f32 %v2381, %v2584
        %v2663 = vadd.f32 %v2382, %v2589
        %v2664 = vadd.f32 %v2383, %v2594
        %v2665 = vadd.f32 %v2384, %v2599
        %v2666 = vadd.f32 %v2385, %v2604
        %v2667 = vadd.f32 %v2386, %v2609
        %v2668 = vadd.f32 %v2387, %v2614
        %v2669 = vadd.f32 %v2388, %v2619
        %v2670 = vadd.f32 %v2389, %v2624
        %v2671 = vadd.f32 %v2390, %v2629
        %v2672 = vadd.f32 %v2391, %v2634
        %v2673 = vadd.f32 %v2392, %v2639
        %s2674 = scalar_lea.vmem [#allocation7], 768
        %v2675 = vld [vmem:[%s2674] sm:$0xff]
        %v2676 = vld [vmem:[%s2674 + $0x8] sm:$0xff]
        %v2677 = vld [vmem:[%s2674 + $0x10] sm:$0xff]
        %v2678 = vld [vmem:[%s2674 + $0x18] sm:$0xff]
        %v2679 = vld [vmem:[%s2674 + $0x20] sm:$0xff]
        %v2680 = vld [vmem:[%s2674 + $0x28] sm:$0xff]
        %v2681 = vld [vmem:[%s2674 + $0x30] sm:$0xff]
        %v2682 = vld [vmem:[%s2674 + $0x38] sm:$0xff]
        %v2683 = vld [vmem:[%s2674 + $0x40] sm:$0xff]
        %v2684 = vld [vmem:[%s2674 + $0x48] sm:$0xff]
        %v2685 = vld [vmem:[%s2674 + $0x50] sm:$0xff]
        %v2686 = vld [vmem:[%s2674 + $0x58] sm:$0xff]
        %v2687 = vld [vmem:[%s2674 + $0x60] sm:$0xff]
        %v2688 = vld [vmem:[%s2674 + $0x68] sm:$0xff]
        %v2689 = vld [vmem:[%s2674 + $0x70] sm:$0xff]
        %v2690 = vld [vmem:[%s2674 + $0x78] sm:$0xff]
        %2691 = vmatprep.subr.mxu0 0.0
        %2692 = vmatpush1.msra.mxu0 %v2690
        %2693 = vmatprep.subr.mxu0 0.0
        %2694 = vmatpush1.msra.mxu0 %v2689
        %2695 = vmatprep.subr.mxu0 0.0
        %2696 = vmatpush1.msra.mxu0 %v2688
        %2697 = vmatprep.subr.mxu0 0.0
        %2698 = vmatpush1.msra.mxu0 %v2687
        %2699 = vmatprep.subr.mxu0 0.0
        %2700 = vmatpush1.msra.mxu0 %v2686
        %2701 = vmatprep.subr.mxu0 0.0
        %2702 = vmatpush1.msra.mxu0 %v2685
        %2703 = vmatprep.subr.mxu0 0.0
        %2704 = vmatpush1.msra.mxu0 %v2684
        %2705 = vmatprep.subr.mxu0 0.0
        %2706 = vmatpush1.msra.mxu0 %v2683
        %2707 = vmatprep.subr.mxu0 0.0
        %2708 = vmatpush1.msra.mxu0 %v2682
        %2709 = vmatprep.subr.mxu0 0.0
        %2710 = vmatpush1.msra.mxu0 %v2681
        %2711 = vmatprep.subr.mxu0 0.0
        %2712 = vmatpush1.msra.mxu0 %v2680
        %2713 = vmatprep.subr.mxu0 0.0
        %2714 = vmatpush1.msra.mxu0 %v2679
        %2715 = vmatprep.subr.mxu0 0.0
        %2716 = vmatpush1.msra.mxu0 %v2678
        %2717 = vmatprep.subr.mxu0 0.0
        %2718 = vmatpush1.msra.mxu0 %v2677
        %2719 = vmatprep.subr.mxu0 0.0
        %2720 = vmatpush1.msra.mxu0 %v2676
        %2721 = vmatprep.subr.mxu0 0.0
        %2722 = vmatpush1.msra.mxu0 %v2675
        %2723 = vmatprep.subr.mxu0 0.0
        %2724 = vmatpush2.msra.mxu0 0.0
        %2725 = vmatprep.subr.mxu0 0.0
        %2726 = vmatpush2.msra.mxu0 0.0
        %2727 = vmatprep.subr.mxu0 0.0
        %2728 = vmatpush2.msra.mxu0 0.0
        %2729 = vmatprep.subr.mxu0 0.0
        %2730 = vmatpush2.msra.mxu0 0.0
        %2731 = vmatprep.subr.mxu0 0.0
        %2732 = vmatpush2.msra.mxu0 0.0
        %2733 = vmatprep.subr.mxu0 0.0
        %2734 = vmatpush2.msra.mxu0 0.0
        %2735 = vmatprep.subr.mxu0 0.0
        %2736 = vmatpush2.msra.mxu0 0.0
        %2737 = vmatprep.subr.mxu0 0.0
        %2738 = vmatpush2.msra.mxu0 0.0
        %2739 = vmatprep.subr.mxu0 0.0
        %2740 = vmatpush2.msra.mxu0 0.0
        %2741 = vmatprep.subr.mxu0 0.0
        %2742 = vmatpush2.msra.mxu0 0.0
        %2743 = vmatprep.subr.mxu0 0.0
        %2744 = vmatpush2.msra.mxu0 0.0
        %2745 = vmatprep.subr.mxu0 0.0
        %2746 = vmatpush2.msra.mxu0 0.0
        %2747 = vmatprep.subr.mxu0 0.0
        %2748 = vmatpush2.msra.mxu0 0.0
        %2749 = vmatprep.subr.mxu0 0.0
        %2750 = vmatpush2.msra.mxu0 0.0
        %2751 = vmatprep.subr.mxu0 0.0
        %2752 = vmatpush2.msra.mxu0 0.0
        %2753 = vmatprep.subr.mxu0 0.0
        %2754 = vmatpush2.msra.mxu0 0.0
        %2755 = vmatprep.mubr.f32.mxu0 0.0
        %2756 = vmatmul.mubr.f32.gmra.mxu0 %v789
        %v2757 = vpop.f32.mrf.mxu0
        %v2758 = vadd.f32 0.0, %v2757
        %v2759 = vpop.f32.mrf.mxu0
        %2760 = vmatprep.mubr.f32.mxu0 0.0
        %2761 = vmatmul.mubr.f32.gmra.mxu0 %v694
        %v2762 = vpop.f32.mrf.mxu0
        %v2763 = vadd.f32 0.0, %v2762
        %v2764 = vpop.f32.mrf.mxu0
        %2765 = vmatprep.mubr.f32.mxu0 0.0
        %2766 = vmatmul.mubr.f32.gmra.mxu0 %v790
        %v2767 = vpop.f32.mrf.mxu0
        %v2768 = vadd.f32 0.0, %v2767
        %v2769 = vpop.f32.mrf.mxu0
        %2770 = vmatprep.mubr.f32.mxu0 0.0
        %2771 = vmatmul.mubr.f32.gmra.mxu0 %v697
        %v2772 = vpop.f32.mrf.mxu0
        %v2773 = vadd.f32 0.0, %v2772
        %v2774 = vpop.f32.mrf.mxu0
        %2775 = vmatprep.mubr.f32.mxu0 0.0
        %2776 = vmatmul.mubr.f32.gmra.mxu0 %v791
        %v2777 = vpop.f32.mrf.mxu0
        %v2778 = vadd.f32 0.0, %v2777
        %v2779 = vpop.f32.mrf.mxu0
        %2780 = vmatprep.mubr.f32.mxu0 0.0
        %2781 = vmatmul.mubr.f32.gmra.mxu0 %v700
        %v2782 = vpop.f32.mrf.mxu0
        %v2783 = vadd.f32 0.0, %v2782
        %v2784 = vpop.f32.mrf.mxu0
        %2785 = vmatprep.mubr.f32.mxu0 0.0
        %2786 = vmatmul.mubr.f32.gmra.mxu0 %v792
        %v2787 = vpop.f32.mrf.mxu0
        %v2788 = vadd.f32 0.0, %v2787
        %v2789 = vpop.f32.mrf.mxu0
        %2790 = vmatprep.mubr.f32.mxu0 0.0
        %2791 = vmatmul.mubr.f32.gmra.mxu0 %v703
        %v2792 = vpop.f32.mrf.mxu0
        %v2793 = vadd.f32 0.0, %v2792
        %v2794 = vpop.f32.mrf.mxu0
        %2795 = vmatprep.mubr.f32.mxu0 0.0
        %2796 = vmatmul.mubr.f32.gmra.mxu0 %v793
        %v2797 = vpop.f32.mrf.mxu0
        %v2798 = vadd.f32 0.0, %v2797
        %v2799 = vpop.f32.mrf.mxu0
        %2800 = vmatprep.mubr.f32.mxu0 0.0
        %2801 = vmatmul.mubr.f32.gmra.mxu0 %v706
        %v2802 = vpop.f32.mrf.mxu0
        %v2803 = vadd.f32 0.0, %v2802
        %v2804 = vpop.f32.mrf.mxu0
        %2805 = vmatprep.mubr.f32.mxu0 0.0
        %2806 = vmatmul.mubr.f32.gmra.mxu0 %v794
        %v2807 = vpop.f32.mrf.mxu0
        %v2808 = vadd.f32 0.0, %v2807
        %v2809 = vpop.f32.mrf.mxu0
        %2810 = vmatprep.mubr.f32.mxu0 0.0
        %2811 = vmatmul.mubr.f32.gmra.mxu0 %v709
        %v2812 = vpop.f32.mrf.mxu0
        %v2813 = vadd.f32 0.0, %v2812
        %v2814 = vpop.f32.mrf.mxu0
        %2815 = vmatprep.mubr.f32.mxu0 0.0
        %2816 = vmatmul.mubr.f32.gmra.mxu0 %v795
        %v2817 = vpop.f32.mrf.mxu0
        %v2818 = vadd.f32 0.0, %v2817
        %v2819 = vpop.f32.mrf.mxu0
        %2820 = vmatprep.mubr.f32.mxu0 0.0
        %2821 = vmatmul.mubr.f32.gmra.mxu0 %v712
        %v2822 = vpop.f32.mrf.mxu0
        %v2823 = vadd.f32 0.0, %v2822
        %v2824 = vpop.f32.mrf.mxu0
        %2825 = vmatprep.mubr.f32.mxu0 0.0
        %2826 = vmatmul.mubr.f32.gmra.mxu0 %v796
        %v2827 = vpop.f32.mrf.mxu0
        %v2828 = vadd.f32 0.0, %v2827
        %v2829 = vpop.f32.mrf.mxu0
        %2830 = vmatprep.mubr.f32.mxu0 0.0
        %2831 = vmatmul.mubr.f32.gmra.mxu0 %v715
        %v2832 = vpop.f32.mrf.mxu0
        %v2833 = vadd.f32 0.0, %v2832
        %v2834 = vpop.f32.mrf.mxu0
        %2835 = vmatprep.mubr.f32.mxu0 0.0
        %2836 = vmatmul.mubr.f32.gmra.mxu0 %v797
        %v2837 = vpop.f32.mrf.mxu0
        %v2838 = vadd.f32 0.0, %v2837
        %v2839 = vpop.f32.mrf.mxu0
        %2840 = vmatprep.mubr.f32.mxu0 0.0
        %2841 = vmatmul.mubr.f32.gmra.mxu0 %v718
        %v2842 = vpop.f32.mrf.mxu0
        %v2843 = vadd.f32 0.0, %v2842
        %v2844 = vpop.f32.mrf.mxu0
        %2845 = vmatprep.mubr.f32.mxu0 0.0
        %2846 = vmatmul.mubr.f32.gmra.mxu0 %v798
        %v2847 = vpop.f32.mrf.mxu0
        %v2848 = vadd.f32 0.0, %v2847
        %v2849 = vpop.f32.mrf.mxu0
        %2850 = vmatprep.mubr.f32.mxu0 0.0
        %2851 = vmatmul.mubr.f32.gmra.mxu0 %v721
        %v2852 = vpop.f32.mrf.mxu0
        %v2853 = vadd.f32 0.0, %v2852
        %v2854 = vpop.f32.mrf.mxu0
        %2855 = vmatprep.mubr.f32.mxu0 0.0
        %2856 = vmatmul.mubr.f32.gmra.mxu0 %v799
        %v2857 = vpop.f32.mrf.mxu0
        %v2858 = vadd.f32 0.0, %v2857
        %v2859 = vpop.f32.mrf.mxu0
        %2860 = vmatprep.mubr.f32.mxu0 0.0
        %2861 = vmatmul.mubr.f32.gmra.mxu0 %v724
        %v2862 = vpop.f32.mrf.mxu0
        %v2863 = vadd.f32 0.0, %v2862
        %v2864 = vpop.f32.mrf.mxu0
        %2865 = vmatprep.mubr.f32.mxu0 0.0
        %2866 = vmatmul.mubr.f32.gmra.mxu0 %v800
        %v2867 = vpop.f32.mrf.mxu0
        %v2868 = vadd.f32 0.0, %v2867
        %v2869 = vpop.f32.mrf.mxu0
        %2870 = vmatprep.mubr.f32.mxu0 0.0
        %2871 = vmatmul.mubr.f32.gmra.mxu0 %v727
        %v2872 = vpop.f32.mrf.mxu0
        %v2873 = vadd.f32 0.0, %v2872
        %v2874 = vpop.f32.mrf.mxu0
        %2875 = vmatprep.mubr.f32.mxu0 0.0
        %2876 = vmatmul.mubr.f32.gmra.mxu0 %v801
        %v2877 = vpop.f32.mrf.mxu0
        %v2878 = vadd.f32 0.0, %v2877
        %v2879 = vpop.f32.mrf.mxu0
        %2880 = vmatprep.mubr.f32.mxu0 0.0
        %2881 = vmatmul.mubr.f32.gmra.mxu0 %v730
        %v2882 = vpop.f32.mrf.mxu0
        %v2883 = vadd.f32 0.0, %v2882
        %v2884 = vpop.f32.mrf.mxu0
        %2885 = vmatprep.mubr.f32.mxu0 0.0
        %2886 = vmatmul.mubr.f32.gmra.mxu0 %v802
        %v2887 = vpop.f32.mrf.mxu0
        %v2888 = vadd.f32 0.0, %v2887
        %v2889 = vpop.f32.mrf.mxu0
        %2890 = vmatprep.mubr.f32.mxu0 0.0
        %2891 = vmatmul.mubr.f32.gmra.mxu0 %v733
        %v2892 = vpop.f32.mrf.mxu0
        %v2893 = vadd.f32 0.0, %v2892
        %v2894 = vpop.f32.mrf.mxu0
        %2895 = vmatprep.mubr.f32.mxu0 0.0
        %2896 = vmatmul.mubr.f32.gmra.mxu0 %v803
        %v2897 = vpop.f32.mrf.mxu0
        %v2898 = vadd.f32 0.0, %v2897
        %v2899 = vpop.f32.mrf.mxu0
        %2900 = vmatprep.mubr.f32.mxu0 0.0
        %2901 = vmatmul.mubr.f32.gmra.mxu0 %v736
        %v2902 = vpop.f32.mrf.mxu0
        %v2903 = vadd.f32 0.0, %v2902
        %v2904 = vpop.f32.mrf.mxu0
        %2905 = vmatprep.mubr.f32.mxu0 0.0
        %2906 = vmatmul.mubr.f32.gmra.mxu0 %v787
        %v2907 = vpop.f32.mrf.mxu0
        %v2908 = vadd.f32 0.0, %v2907
        %v2909 = vpop.f32.mrf.mxu0
        %2910 = vmatprep.mubr.f32.mxu0 0.0
        %2911 = vmatmul.mubr.f32.gmra.mxu0 %v688
        %v2912 = vpop.f32.mrf.mxu0
        %v2913 = vadd.f32 0.0, %v2912
        %v2914 = vpop.f32.mrf.mxu0
        %2915 = vdwg.mxu0
        %v2916 = vadd.f32 %v2642, %v2758
        %v2917 = vadd.f32 %v2643, %v2763
        %v2918 = vadd.f32 %v2644, %v2768
        %v2919 = vadd.f32 %v2645, %v2773
        %v2920 = vadd.f32 %v2646, %v2778
        %v2921 = vadd.f32 %v2647, %v2783
        %v2922 = vadd.f32 %v2648, %v2788
        %v2923 = vadd.f32 %v2649, %v2793
        %v2924 = vadd.f32 %v2650, %v2798
        %v2925 = vadd.f32 %v2651, %v2803
        %v2926 = vadd.f32 %v2652, %v2808
        %v2927 = vadd.f32 %v2653, %v2813
        %v2928 = vadd.f32 %v2654, %v2818
        %v2929 = vadd.f32 %v2655, %v2823
        %v2930 = vadd.f32 %v2656, %v2828
        %v2931 = vadd.f32 %v2657, %v2833
        %v2932 = vadd.f32 %v2658, %v2838
        %v2933 = vadd.f32 %v2659, %v2843
        %v2934 = vadd.f32 %v2660, %v2848
        %v2935 = vadd.f32 %v2661, %v2853
        %v2936 = vadd.f32 %v2662, %v2858
        %v2937 = vadd.f32 %v2663, %v2863
        %v2938 = vadd.f32 %v2664, %v2868
        %v2939 = vadd.f32 %v2665, %v2873
        %v2940 = vadd.f32 %v2666, %v2878
        %v2941 = vadd.f32 %v2667, %v2883
        %v2942 = vadd.f32 %v2668, %v2888
        %v2943 = vadd.f32 %v2669, %v2893
        %v2944 = vadd.f32 %v2670, %v2898
        %v2945 = vadd.f32 %v2671, %v2903
        %v2946 = vadd.f32 %v2672, %v2908
        %v2947 = vadd.f32 %v2673, %v2913
        %s2948 = scalar_lea.vmem [#allocation7], 896
        %v2949 = vld [vmem:[%s2948] sm:$0xff]
        %v2950 = vld [vmem:[%s2948 + $0x8] sm:$0xff]
        %v2951 = vld [vmem:[%s2948 + $0x10] sm:$0xff]
        %v2952 = vld [vmem:[%s2948 + $0x18] sm:$0xff]
        %v2953 = vld [vmem:[%s2948 + $0x20] sm:$0xff]
        %v2954 = vld [vmem:[%s2948 + $0x28] sm:$0xff]
        %v2955 = vld [vmem:[%s2948 + $0x30] sm:$0xff]
        %v2956 = vld [vmem:[%s2948 + $0x38] sm:$0xff]
        %v2957 = vld [vmem:[%s2948 + $0x40] sm:$0xff]
        %v2958 = vld [vmem:[%s2948 + $0x48] sm:$0xff]
        %v2959 = vld [vmem:[%s2948 + $0x50] sm:$0xff]
        %v2960 = vld [vmem:[%s2948 + $0x58] sm:$0xff]
        %v2961 = vld [vmem:[%s2948 + $0x60] sm:$0xff]
        %v2962 = vld [vmem:[%s2948 + $0x68] sm:$0xff]
        %v2963 = vld [vmem:[%s2948 + $0x70] sm:$0xff]
        %v2964 = vld [vmem:[%s2948 + $0x78] sm:$0xff]
        %2965 = vmatprep.subr.mxu0 0.0
        %2966 = vmatpush1.msra.mxu0 %v2964
        %2967 = vmatprep.subr.mxu0 0.0
        %2968 = vmatpush1.msra.mxu0 %v2963
        %2969 = vmatprep.subr.mxu0 0.0
        %2970 = vmatpush1.msra.mxu0 %v2962
        %2971 = vmatprep.subr.mxu0 0.0
        %2972 = vmatpush1.msra.mxu0 %v2961
        %2973 = vmatprep.subr.mxu0 0.0
        %2974 = vmatpush1.msra.mxu0 %v2960
        %2975 = vmatprep.subr.mxu0 0.0
        %2976 = vmatpush1.msra.mxu0 %v2959
        %2977 = vmatprep.subr.mxu0 0.0
        %2978 = vmatpush1.msra.mxu0 %v2958
        %2979 = vmatprep.subr.mxu0 0.0
        %2980 = vmatpush1.msra.mxu0 %v2957
        %2981 = vmatprep.subr.mxu0 0.0
        %2982 = vmatpush1.msra.mxu0 %v2956
        %2983 = vmatprep.subr.mxu0 0.0
        %2984 = vmatpush1.msra.mxu0 %v2955
        %2985 = vmatprep.subr.mxu0 0.0
        %2986 = vmatpush1.msra.mxu0 %v2954
        %2987 = vmatprep.subr.mxu0 0.0
        %2988 = vmatpush1.msra.mxu0 %v2953
        %2989 = vmatprep.subr.mxu0 0.0
        %2990 = vmatpush1.msra.mxu0 %v2952
        %2991 = vmatprep.subr.mxu0 0.0
        %2992 = vmatpush1.msra.mxu0 %v2951
        %2993 = vmatprep.subr.mxu0 0.0
        %2994 = vmatpush1.msra.mxu0 %v2950
        %2995 = vmatprep.subr.mxu0 0.0
        %2996 = vmatpush1.msra.mxu0 %v2949
        %2997 = vmatprep.subr.mxu0 0.0
        %2998 = vmatpush2.msra.mxu0 0.0
        %2999 = vmatprep.subr.mxu0 0.0
        %3000 = vmatpush2.msra.mxu0 0.0
        %3001 = vmatprep.subr.mxu0 0.0
        %3002 = vmatpush2.msra.mxu0 0.0
        %3003 = vmatprep.subr.mxu0 0.0
        %3004 = vmatpush2.msra.mxu0 0.0
        %3005 = vmatprep.subr.mxu0 0.0
        %3006 = vmatpush2.msra.mxu0 0.0
        %3007 = vmatprep.subr.mxu0 0.0
        %3008 = vmatpush2.msra.mxu0 0.0
        %3009 = vmatprep.subr.mxu0 0.0
        %3010 = vmatpush2.msra.mxu0 0.0
        %3011 = vmatprep.subr.mxu0 0.0
        %3012 = vmatpush2.msra.mxu0 0.0
        %3013 = vmatprep.subr.mxu0 0.0
        %3014 = vmatpush2.msra.mxu0 0.0
        %3015 = vmatprep.subr.mxu0 0.0
        %3016 = vmatpush2.msra.mxu0 0.0
        %3017 = vmatprep.subr.mxu0 0.0
        %3018 = vmatpush2.msra.mxu0 0.0
        %3019 = vmatprep.subr.mxu0 0.0
        %3020 = vmatpush2.msra.mxu0 0.0
        %3021 = vmatprep.subr.mxu0 0.0
        %3022 = vmatpush2.msra.mxu0 0.0
        %3023 = vmatprep.subr.mxu0 0.0
        %3024 = vmatpush2.msra.mxu0 0.0
        %3025 = vmatprep.subr.mxu0 0.0
        %3026 = vmatpush2.msra.mxu0 0.0
        %3027 = vmatprep.subr.mxu0 0.0
        %3028 = vmatpush2.msra.mxu0 0.0
        %3029 = vmatprep.mubr.f32.mxu0 0.0
        %3030 = vmatmul.mubr.f32.gmra.mxu0 %v882
        %v3031 = vpop.f32.mrf.mxu0
        %v3032 = vadd.f32 0.0, %v3031
        %v3033 = vpop.f32.mrf.mxu0
        %3034 = vmatprep.mubr.f32.mxu0 0.0
        %3035 = vmatmul.mubr.f32.gmra.mxu0 %v884
        %v3036 = vpop.f32.mrf.mxu0
        %v3037 = vadd.f32 0.0, %v3036
        %v3038 = vpop.f32.mrf.mxu0
        %3039 = vmatprep.mubr.f32.mxu0 0.0
        %3040 = vmatmul.mubr.f32.gmra.mxu0 %v887
        %v3041 = vpop.f32.mrf.mxu0
        %v3042 = vadd.f32 0.0, %v3041
        %v3043 = vpop.f32.mrf.mxu0
        %3044 = vmatprep.mubr.f32.mxu0 0.0
        %3045 = vmatmul.mubr.f32.gmra.mxu0 %v889
        %v3046 = vpop.f32.mrf.mxu0
        %v3047 = vadd.f32 0.0, %v3046
        %v3048 = vpop.f32.mrf.mxu0
        %3049 = vmatprep.mubr.f32.mxu0 0.0
        %3050 = vmatmul.mubr.f32.gmra.mxu0 %v892
        %v3051 = vpop.f32.mrf.mxu0
        %v3052 = vadd.f32 0.0, %v3051
        %v3053 = vpop.f32.mrf.mxu0
        %3054 = vmatprep.mubr.f32.mxu0 0.0
        %3055 = vmatmul.mubr.f32.gmra.mxu0 %v894
        %v3056 = vpop.f32.mrf.mxu0
        %v3057 = vadd.f32 0.0, %v3056
        %v3058 = vpop.f32.mrf.mxu0
        %3059 = vmatprep.mubr.f32.mxu0 0.0
        %3060 = vmatmul.mubr.f32.gmra.mxu0 %v897
        %v3061 = vpop.f32.mrf.mxu0
        %v3062 = vadd.f32 0.0, %v3061
        %v3063 = vpop.f32.mrf.mxu0
        %3064 = vmatprep.mubr.f32.mxu0 0.0
        %3065 = vmatmul.mubr.f32.gmra.mxu0 %v899
        %v3066 = vpop.f32.mrf.mxu0
        %v3067 = vadd.f32 0.0, %v3066
        %v3068 = vpop.f32.mrf.mxu0
        %3069 = vmatprep.mubr.f32.mxu0 0.0
        %3070 = vmatmul.mubr.f32.gmra.mxu0 %v902
        %v3071 = vpop.f32.mrf.mxu0
        %v3072 = vadd.f32 0.0, %v3071
        %v3073 = vpop.f32.mrf.mxu0
        %3074 = vmatprep.mubr.f32.mxu0 0.0
        %3075 = vmatmul.mubr.f32.gmra.mxu0 %v904
        %v3076 = vpop.f32.mrf.mxu0
        %v3077 = vadd.f32 0.0, %v3076
        %v3078 = vpop.f32.mrf.mxu0
        %3079 = vmatprep.mubr.f32.mxu0 0.0
        %3080 = vmatmul.mubr.f32.gmra.mxu0 %v907
        %v3081 = vpop.f32.mrf.mxu0
        %v3082 = vadd.f32 0.0, %v3081
        %v3083 = vpop.f32.mrf.mxu0
        %3084 = vmatprep.mubr.f32.mxu0 0.0
        %3085 = vmatmul.mubr.f32.gmra.mxu0 %v909
        %v3086 = vpop.f32.mrf.mxu0
        %v3087 = vadd.f32 0.0, %v3086
        %v3088 = vpop.f32.mrf.mxu0
        %3089 = vmatprep.mubr.f32.mxu0 0.0
        %3090 = vmatmul.mubr.f32.gmra.mxu0 %v912
        %v3091 = vpop.f32.mrf.mxu0
        %v3092 = vadd.f32 0.0, %v3091
        %v3093 = vpop.f32.mrf.mxu0
        %3094 = vmatprep.mubr.f32.mxu0 0.0
        %3095 = vmatmul.mubr.f32.gmra.mxu0 %v914
        %v3096 = vpop.f32.mrf.mxu0
        %v3097 = vadd.f32 0.0, %v3096
        %v3098 = vpop.f32.mrf.mxu0
        %3099 = vmatprep.mubr.f32.mxu0 0.0
        %3100 = vmatmul.mubr.f32.gmra.mxu0 %v917
        %v3101 = vpop.f32.mrf.mxu0
        %v3102 = vadd.f32 0.0, %v3101
        %v3103 = vpop.f32.mrf.mxu0
        %3104 = vmatprep.mubr.f32.mxu0 0.0
        %3105 = vmatmul.mubr.f32.gmra.mxu0 %v919
        %v3106 = vpop.f32.mrf.mxu0
        %v3107 = vadd.f32 0.0, %v3106
        %v3108 = vpop.f32.mrf.mxu0
        %3109 = vmatprep.mubr.f32.mxu0 0.0
        %3110 = vmatmul.mubr.f32.gmra.mxu0 %v922
        %v3111 = vpop.f32.mrf.mxu0
        %v3112 = vadd.f32 0.0, %v3111
        %v3113 = vpop.f32.mrf.mxu0
        %3114 = vmatprep.mubr.f32.mxu0 0.0
        %3115 = vmatmul.mubr.f32.gmra.mxu0 %v924
        %v3116 = vpop.f32.mrf.mxu0
        %v3117 = vadd.f32 0.0, %v3116
        %v3118 = vpop.f32.mrf.mxu0
        %3119 = vmatprep.mubr.f32.mxu0 0.0
        %3120 = vmatmul.mubr.f32.gmra.mxu0 %v927
        %v3121 = vpop.f32.mrf.mxu0
        %v3122 = vadd.f32 0.0, %v3121
        %v3123 = vpop.f32.mrf.mxu0
        %3124 = vmatprep.mubr.f32.mxu0 0.0
        %3125 = vmatmul.mubr.f32.gmra.mxu0 %v929
        %v3126 = vpop.f32.mrf.mxu0
        %v3127 = vadd.f32 0.0, %v3126
        %v3128 = vpop.f32.mrf.mxu0
        %3129 = vmatprep.mubr.f32.mxu0 0.0
        %3130 = vmatmul.mubr.f32.gmra.mxu0 %v932
        %v3131 = vpop.f32.mrf.mxu0
        %v3132 = vadd.f32 0.0, %v3131
        %v3133 = vpop.f32.mrf.mxu0
        %3134 = vmatprep.mubr.f32.mxu0 0.0
        %3135 = vmatmul.mubr.f32.gmra.mxu0 %v934
        %v3136 = vpop.f32.mrf.mxu0
        %v3137 = vadd.f32 0.0, %v3136
        %v3138 = vpop.f32.mrf.mxu0
        %3139 = vmatprep.mubr.f32.mxu0 0.0
        %3140 = vmatmul.mubr.f32.gmra.mxu0 %v937
        %v3141 = vpop.f32.mrf.mxu0
        %v3142 = vadd.f32 0.0, %v3141
        %v3143 = vpop.f32.mrf.mxu0
        %3144 = vmatprep.mubr.f32.mxu0 0.0
        %3145 = vmatmul.mubr.f32.gmra.mxu0 %v939
        %v3146 = vpop.f32.mrf.mxu0
        %v3147 = vadd.f32 0.0, %v3146
        %v3148 = vpop.f32.mrf.mxu0
        %3149 = vmatprep.mubr.f32.mxu0 0.0
        %3150 = vmatmul.mubr.f32.gmra.mxu0 %v942
        %v3151 = vpop.f32.mrf.mxu0
        %v3152 = vadd.f32 0.0, %v3151
        %v3153 = vpop.f32.mrf.mxu0
        %3154 = vmatprep.mubr.f32.mxu0 0.0
        %3155 = vmatmul.mubr.f32.gmra.mxu0 %v944
        %v3156 = vpop.f32.mrf.mxu0
        %v3157 = vadd.f32 0.0, %v3156
        %v3158 = vpop.f32.mrf.mxu0
        %3159 = vmatprep.mubr.f32.mxu0 0.0
        %3160 = vmatmul.mubr.f32.gmra.mxu0 %v947
        %v3161 = vpop.f32.mrf.mxu0
        %v3162 = vadd.f32 0.0, %v3161
        %v3163 = vpop.f32.mrf.mxu0
        %3164 = vmatprep.mubr.f32.mxu0 0.0
        %3165 = vmatmul.mubr.f32.gmra.mxu0 %v949
        %v3166 = vpop.f32.mrf.mxu0
        %v3167 = vadd.f32 0.0, %v3166
        %v3168 = vpop.f32.mrf.mxu0
        %3169 = vmatprep.mubr.f32.mxu0 0.0
        %3170 = vmatmul.mubr.f32.gmra.mxu0 %v2114
        %v3171 = vpop.f32.mrf.mxu0
        %v3172 = vadd.f32 0.0, %v3171
        %v3173 = vpop.f32.mrf.mxu0
        %3174 = vmatprep.mubr.f32.mxu0 0.0
        %3175 = vmatmul.mubr.f32.gmra.mxu0 %v2116
        %v3176 = vpop.f32.mrf.mxu0
        %v3177 = vadd.f32 0.0, %v3176
        %v3178 = vpop.f32.mrf.mxu0
        %3179 = vmatprep.mubr.f32.mxu0 0.0
        %3180 = vmatmul.mubr.f32.gmra.mxu0 %v872
        %v3181 = vpop.f32.mrf.mxu0
        %v3182 = vadd.f32 0.0, %v3181
        %v3183 = vpop.f32.mrf.mxu0
        %3184 = vmatprep.mubr.f32.mxu0 0.0
        %3185 = vmatmul.mubr.f32.gmra.mxu0 %v874
        %v3186 = vpop.f32.mrf.mxu0
        %v3187 = vadd.f32 0.0, %v3186
        %v3188 = vpop.f32.mrf.mxu0
        %3189 = vdwg.mxu0
        %v3190 = vadd.f32 %v2916, %v3032
        %v3191 = vadd.f32 %v2917, %v3037
        %v3192 = vadd.f32 %v2918, %v3042
        %v3193 = vadd.f32 %v2919, %v3047
        %v3194 = vadd.f32 %v2920, %v3052
        %v3195 = vadd.f32 %v2921, %v3057
        %v3196 = vadd.f32 %v2922, %v3062
        %v3197 = vadd.f32 %v2923, %v3067
        %v3198 = vadd.f32 %v2924, %v3072
        %v3199 = vadd.f32 %v2925, %v3077
        %v3200 = vadd.f32 %v2926, %v3082
        %v3201 = vadd.f32 %v2927, %v3087
        %v3202 = vadd.f32 %v2928, %v3092
        %v3203 = vadd.f32 %v2929, %v3097
        %v3204 = vadd.f32 %v2930, %v3102
        %v3205 = vadd.f32 %v2931, %v3107
        %v3206 = vadd.f32 %v2932, %v3112
        %v3207 = vadd.f32 %v2933, %v3117
        %v3208 = vadd.f32 %v2934, %v3122
        %v3209 = vadd.f32 %v2935, %v3127
        %v3210 = vadd.f32 %v2936, %v3132
        %v3211 = vadd.f32 %v2937, %v3137
        %v3212 = vadd.f32 %v2938, %v3142
        %v3213 = vadd.f32 %v2939, %v3147
        %v3214 = vadd.f32 %v2940, %v3152
        %v3215 = vadd.f32 %v2941, %v3157
        %v3216 = vadd.f32 %v2942, %v3162
        %v3217 = vadd.f32 %v2943, %v3167
        %v3218 = vadd.f32 %v2944, %v3172
        %v3219 = vadd.f32 %v2945, %v3177
        %v3220 = vadd.f32 %v2946, %v3182
        %v3221 = vadd.f32 %v2947, %v3187
        %s3222 = scalar_lea.vmem [#allocation7], 1024
        %v3223 = vld [vmem:[%s3222] sm:$0xff]
        %v3224 = vld [vmem:[%s3222 + $0x8] sm:$0xff]
        %v3225 = vld [vmem:[%s3222 + $0x10] sm:$0xff]
        %v3226 = vld [vmem:[%s3222 + $0x18] sm:$0xff]
        %v3227 = vld [vmem:[%s3222 + $0x20] sm:$0xff]
        %v3228 = vld [vmem:[%s3222 + $0x28] sm:$0xff]
        %v3229 = vld [vmem:[%s3222 + $0x30] sm:$0xff]
        %v3230 = vld [vmem:[%s3222 + $0x38] sm:$0xff]
        %v3231 = vld [vmem:[%s3222 + $0x40] sm:$0xff]
        %v3232 = vld [vmem:[%s3222 + $0x48] sm:$0xff]
        %v3233 = vld [vmem:[%s3222 + $0x50] sm:$0xff]
        %v3234 = vld [vmem:[%s3222 + $0x58] sm:$0xff]
        %v3235 = vld [vmem:[%s3222 + $0x60] sm:$0xff]
        %v3236 = vld [vmem:[%s3222 + $0x68] sm:$0xff]
        %v3237 = vld [vmem:[%s3222 + $0x70] sm:$0xff]
        %v3238 = vld [vmem:[%s3222 + $0x78] sm:$0xff]
        %3239 = vmatprep.subr.mxu0 0.0
        %3240 = vmatpush1.msra.mxu0 %v3238
        %3241 = vmatprep.subr.mxu0 0.0
        %3242 = vmatpush1.msra.mxu0 %v3237
        %3243 = vmatprep.subr.mxu0 0.0
        %3244 = vmatpush1.msra.mxu0 %v3236
        %3245 = vmatprep.subr.mxu0 0.0
        %3246 = vmatpush1.msra.mxu0 %v3235
        %3247 = vmatprep.subr.mxu0 0.0
        %3248 = vmatpush1.msra.mxu0 %v3234
        %3249 = vmatprep.subr.mxu0 0.0
        %3250 = vmatpush1.msra.mxu0 %v3233
        %3251 = vmatprep.subr.mxu0 0.0
        %3252 = vmatpush1.msra.mxu0 %v3232
        %3253 = vmatprep.subr.mxu0 0.0
        %3254 = vmatpush1.msra.mxu0 %v3231
        %3255 = vmatprep.subr.mxu0 0.0
        %3256 = vmatpush1.msra.mxu0 %v3230
        %3257 = vmatprep.subr.mxu0 0.0
        %3258 = vmatpush1.msra.mxu0 %v3229
        %3259 = vmatprep.subr.mxu0 0.0
        %3260 = vmatpush1.msra.mxu0 %v3228
        %3261 = vmatprep.subr.mxu0 0.0
        %3262 = vmatpush1.msra.mxu0 %v3227
        %3263 = vmatprep.subr.mxu0 0.0
        %3264 = vmatpush1.msra.mxu0 %v3226
        %3265 = vmatprep.subr.mxu0 0.0
        %3266 = vmatpush1.msra.mxu0 %v3225
        %3267 = vmatprep.subr.mxu0 0.0
        %3268 = vmatpush1.msra.mxu0 %v3224
        %3269 = vmatprep.subr.mxu0 0.0
        %3270 = vmatpush1.msra.mxu0 %v3223
        %3271 = vmatprep.subr.mxu0 0.0
        %3272 = vmatpush2.msra.mxu0 0.0
        %3273 = vmatprep.subr.mxu0 0.0
        %3274 = vmatpush2.msra.mxu0 0.0
        %3275 = vmatprep.subr.mxu0 0.0
        %3276 = vmatpush2.msra.mxu0 0.0
        %3277 = vmatprep.subr.mxu0 0.0
        %3278 = vmatpush2.msra.mxu0 0.0
        %3279 = vmatprep.subr.mxu0 0.0
        %3280 = vmatpush2.msra.mxu0 0.0
        %3281 = vmatprep.subr.mxu0 0.0
        %3282 = vmatpush2.msra.mxu0 0.0
        %3283 = vmatprep.subr.mxu0 0.0
        %3284 = vmatpush2.msra.mxu0 0.0
        %3285 = vmatprep.subr.mxu0 0.0
        %3286 = vmatpush2.msra.mxu0 0.0
        %3287 = vmatprep.subr.mxu0 0.0
        %3288 = vmatpush2.msra.mxu0 0.0
        %3289 = vmatprep.subr.mxu0 0.0
        %3290 = vmatpush2.msra.mxu0 0.0
        %3291 = vmatprep.subr.mxu0 0.0
        %3292 = vmatpush2.msra.mxu0 0.0
        %3293 = vmatprep.subr.mxu0 0.0
        %3294 = vmatpush2.msra.mxu0 0.0
        %3295 = vmatprep.subr.mxu0 0.0
        %3296 = vmatpush2.msra.mxu0 0.0
        %3297 = vmatprep.subr.mxu0 0.0
        %3298 = vmatpush2.msra.mxu0 0.0
        %3299 = vmatprep.subr.mxu0 0.0
        %3300 = vmatpush2.msra.mxu0 0.0
        %3301 = vmatprep.subr.mxu0 0.0
        %3302 = vmatpush2.msra.mxu0 0.0
        %3303 = vmatprep.mubr.f32.mxu0 0.0
        %3304 = vmatmul.mubr.f32.gmra.mxu0 %v1462
        %v3305 = vpop.f32.mrf.mxu0
        %v3306 = vadd.f32 0.0, %v3305
        %v3307 = vpop.f32.mrf.mxu0
        %3308 = vmatprep.mubr.f32.mxu0 0.0
        %3309 = vmatmul.mubr.f32.gmra.mxu0 %v1464
        %v3310 = vpop.f32.mrf.mxu0
        %v3311 = vadd.f32 0.0, %v3310
        %v3312 = vpop.f32.mrf.mxu0
        %3313 = vmatprep.mubr.f32.mxu0 0.0
        %3314 = vmatmul.mubr.f32.gmra.mxu0 %v1467
        %v3315 = vpop.f32.mrf.mxu0
        %v3316 = vadd.f32 0.0, %v3315
        %v3317 = vpop.f32.mrf.mxu0
        %3318 = vmatprep.mubr.f32.mxu0 0.0
        %3319 = vmatmul.mubr.f32.gmra.mxu0 %v1469
        %v3320 = vpop.f32.mrf.mxu0
        %v3321 = vadd.f32 0.0, %v3320
        %v3322 = vpop.f32.mrf.mxu0
        %3323 = vmatprep.mubr.f32.mxu0 0.0
        %3324 = vmatmul.mubr.f32.gmra.mxu0 %v1472
        %v3325 = vpop.f32.mrf.mxu0
        %v3326 = vadd.f32 0.0, %v3325
        %v3327 = vpop.f32.mrf.mxu0
        %3328 = vmatprep.mubr.f32.mxu0 0.0
        %3329 = vmatmul.mubr.f32.gmra.mxu0 %v1474
        %v3330 = vpop.f32.mrf.mxu0
        %v3331 = vadd.f32 0.0, %v3330
        %v3332 = vpop.f32.mrf.mxu0
        %3333 = vmatprep.mubr.f32.mxu0 0.0
        %3334 = vmatmul.mubr.f32.gmra.mxu0 %v1477
        %v3335 = vpop.f32.mrf.mxu0
        %v3336 = vadd.f32 0.0, %v3335
        %v3337 = vpop.f32.mrf.mxu0
        %3338 = vmatprep.mubr.f32.mxu0 0.0
        %3339 = vmatmul.mubr.f32.gmra.mxu0 %v1479
        %v3340 = vpop.f32.mrf.mxu0
        %v3341 = vadd.f32 0.0, %v3340
        %v3342 = vpop.f32.mrf.mxu0
        %3343 = vmatprep.mubr.f32.mxu0 0.0
        %3344 = vmatmul.mubr.f32.gmra.mxu0 %v1482
        %v3345 = vpop.f32.mrf.mxu0
        %v3346 = vadd.f32 0.0, %v3345
        %v3347 = vpop.f32.mrf.mxu0
        %3348 = vmatprep.mubr.f32.mxu0 0.0
        %3349 = vmatmul.mubr.f32.gmra.mxu0 %v1484
        %v3350 = vpop.f32.mrf.mxu0
        %v3351 = vadd.f32 0.0, %v3350
        %v3352 = vpop.f32.mrf.mxu0
        %3353 = vmatprep.mubr.f32.mxu0 0.0
        %3354 = vmatmul.mubr.f32.gmra.mxu0 %v1487
        %v3355 = vpop.f32.mrf.mxu0
        %v3356 = vadd.f32 0.0, %v3355
        %v3357 = vpop.f32.mrf.mxu0
        %3358 = vmatprep.mubr.f32.mxu0 0.0
        %3359 = vmatmul.mubr.f32.gmra.mxu0 %v1489
        %v3360 = vpop.f32.mrf.mxu0
        %v3361 = vadd.f32 0.0, %v3360
        %v3362 = vpop.f32.mrf.mxu0
        %3363 = vmatprep.mubr.f32.mxu0 0.0
        %3364 = vmatmul.mubr.f32.gmra.mxu0 %v1492
        %v3365 = vpop.f32.mrf.mxu0
        %v3366 = vadd.f32 0.0, %v3365
        %v3367 = vpop.f32.mrf.mxu0
        %3368 = vmatprep.mubr.f32.mxu0 0.0
        %3369 = vmatmul.mubr.f32.gmra.mxu0 %v1494
        %v3370 = vpop.f32.mrf.mxu0
        %v3371 = vadd.f32 0.0, %v3370
        %v3372 = vpop.f32.mrf.mxu0
        %3373 = vmatprep.mubr.f32.mxu0 0.0
        %3374 = vmatmul.mubr.f32.gmra.mxu0 %v1497
        %v3375 = vpop.f32.mrf.mxu0
        %v3376 = vadd.f32 0.0, %v3375
        %v3377 = vpop.f32.mrf.mxu0
        %3378 = vmatprep.mubr.f32.mxu0 0.0
        %3379 = vmatmul.mubr.f32.gmra.mxu0 %v1499
        %v3380 = vpop.f32.mrf.mxu0
        %v3381 = vadd.f32 0.0, %v3380
        %v3382 = vpop.f32.mrf.mxu0
        %3383 = vmatprep.mubr.f32.mxu0 0.0
        %3384 = vmatmul.mubr.f32.gmra.mxu0 %v1502
        %v3385 = vpop.f32.mrf.mxu0
        %v3386 = vadd.f32 0.0, %v3385
        %v3387 = vpop.f32.mrf.mxu0
        %3388 = vmatprep.mubr.f32.mxu0 0.0
        %3389 = vmatmul.mubr.f32.gmra.mxu0 %v1504
        %v3390 = vpop.f32.mrf.mxu0
        %v3391 = vadd.f32 0.0, %v3390
        %v3392 = vpop.f32.mrf.mxu0
        %3393 = vmatprep.mubr.f32.mxu0 0.0
        %3394 = vmatmul.mubr.f32.gmra.mxu0 %v1507
        %v3395 = vpop.f32.mrf.mxu0
        %v3396 = vadd.f32 0.0, %v3395
        %v3397 = vpop.f32.mrf.mxu0
        %3398 = vmatprep.mubr.f32.mxu0 0.0
        %3399 = vmatmul.mubr.f32.gmra.mxu0 %v1509
        %v3400 = vpop.f32.mrf.mxu0
        %v3401 = vadd.f32 0.0, %v3400
        %v3402 = vpop.f32.mrf.mxu0
        %3403 = vmatprep.mubr.f32.mxu0 0.0
        %3404 = vmatmul.mubr.f32.gmra.mxu0 %v1512
        %v3405 = vpop.f32.mrf.mxu0
        %v3406 = vadd.f32 0.0, %v3405
        %v3407 = vpop.f32.mrf.mxu0
        %3408 = vmatprep.mubr.f32.mxu0 0.0
        %3409 = vmatmul.mubr.f32.gmra.mxu0 %v1514
        %v3410 = vpop.f32.mrf.mxu0
        %v3411 = vadd.f32 0.0, %v3410
        %v3412 = vpop.f32.mrf.mxu0
        %3413 = vmatprep.mubr.f32.mxu0 0.0
        %3414 = vmatmul.mubr.f32.gmra.mxu0 %v1517
        %v3415 = vpop.f32.mrf.mxu0
        %v3416 = vadd.f32 0.0, %v3415
        %v3417 = vpop.f32.mrf.mxu0
        %3418 = vmatprep.mubr.f32.mxu0 0.0
        %3419 = vmatmul.mubr.f32.gmra.mxu0 %v1519
        %v3420 = vpop.f32.mrf.mxu0
        %v3421 = vadd.f32 0.0, %v3420
        %v3422 = vpop.f32.mrf.mxu0
        %3423 = vmatprep.mubr.f32.mxu0 0.0
        %3424 = vmatmul.mubr.f32.gmra.mxu0 %v1522
        %v3425 = vpop.f32.mrf.mxu0
        %v3426 = vadd.f32 0.0, %v3425
        %v3427 = vpop.f32.mrf.mxu0
        %3428 = vmatprep.mubr.f32.mxu0 0.0
        %3429 = vmatmul.mubr.f32.gmra.mxu0 %v1524
        %v3430 = vpop.f32.mrf.mxu0
        %v3431 = vadd.f32 0.0, %v3430
        %v3432 = vpop.f32.mrf.mxu0
        %3433 = vmatprep.mubr.f32.mxu0 0.0
        %3434 = vmatmul.mubr.f32.gmra.mxu0 %v1527
        %v3435 = vpop.f32.mrf.mxu0
        %v3436 = vadd.f32 0.0, %v3435
        %v3437 = vpop.f32.mrf.mxu0
        %3438 = vmatprep.mubr.f32.mxu0 0.0
        %3439 = vmatmul.mubr.f32.gmra.mxu0 %v1529
        %v3440 = vpop.f32.mrf.mxu0
        %v3441 = vadd.f32 0.0, %v3440
        %v3442 = vpop.f32.mrf.mxu0
        %3443 = vmatprep.mubr.f32.mxu0 0.0
        %3444 = vmatmul.mubr.f32.gmra.mxu0 %v2395
        %v3445 = vpop.f32.mrf.mxu0
        %v3446 = vadd.f32 0.0, %v3445
        %v3447 = vpop.f32.mrf.mxu0
        %3448 = vmatprep.mubr.f32.mxu0 0.0
        %3449 = vmatmul.mubr.f32.gmra.mxu0 %v2397
        %v3450 = vpop.f32.mrf.mxu0
        %v3451 = vadd.f32 0.0, %v3450
        %v3452 = vpop.f32.mrf.mxu0
        %3453 = vmatprep.mubr.f32.mxu0 0.0
        %3454 = vmatmul.mubr.f32.gmra.mxu0 %v1452
        %v3455 = vpop.f32.mrf.mxu0
        %v3456 = vadd.f32 0.0, %v3455
        %v3457 = vpop.f32.mrf.mxu0
        %3458 = vmatprep.mubr.f32.mxu0 0.0
        %3459 = vmatmul.mubr.f32.gmra.mxu0 %v1454
        %v3460 = vpop.f32.mrf.mxu0
        %v3461 = vadd.f32 0.0, %v3460
        %v3462 = vpop.f32.mrf.mxu0
        %3463 = vdwg.mxu0
        %v3464 = vadd.f32 %v3190, %v3306
        %v3465 = vadd.f32 %v3191, %v3311
        %v3466 = vadd.f32 %v3192, %v3316
        %v3467 = vadd.f32 %v3193, %v3321
        %v3468 = vadd.f32 %v3194, %v3326
        %v3469 = vadd.f32 %v3195, %v3331
        %v3470 = vadd.f32 %v3196, %v3336
        %v3471 = vadd.f32 %v3197, %v3341
        %v3472 = vadd.f32 %v3198, %v3346
        %v3473 = vadd.f32 %v3199, %v3351
        %v3474 = vadd.f32 %v3200, %v3356
        %v3475 = vadd.f32 %v3201, %v3361
        %v3476 = vadd.f32 %v3202, %v3366
        %v3477 = vadd.f32 %v3203, %v3371
        %v3478 = vadd.f32 %v3204, %v3376
        %v3479 = vadd.f32 %v3205, %v3381
        %v3480 = vadd.f32 %v3206, %v3386
        %v3481 = vadd.f32 %v3207, %v3391
        %v3482 = vadd.f32 %v3208, %v3396
        %v3483 = vadd.f32 %v3209, %v3401
        %v3484 = vadd.f32 %v3210, %v3406
        %v3485 = vadd.f32 %v3211, %v3411
        %v3486 = vadd.f32 %v3212, %v3416
        %v3487 = vadd.f32 %v3213, %v3421
        %v3488 = vadd.f32 %v3214, %v3426
        %v3489 = vadd.f32 %v3215, %v3431
        %v3490 = vadd.f32 %v3216, %v3436
        %v3491 = vadd.f32 %v3217, %v3441
        %v3492 = vadd.f32 %v3218, %v3446
        %v3493 = vadd.f32 %v3219, %v3451
        %v3494 = vadd.f32 %v3220, %v3456
        %v3495 = vadd.f32 %v3221, %v3461
        %v3496 = vld [vmem:[%s4] sm:$0x1]
        %v3498 = vlaneseq
        %v3499 = vshrl.u32 %v3498, 7
        %v3500 = vsub.s32 0, %v3499
        %v3501 = vrot.slane %v3496, %v3500
        %v3503 = vadd.f32 %v3464, %v3501
        %v3504 = vadd.f32 %v3465, %v3501
        %v3505 = vadd.f32 %v3466, %v3501
        %v3506 = vadd.f32 %v3467, %v3501
        %v3507 = vadd.f32 %v3468, %v3501
        %v3508 = vadd.f32 %v3469, %v3501
        %v3509 = vadd.f32 %v3470, %v3501
        %v3510 = vadd.f32 %v3471, %v3501
        %v3511 = vadd.f32 %v3472, %v3501
        %v3512 = vadd.f32 %v3473, %v3501
        %v3513 = vadd.f32 %v3474, %v3501
        %v3514 = vadd.f32 %v3475, %v3501
        %v3515 = vadd.f32 %v3476, %v3501
        %v3516 = vadd.f32 %v3477, %v3501
        %v3517 = vadd.f32 %v3478, %v3501
        %v3518 = vadd.f32 %v3479, %v3501
        %v3519 = vadd.f32 %v3480, %v3501
        %v3520 = vadd.f32 %v3481, %v3501
        %v3521 = vadd.f32 %v3482, %v3501
        %v3522 = vadd.f32 %v3483, %v3501
        %v3523 = vadd.f32 %v3484, %v3501
        %v3524 = vadd.f32 %v3485, %v3501
        %v3525 = vadd.f32 %v3486, %v3501
        %v3526 = vadd.f32 %v3487, %v3501
        %v3527 = vadd.f32 %v3488, %v3501
        %v3528 = vadd.f32 %v3489, %v3501
        %v3529 = vadd.f32 %v3490, %v3501
        %v3530 = vadd.f32 %v3491, %v3501
        %v3531 = vadd.f32 %v3492, %v3501
        %v3532 = vadd.f32 %v3493, %v3501
        %v3533 = vadd.f32 %v3494, %v3501
        %v3534 = vadd.f32 %v3495, %v3501
        %v3535 = vmax.f32 %v3503, 0.0
        %v3536 = vmax.f32 %v3504, 0.0
        %v3537 = vmax.f32 %v3505, 0.0
        %v3538 = vmax.f32 %v3506, 0.0
        %v3539 = vmax.f32 %v3507, 0.0
        %v3540 = vmax.f32 %v3508, 0.0
        %v3541 = vmax.f32 %v3509, 0.0
        %v3542 = vmax.f32 %v3510, 0.0
        %v3543 = vmax.f32 %v3511, 0.0
        %v3544 = vmax.f32 %v3512, 0.0
        %v3545 = vmax.f32 %v3513, 0.0
        %v3546 = vmax.f32 %v3514, 0.0
        %v3547 = vmax.f32 %v3515, 0.0
        %v3548 = vmax.f32 %v3516, 0.0
        %v3549 = vmax.f32 %v3517, 0.0
        %v3550 = vmax.f32 %v3518, 0.0
        %v3551 = vmax.f32 %v3519, 0.0
        %v3552 = vmax.f32 %v3520, 0.0
        %v3553 = vmax.f32 %v3521, 0.0
        %v3554 = vmax.f32 %v3522, 0.0
        %v3555 = vmax.f32 %v3523, 0.0
        %v3556 = vmax.f32 %v3524, 0.0
        %v3557 = vmax.f32 %v3525, 0.0
        %v3558 = vmax.f32 %v3526, 0.0
        %v3559 = vmax.f32 %v3527, 0.0
        %v3560 = vmax.f32 %v3528, 0.0
        %v3561 = vmax.f32 %v3529, 0.0
        %v3562 = vmax.f32 %v3530, 0.0
        %v3563 = vmax.f32 %v3531, 0.0
        %v3564 = vmax.f32 %v3532, 0.0
        %v3565 = vmax.f32 %v3533, 0.0
        %v3566 = vmax.f32 %v3534, 0.0
        %v3567 = vld [vmem:[#allocation8] sm:$0xff]
        %v3568 = vld [vmem:[#allocation8 + $0x8] sm:$0xff]
        %v3569 = vld [vmem:[#allocation8 + $0x10] sm:$0xff]
        %v3570 = vld [vmem:[#allocation8 + $0x18] sm:$0xff]
        %v3571 = vld [vmem:[#allocation8 + $0x20] sm:$0xff]
        %v3572 = vld [vmem:[#allocation8 + $0x28] sm:$0xff]
        %v3573 = vld [vmem:[#allocation8 + $0x30] sm:$0xff]
        %v3574 = vld [vmem:[#allocation8 + $0x38] sm:$0xff]
        %v3575 = vld [vmem:[#allocation8 + $0x40] sm:$0xff]
        %v3576 = vld [vmem:[#allocation8 + $0x48] sm:$0xff]
        %v3577 = vld [vmem:[#allocation8 + $0x50] sm:$0xff]
        %v3578 = vld [vmem:[#allocation8 + $0x58] sm:$0xff]
        %v3579 = vld [vmem:[#allocation8 + $0x60] sm:$0xff]
        %v3580 = vld [vmem:[#allocation8 + $0x68] sm:$0xff]
        %v3581 = vld [vmem:[#allocation8 + $0x70] sm:$0xff]
        %v3582 = vld [vmem:[#allocation8 + $0x78] sm:$0xff]
        %v3583 = vld [vmem:[%s6] sm:$0x1]
        %v3585 = vlaneseq
        %v3586 = vshrl.u32 %v3585, 7
        %v3587 = vsub.s32 0, %v3586
        %v3588 = vrot.slane %v3583, %v3587
        %3590 = vmatprep.subr.mxu0 0.0
        %3591 = vmatpush1.msra.mxu0 %v3582
        %3592 = vmatprep.subr.mxu0 0.0
        %3593 = vmatpush1.msra.mxu0 %v3581
        %3594 = vmatprep.subr.mxu0 0.0
        %3595 = vmatpush1.msra.mxu0 %v3580
        %3596 = vmatprep.subr.mxu0 0.0
        %3597 = vmatpush1.msra.mxu0 %v3579
        %3598 = vmatprep.subr.mxu0 0.0
        %3599 = vmatpush1.msra.mxu0 %v3578
        %3600 = vmatprep.subr.mxu0 0.0
        %3601 = vmatpush1.msra.mxu0 %v3577
        %3602 = vmatprep.subr.mxu0 0.0
        %3603 = vmatpush1.msra.mxu0 %v3576
        %3604 = vmatprep.subr.mxu0 0.0
        %3605 = vmatpush1.msra.mxu0 %v3575
        %3606 = vmatprep.subr.mxu0 0.0
        %3607 = vmatpush1.msra.mxu0 %v3574
        %3608 = vmatprep.subr.mxu0 0.0
        %3609 = vmatpush1.msra.mxu0 %v3573
        %3610 = vmatprep.subr.mxu0 0.0
        %3611 = vmatpush1.msra.mxu0 %v3572
        %3612 = vmatprep.subr.mxu0 0.0
        %3613 = vmatpush1.msra.mxu0 %v3571
        %3614 = vmatprep.subr.mxu0 0.0
        %3615 = vmatpush1.msra.mxu0 %v3570
        %3616 = vmatprep.subr.mxu0 0.0
        %3617 = vmatpush1.msra.mxu0 %v3569
        %3618 = vmatprep.subr.mxu0 0.0
        %3619 = vmatpush1.msra.mxu0 %v3568
        %3620 = vmatprep.subr.mxu0 0.0
        %3621 = vmatpush1.msra.mxu0 %v3567
        %3622 = vmatprep.subr.mxu0 0.0
        %3623 = vmatpush2.msra.mxu0 0.0
        %3624 = vmatprep.subr.mxu0 0.0
        %3625 = vmatpush2.msra.mxu0 0.0
        %3626 = vmatprep.subr.mxu0 0.0
        %3627 = vmatpush2.msra.mxu0 0.0
        %3628 = vmatprep.subr.mxu0 0.0
        %3629 = vmatpush2.msra.mxu0 0.0
        %3630 = vmatprep.subr.mxu0 0.0
        %3631 = vmatpush2.msra.mxu0 0.0
        %3632 = vmatprep.subr.mxu0 0.0
        %3633 = vmatpush2.msra.mxu0 0.0
        %3634 = vmatprep.subr.mxu0 0.0
        %3635 = vmatpush2.msra.mxu0 0.0
        %3636 = vmatprep.subr.mxu0 0.0
        %3637 = vmatpush2.msra.mxu0 0.0
        %3638 = vmatprep.subr.mxu0 0.0
        %3639 = vmatpush2.msra.mxu0 0.0
        %3640 = vmatprep.subr.mxu0 0.0
        %3641 = vmatpush2.msra.mxu0 0.0
        %3642 = vmatprep.subr.mxu0 0.0
        %3643 = vmatpush2.msra.mxu0 0.0
        %3644 = vmatprep.subr.mxu0 0.0
        %3645 = vmatpush2.msra.mxu0 0.0
        %3646 = vmatprep.subr.mxu0 0.0
        %3647 = vmatpush2.msra.mxu0 0.0
        %3648 = vmatprep.subr.mxu0 0.0
        %3649 = vmatpush2.msra.mxu0 0.0
        %3650 = vmatprep.subr.mxu0 0.0
        %3651 = vmatpush2.msra.mxu0 0.0
        %3652 = vmatprep.subr.mxu0 0.0
        %3653 = vmatpush2.msra.mxu0 0.0
        %3654 = vmatprep.mubr.f32.mxu0 0.0
        %3655 = vmatmul.mubr.f32.gmra.mxu0 %v3535
        %v3656 = vpop.f32.mrf.mxu0
        %v3657 = vadd.f32 %v3588, %v3656
        %v3658 = vpop.f32.mrf.mxu0
        %3659 = vmatprep.mubr.f32.mxu0 0.0
        %3660 = vmatmul.mubr.f32.gmra.mxu0 %v3536
        %v3661 = vpop.f32.mrf.mxu0
        %v3662 = vadd.f32 %v3588, %v3661
        %v3663 = vpop.f32.mrf.mxu0
        %3664 = vmatprep.mubr.f32.mxu0 0.0
        %3665 = vmatmul.mubr.f32.gmra.mxu0 %v3537
        %v3666 = vpop.f32.mrf.mxu0
        %v3667 = vadd.f32 %v3588, %v3666
        %v3668 = vpop.f32.mrf.mxu0
        %3669 = vmatprep.mubr.f32.mxu0 0.0
        %3670 = vmatmul.mubr.f32.gmra.mxu0 %v3538
        %v3671 = vpop.f32.mrf.mxu0
        %v3672 = vadd.f32 %v3588, %v3671
        %v3673 = vpop.f32.mrf.mxu0
        %3674 = vmatprep.mubr.f32.mxu0 0.0
        %3675 = vmatmul.mubr.f32.gmra.mxu0 %v3539
        %v3676 = vpop.f32.mrf.mxu0
        %v3677 = vadd.f32 %v3588, %v3676
        %v3678 = vpop.f32.mrf.mxu0
        %3679 = vmatprep.mubr.f32.mxu0 0.0
        %3680 = vmatmul.mubr.f32.gmra.mxu0 %v3540
        %v3681 = vpop.f32.mrf.mxu0
        %v3682 = vadd.f32 %v3588, %v3681
        %v3683 = vpop.f32.mrf.mxu0
        %3684 = vmatprep.mubr.f32.mxu0 0.0
        %3685 = vmatmul.mubr.f32.gmra.mxu0 %v3541
        %v3686 = vpop.f32.mrf.mxu0
        %v3687 = vadd.f32 %v3588, %v3686
        %v3688 = vpop.f32.mrf.mxu0
        %3689 = vmatprep.mubr.f32.mxu0 0.0
        %3690 = vmatmul.mubr.f32.gmra.mxu0 %v3542
        %v3691 = vpop.f32.mrf.mxu0
        %v3692 = vadd.f32 %v3588, %v3691
        %v3693 = vpop.f32.mrf.mxu0
        %3694 = vmatprep.mubr.f32.mxu0 0.0
        %3695 = vmatmul.mubr.f32.gmra.mxu0 %v3543
        %v3696 = vpop.f32.mrf.mxu0
        %v3697 = vadd.f32 %v3588, %v3696
        %v3698 = vpop.f32.mrf.mxu0
        %3699 = vmatprep.mubr.f32.mxu0 0.0
        %3700 = vmatmul.mubr.f32.gmra.mxu0 %v3544
        %v3701 = vpop.f32.mrf.mxu0
        %v3702 = vadd.f32 %v3588, %v3701
        %v3703 = vpop.f32.mrf.mxu0
        %3704 = vmatprep.mubr.f32.mxu0 0.0
        %3705 = vmatmul.mubr.f32.gmra.mxu0 %v3545
        %v3706 = vpop.f32.mrf.mxu0
        %v3707 = vadd.f32 %v3588, %v3706
        %v3708 = vpop.f32.mrf.mxu0
        %3709 = vmatprep.mubr.f32.mxu0 0.0
        %3710 = vmatmul.mubr.f32.gmra.mxu0 %v3546
        %v3711 = vpop.f32.mrf.mxu0
        %v3712 = vadd.f32 %v3588, %v3711
        %v3713 = vpop.f32.mrf.mxu0
        %3714 = vmatprep.mubr.f32.mxu0 0.0
        %3715 = vmatmul.mubr.f32.gmra.mxu0 %v3547
        %v3716 = vpop.f32.mrf.mxu0
        %v3717 = vadd.f32 %v3588, %v3716
        %v3718 = vpop.f32.mrf.mxu0
        %3719 = vmatprep.mubr.f32.mxu0 0.0
        %3720 = vmatmul.mubr.f32.gmra.mxu0 %v3548
        %v3721 = vpop.f32.mrf.mxu0
        %v3722 = vadd.f32 %v3588, %v3721
        %v3723 = vpop.f32.mrf.mxu0
        %3724 = vmatprep.mubr.f32.mxu0 0.0
        %3725 = vmatmul.mubr.f32.gmra.mxu0 %v3549
        %v3726 = vpop.f32.mrf.mxu0
        %v3727 = vadd.f32 %v3588, %v3726
        %v3728 = vpop.f32.mrf.mxu0
        %3729 = vmatprep.mubr.f32.mxu0 0.0
        %3730 = vmatmul.mubr.f32.gmra.mxu0 %v3550
        %v3731 = vpop.f32.mrf.mxu0
        %v3732 = vadd.f32 %v3588, %v3731
        %v3733 = vpop.f32.mrf.mxu0
        %3734 = vmatprep.mubr.f32.mxu0 0.0
        %3735 = vmatmul.mubr.f32.gmra.mxu0 %v3551
        %v3736 = vpop.f32.mrf.mxu0
        %v3737 = vadd.f32 %v3588, %v3736
        %v3738 = vpop.f32.mrf.mxu0
        %3739 = vmatprep.mubr.f32.mxu0 0.0
        %3740 = vmatmul.mubr.f32.gmra.mxu0 %v3552
        %v3741 = vpop.f32.mrf.mxu0
        %v3742 = vadd.f32 %v3588, %v3741
        %v3743 = vpop.f32.mrf.mxu0
        %3744 = vmatprep.mubr.f32.mxu0 0.0
        %3745 = vmatmul.mubr.f32.gmra.mxu0 %v3553
        %v3746 = vpop.f32.mrf.mxu0
        %v3747 = vadd.f32 %v3588, %v3746
        %v3748 = vpop.f32.mrf.mxu0
        %3749 = vmatprep.mubr.f32.mxu0 0.0
        %3750 = vmatmul.mubr.f32.gmra.mxu0 %v3554
        %v3751 = vpop.f32.mrf.mxu0
        %v3752 = vadd.f32 %v3588, %v3751
        %v3753 = vpop.f32.mrf.mxu0
        %3754 = vmatprep.mubr.f32.mxu0 0.0
        %3755 = vmatmul.mubr.f32.gmra.mxu0 %v3555
        %v3756 = vpop.f32.mrf.mxu0
        %v3757 = vadd.f32 %v3588, %v3756
        %v3758 = vpop.f32.mrf.mxu0
        %3759 = vmatprep.mubr.f32.mxu0 0.0
        %3760 = vmatmul.mubr.f32.gmra.mxu0 %v3556
        %v3761 = vpop.f32.mrf.mxu0
        %v3762 = vadd.f32 %v3588, %v3761
        %v3763 = vpop.f32.mrf.mxu0
        %3764 = vmatprep.mubr.f32.mxu0 0.0
        %3765 = vmatmul.mubr.f32.gmra.mxu0 %v3557
        %v3766 = vpop.f32.mrf.mxu0
        %v3767 = vadd.f32 %v3588, %v3766
        %v3768 = vpop.f32.mrf.mxu0
        %3769 = vmatprep.mubr.f32.mxu0 0.0
        %3770 = vmatmul.mubr.f32.gmra.mxu0 %v3558
        %v3771 = vpop.f32.mrf.mxu0
        %v3772 = vadd.f32 %v3588, %v3771
        %v3773 = vpop.f32.mrf.mxu0
        %3774 = vmatprep.mubr.f32.mxu0 0.0
        %3775 = vmatmul.mubr.f32.gmra.mxu0 %v3559
        %v3776 = vpop.f32.mrf.mxu0
        %v3777 = vadd.f32 %v3588, %v3776
        %v3778 = vpop.f32.mrf.mxu0
        %3779 = vmatprep.mubr.f32.mxu0 0.0
        %3780 = vmatmul.mubr.f32.gmra.mxu0 %v3560
        %v3781 = vpop.f32.mrf.mxu0
        %v3782 = vadd.f32 %v3588, %v3781
        %v3783 = vpop.f32.mrf.mxu0
        %3784 = vmatprep.mubr.f32.mxu0 0.0
        %3785 = vmatmul.mubr.f32.gmra.mxu0 %v3561
        %v3786 = vpop.f32.mrf.mxu0
        %v3787 = vadd.f32 %v3588, %v3786
        %v3788 = vpop.f32.mrf.mxu0
        %3789 = vmatprep.mubr.f32.mxu0 0.0
        %3790 = vmatmul.mubr.f32.gmra.mxu0 %v3562
        %v3791 = vpop.f32.mrf.mxu0
        %v3792 = vadd.f32 %v3588, %v3791
        %v3793 = vpop.f32.mrf.mxu0
        %3794 = vmatprep.mubr.f32.mxu0 0.0
        %3795 = vmatmul.mubr.f32.gmra.mxu0 %v3563
        %v3796 = vpop.f32.mrf.mxu0
        %v3797 = vadd.f32 %v3588, %v3796
        %v3798 = vpop.f32.mrf.mxu0
        %3799 = vmatprep.mubr.f32.mxu0 0.0
        %3800 = vmatmul.mubr.f32.gmra.mxu0 %v3564
        %v3801 = vpop.f32.mrf.mxu0
        %v3802 = vadd.f32 %v3588, %v3801
        %v3803 = vpop.f32.mrf.mxu0
        %3804 = vmatprep.mubr.f32.mxu0 0.0
        %3805 = vmatmul.mubr.f32.gmra.mxu0 %v3565
        %v3806 = vpop.f32.mrf.mxu0
        %v3807 = vadd.f32 %v3588, %v3806
        %v3808 = vpop.f32.mrf.mxu0
        %3809 = vmatprep.mubr.f32.mxu0 0.0
        %3810 = vmatmul.mubr.f32.gmra.mxu0 %v3566
        %v3811 = vpop.f32.mrf.mxu0
        %v3812 = vadd.f32 %v3588, %v3811
        %v3813 = vpop.f32.mrf.mxu0
        %3814 = vdwg.mxu0
        %v3815 = vadd.f32 %v3657, %v341
        %v3816 = vadd.f32 %v3662, %v342
        %v3817 = vadd.f32 %v3667, %v343
        %v3818 = vadd.f32 %v3672, %v344
        %v3819 = vadd.f32 %v3677, %v345
        %v3820 = vadd.f32 %v3682, %v346
        %v3821 = vadd.f32 %v3687, %v347
        %v3822 = vadd.f32 %v3692, %v348
        %v3823 = vadd.f32 %v3697, %v349
        %v3824 = vadd.f32 %v3702, %v350
        %v3825 = vadd.f32 %v3707, %v351
        %v3826 = vadd.f32 %v3712, %v352
        %v3827 = vadd.f32 %v3717, %v353
        %v3828 = vadd.f32 %v3722, %v354
        %v3829 = vadd.f32 %v3727, %v355
        %v3830 = vadd.f32 %v3732, %v356
        %v3831 = vadd.f32 %v3737, %v357
        %v3832 = vadd.f32 %v3742, %v358
        %v3833 = vadd.f32 %v3747, %v359
        %v3834 = vadd.f32 %v3752, %v360
        %v3835 = vadd.f32 %v3757, %v361
        %v3836 = vadd.f32 %v3762, %v362
        %v3837 = vadd.f32 %v3767, %v363
        %v3838 = vadd.f32 %v3772, %v364
        %v3839 = vadd.f32 %v3777, %v365
        %v3840 = vadd.f32 %v3782, %v366
        %v3841 = vadd.f32 %v3787, %v367
        %v3842 = vadd.f32 %v3792, %v368
        %v3843 = vadd.f32 %v3797, %v369
        %v3844 = vadd.f32 %v3802, %v370
        %v3845 = vadd.f32 %v3807, %v371
        %v3846 = vadd.f32 %v3812, %v372
        %v3847 = vmax.f32 %v3815, 0.0
        %v3848 = vmax.f32 %v3816, 0.0
        %v3849 = vmax.f32 %v3817, 0.0
        %v3850 = vmax.f32 %v3818, 0.0
        %v3851 = vmax.f32 %v3819, 0.0
        %v3852 = vmax.f32 %v3820, 0.0
        %v3853 = vmax.f32 %v3821, 0.0
        %v3854 = vmax.f32 %v3822, 0.0
        %v3855 = vmax.f32 %v3823, 0.0
        %v3856 = vmax.f32 %v3824, 0.0
        %v3857 = vmax.f32 %v3825, 0.0
        %v3858 = vmax.f32 %v3826, 0.0
        %v3859 = vmax.f32 %v3827, 0.0
        %v3860 = vmax.f32 %v3828, 0.0
        %v3861 = vmax.f32 %v3829, 0.0
        %v3862 = vmax.f32 %v3830, 0.0
        %v3863 = vmax.f32 %v3831, 0.0
        %v3864 = vmax.f32 %v3832, 0.0
        %v3865 = vmax.f32 %v3833, 0.0
        %v3866 = vmax.f32 %v3834, 0.0
        %v3867 = vmax.f32 %v3835, 0.0
        %v3868 = vmax.f32 %v3836, 0.0
        %v3869 = vmax.f32 %v3837, 0.0
        %v3870 = vmax.f32 %v3838, 0.0
        %v3871 = vmax.f32 %v3839, 0.0
        %v3872 = vmax.f32 %v3840, 0.0
        %v3873 = vmax.f32 %v3841, 0.0
        %v3874 = vmax.f32 %v3842, 0.0
        %v3875 = vmax.f32 %v3843, 0.0
        %v3876 = vmax.f32 %v3844, 0.0
        %v3877 = vmax.f32 %v3845, 0.0
        %v3878 = vmax.f32 %v3846, 0.0
        %3879 = vst [vmem:[%s340] sm:$0xff] %v3847
        %3880 = vst [vmem:[%s340 + $0x8] sm:$0xff] %v3848
        %3881 = vst [vmem:[%s340 + $0x10] sm:$0xff] %v3849
        %3882 = vst [vmem:[%s340 + $0x18] sm:$0xff] %v3850
        %3883 = vst [vmem:[%s340 + $0x20] sm:$0xff] %v3851
        %3884 = vst [vmem:[%s340 + $0x28] sm:$0xff] %v3852
        %3885 = vst [vmem:[%s340 + $0x30] sm:$0xff] %v3853
        %3886 = vst [vmem:[%s340 + $0x38] sm:$0xff] %v3854
        %3887 = vst [vmem:[%s340 + $0x40] sm:$0xff] %v3855
        %3888 = vst [vmem:[%s340 + $0x48] sm:$0xff] %v3856
        %3889 = vst [vmem:[%s340 + $0x50] sm:$0xff] %v3857
        %3890 = vst [vmem:[%s340 + $0x58] sm:$0xff] %v3858
        %3891 = vst [vmem:[%s340 + $0x60] sm:$0xff] %v3859
        %3892 = vst [vmem:[%s340 + $0x68] sm:$0xff] %v3860
        %3893 = vst [vmem:[%s340 + $0x70] sm:$0xff] %v3861
        %3894 = vst [vmem:[%s340 + $0x78] sm:$0xff] %v3862
        %3895 = vst [vmem:[%s340 + $0x80] sm:$0xff] %v3863
        %3896 = vst [vmem:[%s340 + $0x88] sm:$0xff] %v3864
        %3897 = vst [vmem:[%s340 + $0x90] sm:$0xff] %v3865
        %3898 = vst [vmem:[%s340 + $0x98] sm:$0xff] %v3866
        %3899 = vst [vmem:[%s340 + $0xa0] sm:$0xff] %v3867
        %3900 = vst [vmem:[%s340 + $0xa8] sm:$0xff] %v3868
        %3901 = vst [vmem:[%s340 + $0xb0] sm:$0xff] %v3869
        %3902 = vst [vmem:[%s340 + $0xb8] sm:$0xff] %v3870
        %3903 = vst [vmem:[%s340 + $0xc0] sm:$0xff] %v3871
        %3904 = vst [vmem:[%s340 + $0xc8] sm:$0xff] %v3872
        %3905 = vst [vmem:[%s340 + $0xd0] sm:$0xff] %v3873
        %3906 = vst [vmem:[%s340 + $0xd8] sm:$0xff] %v3874
        %3907 = vst [vmem:[%s340 + $0xe0] sm:$0xff] %v3875
        %3908 = vst [vmem:[%s340 + $0xe8] sm:$0xff] %v3876
        %3909 = vst [vmem:[%s340 + $0xf0] sm:$0xff] %v3877
        %3910 = vst [vmem:[%s340 + $0xf8] sm:$0xff] %v3878
        %s3911 = sand.u32 %s186, 1
        %s3912 = scalar_lea.sflag [#allocation4], %s3911
        %s3913 = sand.u32 %s186, 1
        %s3914 = smul.addr %s3913, 256
        %s3915 = scalar_lea.vmem [#allocation10], %s3914
        // Predicated region
        $region65: #{tpu_custom_call.1} parent=47 // pred_check
          %p3916 = pneg %p196
        $region66: #{tpu_custom_call.1} parent=47 // pred_check_branch
          %3918 = sbr.rel (%p3916) target = $region68
        $region67: #{tpu_custom_call.1} parent=47 // pred_region
          %s3920 = ssub.s32 4096, 4096
          %3921 = vsyncadd %s3912, %s3920
          %s3922 = smul.addr %s26, 32
          %s3923 = smul.addr %s3922, 128
          %s3924 = scalar_lea.hbm %s7, %s3923
          %s3925 = sshll.u32 %s3915, 4
          %s3926 = int_to_ptr.vmem [resolvable:$true] %s3925
          %3931 = dma.vmem_to_hbm [thread:$0]  %s3926, 4096, %s3924, %s3912, 128, 128, 8
        $region68: #{tpu_custom_call.1} parent=47 // pred_fallthru
          _
      $region48: #{tpu_custom_call.1} parent=5 // pred_fallthru
        _
      %p3932 = scmp.le.s32.totalorder 2, %s21
      // Predicated region
      $region69: #{tpu_custom_call.1} parent=5 // pred_check
        %p3933 = pneg %p3932
      $region70: #{tpu_custom_call.1} parent=5 // pred_check_branch
        %3935 = sbr.rel (%p3933) target = $region72
      $region71: #{tpu_custom_call.1} parent=5 // pred_region
        %s3936 = ssub.s32 %s21, 2
        // Predicated region
        $region73: #{tpu_custom_call.1} parent=71 // pred_check
          %p3937 = pneg %p202
        $region74: #{tpu_custom_call.1} parent=71 // pred_check_branch
          %3939 = sbr.rel (%p3937) target = $region76
        $region75: #{tpu_custom_call.1} parent=71 // pred_region
          %s3940 = sand.u32 %s187, 1
          %s3941 = scalar_lea.sflag [#allocation4], %s3940
          %s3942 = sand.u32 %s187, 1
          %s3943 = smul.addr %s3942, 256
          %s3944 = scalar_lea.vmem [#allocation10], %s3943
          %3945 = dma.done %s3941, 4096
        $region76: #{tpu_custom_call.1} parent=71 // pred_fallthru
          _
      $region72: #{tpu_custom_call.1} parent=5 // pred_fallthru
        _
    $region6: #{tpu_custom_call.1} parent=1 // loop_footer
      %s25 = sadd.s32 1, %s21
    $region7: #{tpu_custom_call.1} parent=1 // loop_footer_branch
      %20 = sbr.rel target = $region3
    $region8: #{tpu_custom_call.1} parent=1 // loop_exit
      _
    %3946 = vsyncpa [#allocation3], 1
    %s3947 = scalar_lea.sflag [#allocation3], 1
    %3948 = vsyncpa %s3947, 1
    %3949 = vsyncpa [#allocation6], 1
    %3950 = vsyncpa [#allocation9], 1
    %3951 = vsyncpa [#allocation4], 1
    %s3952 = scalar_lea.sflag [#allocation4], 1
    %3953 = vsyncpa %s3952, 1

</llo_original>
